<compile_context>
chip_gen: v6e
topology: v6e:2x2x1
jax: 0.10.0
libtpu: 0.0.40
codegen_flags: <defaults>
</compile_context>

<pallas_src>
import functools

import jax
import jax.numpy as jnp
import numpy as np
from jax import lax
from jax.experimental import pallas as pl
from jax.experimental.pallas import tpu as pltpu


def _vmem_limit_bytes():
    """Per-generation VMEM budget (~85% of physical) instead of a hardcoded 32 MiB."""
    try:
        cap = int(getattr(pltpu.get_tpu_info(), "vmem_capacity_bytes"))
    except Exception:
        cap = 64 * 1024 * 1024  # conservative fallback (v7x physical)
    return max(32 * 1024 * 1024, min(int(cap * 0.85), 110 * 1024 * 1024))


def _layer_kernel(x_ref, m_ref, w_ref, g_ref, b_ref, o_ref, xpad_ref, *res_scratch,
                  H, W, C, K, L, cg, eps, use_res_input):
    l = pl.program_id(1)          # layer index (grid axis 1, "arbitrary")
    pad = K // 2
    HW = H * W
    res_ref = res_scratch[0] if use_res_input else None

    # First layer of each image: zero the halo scratch once (its 1-px border must stay zero
    # for every fused layer) and place the image into the interior. Per-image (not
    # per-kernel) so each megacore's private scratch is initialized, but L x cheaper than
    # the previous per-layer re-zeroing.
    @pl.when(l == 0)
    def _init():
        xpad_ref[...] = jnp.zeros_like(xpad_ref)
        xpad_ref[pad:pad + H, pad:pad + W, :] = x_ref[0]

    # RESIDUAL_INPUT: save the block input (= carried f32 activation = halo interior)
    # before blocks 0, 3, 6, ...  (torch layer idx 0, 9, 18, ...).
    if use_res_input:
        @pl.when(l % 3 == 0)
        def _save_res():
            res_ref[...] = xpad_ref[pad:pad + H, pad:pad + W, :].reshape(HW, C)

    # Compact instance mask (HW, 1) -> channel (lane) broadcast once per layer.
    keep = jnp.broadcast_to(m_ref[0], (HW, C)) > 0.5

    # --- Conv2d(K, stride=1, pad=K//2, bias=False): bf16 MXU operands, f32 accumulation ---
    # kx (sublane) shifts are hoisted (K slices/casts instead of K*K); with C % 128 == 0 we
    # issue K*K depth-C matmuls directly on the shifted slices (no im2col concat slabs).
    xk = [xpad_ref[:, kx:kx + W, :].astype(jnp.bfloat16) for kx in range(K)]
    acc = jnp.zeros((HW, C), jnp.float32)
    for ky in range(K):
        for kx in range(K):
            acc = acc + jnp.dot(xk[kx][ky:ky + H].reshape(HW, C),
                                w_ref[0, ky, kx * C:(kx + 1) * C, :],
                                preferred_element_type=jnp.float32)

    # --- InsGN == per-pixel GroupNorm over channel groups of size cg (f32 statistics) ---
    lane = lax.broadcasted_iota(jnp.int32, (1, C), 1)
    if cg == 1:
        diff = jnp.zeros_like(acc)
        var = jnp.zeros_like(acc)
    elif cg == 2:
        # Pair-partner trick: d = x - partner  =>  x - mean = d/2, var = d^2/4.
        even = jnp.broadcast_to((lane % 2) == 0, acc.shape)
        partner = jnp.where(even, jnp.roll(acc, -1, axis=1), jnp.roll(acc, 1, axis=1))
        d = acc - partner
        diff = 0.5 * d
        var = 0.25 * (d * d)
    else:
        if (cg & (cg - 1)) == 0:
            # log2(cg) butterfly: step k adds the in-group lane whose bit k differs.
            shifts = []
            sh = 1
            while sh < cg:
                shifts.append(sh)
                sh *= 2
            masks = [jnp.broadcast_to(((lane // sh) % 2) == 0, acc.shape) for sh in shifts]

            def group_mean(v):
                t = v
                for sh, low in zip(shifts, masks):
                    t = t + jnp.where(low, jnp.roll(t, -sh, axis=1),
                                      jnp.roll(t, sh, axis=1))
                return t * (1.0 / cg)
        else:
            # Linear fallback for non-power-of-two group sizes (masks hoisted once).
            conds = [jnp.broadcast_to((lane % cg) < (cg - j), acc.shape)
                     for j in range(1, cg)]

            def group_mean(v):
                t = v
                for j, cond in enumerate(conds, start=1):
                    t = t + jnp.where(cond, jnp.roll(v, -j, axis=1),
                                      jnp.roll(v, cg - j, axis=1))
                return t * (1.0 / cg)

        mean = group_mean(acc)
        diff = acc - mean
        var = group_mean(diff * diff)

    normed = diff * lax.rsqrt(var + eps) * g_ref[0] + b_ref[0]

    # Pixels with instance id == -1 keep the raw conv output; then ReLU.
    y = jnp.maximum(jnp.where(keep, normed, acc), 0.0)

    # Write the carried activation back into the halo interior. RESIDUAL_INPUT adds the
    # saved block input after the ReLU of blocks 1, 4, 7, ... (torch layer idx 5, 14, 23).
    if use_res_input:
        @pl.when(l % 3 == 1)
        def _carry_with_res():
            xpad_ref[pad:pad + H, pad:pad + W, :] = (y + res_ref[...]).reshape(H, W, C)

        @pl.when(l % 3 != 1)
        def _carry():
            xpad_ref[pad:pad + H, pad:pad + W, :] = y.reshape(H, W, C)
    else:
        xpad_ref[pad:pad + H, pad:pad + W, :] = y.reshape(H, W, C)

    # Write the image output once, after the last fused layer (output block is revisited
    # across the layer axis, written back to HBM when the batch index advances).
    @pl.when(l == L - 1)
    def _store():
        o_ref[0] = xpad_ref[pad:pad + H, pad:pad + W, :]


def densepose_head_fused(x_nhwc, keep01, w_stack, gamma, beta, *,
                         group_size, use_res_input, eps=1e-5):
    """x_nhwc: (N,H,W,C) f32 (C % 128 == 0); keep01: (N,H*W,1) f32 0/1;
    w_stack: (L,K,K*C,C) bf16; gamma/beta: (L,1,C) f32; group_size: original channels/group."""
    N, H, W, C = x_nhwc.shape
    L, K, KC, C2 = w_stack.shape
    assert C2 == C and KC == K * C and C % 128 == 0
    pad = K // 2
    HW = H * W

    kernel = functools.partial(
        _layer_kernel, H=H, W=W, C=C, K=K, L=L, cg=group_size, eps=eps,
        use_res_input=use_res_input)

    scratch = [pltpu.VMEM((H + 2 * pad, W + 2 * pad, C), jnp.float32)]  # zero-halo carry
    if use_res_input:
        scratch.append(pltpu.VMEM((HW, C), jnp.float32))                # residual save slot

    return pl.pallas_call(
        kernel,
        out_shape=jax.ShapeDtypeStruct((N, H, W, C), jnp.float32),
        grid=(N, L),
        in_specs=[
            pl.BlockSpec((1, H, W, C), lambda n, l: (n, 0, 0, 0)),       # image (read at l==0)
            pl.BlockSpec((1, HW, 1), lambda n, l: (n, 0, 0)),            # compact instance mask
            pl.BlockSpec((1, K, K * C, C), lambda n, l: (l, 0, 0, 0)),   # layer weights (streamed)
            pl.BlockSpec((1, 1, C), lambda n, l: (l, 0, 0)),             # layer gamma
            pl.BlockSpec((1, 1, C), lambda n, l: (l, 0, 0)),             # layer beta
        ],
        out_specs=pl.BlockSpec((1, H, W, C), lambda n, l: (n, 0, 0, 0)),
        scratch_shapes=scratch,
        compiler_params=pltpu.CompilerParams(
            dimension_semantics=("parallel", "arbitrary"),
            vmem_limit_bytes=_vmem_limit_bytes()),
    )(x_nhwc, keep01, w_stack, gamma, beta)


class DensePoseV1ConvXGNInsHeadPallas:
    """JAX/Pallas port of DensePoseV1ConvXGNInsHead with norm='InsGN'."""

    def __init__(self, key, input_channels, hidden_dim=64, kernel_size=3,
                 n_stacked_convs=2, num_groups=32, use_res_input=True, eps=1e-5):
        assert hidden_dim % num_groups == 0
        # The fused kernel stacks per-layer weights (and the block-0 residual add requires
        # matching channel counts), so input_channels must equal hidden_dim.
        assert input_channels == hidden_dim
        self.hidden_dim = hidden_dim
        self.K = kernel_size
        self.L = n_stacked_convs
        self.num_groups = num_groups
        self.use_res_input = use_res_input
        self.eps = eps
        self.params = []
        n_ch = input_channels
        for _ in range(n_stacked_convs):
            key, k1, k2, k3 = jax.random.split(key, 4)
            fan_in = kernel_size * kernel_size * n_ch
            # c2_msra_fill ~ kaiming normal; deterministic synthetic init (f32 master copy).
            w = jax.random.normal(k1, (kernel_size, kernel_size, n_ch, hidden_dim),
                                  jnp.float32) * (2.0 / fan_in) ** 0.5
            gamma = 1.0 + 0.1 * jax.random.normal(k2, (hidden_dim,), jnp.float32)
            beta = 0.1 * jax.random.normal(k3, (hidden_dim,), jnp.float32)
            self.params.append((w, gamma, beta))
            n_ch = hidden_dim
        self.n_out_channels = n_ch

    def __call__(self, features_nchw, ins_indices_batch):
        x = jnp.transpose(features_nchw, (0, 2, 3, 1)).astype(jnp.float32)   # NCHW -> NHWC
        N, H, W, _ = x.shape
        C, K, L = self.hidden_dim, self.K, self.L
        cg = C // self.num_groups

        # Pad channels to a multiple of 128 lanes: lane-dense loads/stores/rolls and full
        # MXU columns. Padded lanes carry exact zeros and are sliced off at the end.
        Cp = max(128, -(-C // 128) * 128)
        cpad = Cp - C
        if cpad:
            x = jnp.pad(x, ((0, 0), (0, 0), (0, 0), (0, cpad)))

        # Compact instance mask (N, H*W, 1) instead of a channel-broadcast (N,H,W,C) copy.
        keep01 = (ins_indices_batch != -1).astype(jnp.float32).reshape(N, H * W, 1)

        w_list, g_list, b_list = [], [], []
        for (w, g, b) in self.params:
            if cpad:
                w = jnp.pad(w, ((0, 0), (0, 0), (0, cpad), (0, cpad)))
                g = jnp.pad(g, ((0, cpad),), constant_values=1.0)
                b = jnp.pad(b, ((0, cpad),))
            # Fold (kx, ci) into one contraction dim; single bf16 cast of the weights.
            w_list.append(w.reshape(K, K * Cp, Cp))
            g_list.append(g)
            b_list.append(b)
        w_stack = jnp.stack(w_list).astype(jnp.bfloat16)          # (L, K, K*Cp, Cp)
        gamma = jnp.stack(g_list).reshape(L, 1, Cp)
        beta = jnp.stack(b_list).reshape(L, 1, Cp)

        out = densepose_head_fused(x, keep01, w_stack, gamma, beta,
                                   group_size=cg,
                                   use_res_input=self.use_res_input,
                                   eps=self.eps)
        out = out[..., :C]
        return jnp.transpose(out, (0, 3, 1, 2))                    # NHWC -> NCHW


def ref_forward(features_nchw, ins_indices_batch, params, num_groups, use_res_input, eps=1e-5):
    """Pure-JAX reference of the torch forward (bf16 conv operands, f32 accumulation/GN)."""
    x = jnp.transpose(features_nchw, (0, 2, 3, 1)).astype(jnp.float32)
    mask = (ins_indices_batch != -1)[..., None]
    res = None
    for b, (w, gamma, beta) in enumerate(params):
        if use_res_input and b % 3 == 0:
            res = x
        conv = lax.conv_general_dilated(
            x.astype(jnp.bfloat16), w.astype(jnp.bfloat16), (1, 1), 'SAME',
            dimension_numbers=('NHWC', 'HWIO', 'NHWC'),
            preferred_element_type=jnp.float32)
        N, H, W, C = conv.shape
        g = conv.reshape(N, H, W, num_groups, C // num_groups)
        mu = g.mean(-1, keepdims=True)
        var = ((g - mu) ** 2).mean(-1, keepdims=True)
        normed = ((g - mu) * lax.rsqrt(var + eps)).reshape(N, H, W, C) * gamma + beta
        y = jnp.where(mask, normed, conv)
        y = jnp.maximum(y, 0.0)
        if use_res_input and b % 3 == 1:
            y = y + res
        x = y
    return jnp.transpose(x, (0, 3, 1, 2))


if __name__ == "__main__":
    key = jax.random.PRNGKey(0)

    # Two small configs consistent with the module (GroupNorm(32, hidden)):
    #  A: hidden=64  -> group size 2 (pair-partner path), channels padded 64 -> 128 lanes
    #  B: hidden=128 -> group size 4 (butterfly path), no channel padding
    cases = [
        dict(N=2, C=64, H=16, W=16, K=3, L=3, groups=32),
        dict(N=2, C=128, H=16, W=16, K=3, L=3, groups=32),
    ]

    all_ok = True
    for i, cfg in enumerate(cases):
        k_case = jax.random.fold_in(key, i)
        k_feat, k_idx, k_par = jax.random.split(k_case, 3)

        features = jax.random.normal(
            k_feat, (cfg["N"], cfg["C"], cfg["H"], cfg["W"]), jnp.float32)     # NCHW like torch
        ins_indices_batch = jax.random.randint(
            k_idx, (cfg["N"], cfg["H"], cfg["W"]), -1, 3).astype(jnp.int32)

        head = DensePoseV1ConvXGNInsHeadPallas(
            k_par, input_channels=cfg["C"], hidden_dim=cfg["C"], kernel_size=cfg["K"],
            n_stacked_convs=cfg["L"], num_groups=cfg["groups"], use_res_input=True)

        out = jax.block_until_ready(head(features, ins_indices_batch))
        ref = jax.block_until_ready(ref_forward(features, ins_indices_batch, head.params,
                                                head.num_groups, head.use_res_input))

        out_np = np.asarray(out)
        ref_np = np.asarray(ref)
        abs_err = np.abs(out_np - ref_np)
        tol = 1e-2 + 1e-2 * np.abs(ref_np)
        frac_bad = float((abs_err > tol).mean())

        # GroupNorm with small group sizes amplifies bf16 conv accumulation-order noise near
        # the sqrt(eps) knee; require tight (1%) agreement on >= 99.8% of elements and bound
        # the worst-case outlier instead of a brittle allclose.
        assert np.all(np.isfinite(out_np)), f"case {i}: non-finite values in kernel output"
        assert frac_bad < 2e-3, f"case {i}: too many elements off by more than 1%: {frac_bad}"
        assert float(abs_err.max()) < 1.0, f"case {i}: max abs error {float(abs_err.max())}"
        all_ok = all_ok and True

    if all_ok:
        print("KERNEL_OK")
</pallas_src>

<mosaic_0001>
module attributes {stable_mosaic.version = 11 : i64} {
  func.func @_layer_kernel(%arg0: i32, %arg1: i32, %arg2: memref<1x16x16x128xf32, #tpu.memory_space<vmem>>, %arg3: memref<1x256x1xf32, #tpu.memory_space<vmem>>, %arg4: memref<1x3x384x128xbf16, #tpu.memory_space<vmem>>, %arg5: memref<1x1x128xf32, #tpu.memory_space<vmem>>, %arg6: memref<1x1x128xf32, #tpu.memory_space<vmem>>, %arg7: memref<1x16x16x128xf32, #tpu.memory_space<vmem>>, %arg8: memref<18x18x128xf32, #tpu.memory_space<vmem>>, %arg9: memref<256x128xf32, #tpu.memory_space<vmem>>) attributes {dimension_semantics = [#tpu.dimension_semantics<parallel>, #tpu.dimension_semantics<arbitrary>], iteration_bounds = array<i64: 2, 3>, scalar_prefetch = 0 : i64, scratch_operands = 2 : i64, tpu.core_type = #tpu.core_type<tc>, window_params = [{transform_indices = @transform_0, window_bounds = array<i64: 1, 16, 16, 128>}, {transform_indices = @transform_1, window_bounds = array<i64: 1, 256, 1>}, {transform_indices = @transform_2, window_bounds = array<i64: 1, 3, 384, 128>}, {transform_indices = @transform_3, window_bounds = array<i64: 1, 1, 128>}, {transform_indices = @transform_4, window_bounds = array<i64: 1, 1, 128>}, {transform_indices = @transform_5, window_bounds = array<i64: 1, 16, 16, 128>}]} {
    %c0_i32 = arith.constant 0 : i32
    %0 = arith.cmpi eq, %arg1, %c0_i32 : i32
    %1 = arith.extui %0 : i1 to i32
    %c0_i32_0 = arith.constant 0 : i32
    %2 = arith.cmpi ne, %1, %c0_i32_0 : i32
    scf.if %2 {
      %cst_94 = arith.constant 0.000000e+00 : f32
      %161 = vector.broadcast %cst_94 : f32 to vector<18x18x128xf32>
      %c0_95 = arith.constant 0 : index
      %c0_96 = arith.constant 0 : index
      %c0_97 = arith.constant 0 : index
      %162 = vector.load %arg8[%c0_95, %c0_96, %c0_97] : memref<18x18x128xf32, #tpu.memory_space<vmem>>, vector<18x18x128xf32>
      tpu.vector_store %arg8[%c0_95, %c0_96, %c0_97], %161 {strides = array<i32>} : memref<18x18x128xf32, #tpu.memory_space<vmem>>, vector<18x18x128xf32>,
      %c0_98 = arith.constant 0 : index
      %c0_99 = arith.constant 0 : index
      %c0_100 = arith.constant 0 : index
      %c0_101 = arith.constant 0 : index
      %163 = vector.load %arg2[%c0_98, %c0_99, %c0_100, %c0_101] : memref<1x16x16x128xf32, #tpu.memory_space<vmem>>, vector<1x16x16x128xf32>
      %164 = vector.shape_cast %163 : vector<1x16x16x128xf32> to vector<16x16x128xf32>
      %c1_102 = arith.constant 1 : index
      %c1_103 = arith.constant 1 : index
      %c0_104 = arith.constant 0 : index
      %165 = vector.load %arg8[%c1_102, %c1_103, %c0_104] : memref<18x18x128xf32, #tpu.memory_space<vmem>>, vector<16x16x128xf32>
      tpu.vector_store %arg8[%c1_102, %c1_103, %c0_104], %164 {strides = array<i32>} : memref<18x18x128xf32, #tpu.memory_space<vmem>>, vector<16x16x128xf32>,
    } else {
    }
    %c3_i32 = arith.constant 3 : i32
    %c0_i32_1 = arith.constant 0 : i32
    %3 = arith.cmpi eq, %c3_i32, %c0_i32_1 : i32
    %c1_i32 = arith.constant 1 : i32
    %4 = arith.select %3, %c1_i32, %c3_i32 : i32
    %5 = arith.remsi %arg1, %4 : i32
    %c0_i32_2 = arith.constant 0 : i32
    %6 = arith.cmpi ne, %5, %c0_i32_2 : i32
    %c0_i32_3 = arith.constant 0 : i32
    %7 = arith.cmpi slt, %5, %c0_i32_3 : i32
    %c0_i32_4 = arith.constant 0 : i32
    %8 = arith.cmpi slt, %4, %c0_i32_4 : i32
    %9 = arith.xori %7, %8 : i1
    %10 = arith.andi %9, %6 : i1
    %11 = arith.addi %5, %4 : i32
    %12 = arith.select %10, %11, %5 : i32
    %c0_i32_5 = arith.constant 0 : i32
    %13 = arith.cmpi eq, %12, %c0_i32_5 : i32
    %14 = arith.extui %13 : i1 to i32
    %c0_i32_6 = arith.constant 0 : i32
    %15 = arith.cmpi ne, %14, %c0_i32_6 : i32
    scf.if %15 {
      %c1_94 = arith.constant 1 : index
      %c1_95 = arith.constant 1 : index
      %c0_96 = arith.constant 0 : index
      %161 = vector.load %arg8[%c1_94, %c1_95, %c0_96] : memref<18x18x128xf32, #tpu.memory_space<vmem>>, vector<16x16x128xf32>
      %162 = vector.shape_cast %161 : vector<16x16x128xf32> to vector<256x128xf32>
      %c0_97 = arith.constant 0 : index
      %c0_98 = arith.constant 0 : index
      %163 = vector.load %arg9[%c0_97, %c0_98] : memref<256x128xf32, #tpu.memory_space<vmem>>, vector<256x128xf32>
      tpu.vector_store %arg9[%c0_97, %c0_98], %162 {strides = array<i32>} : memref<256x128xf32, #tpu.memory_space<vmem>>, vector<256x128xf32>,
    } else {
    }
    %c0 = arith.constant 0 : index
    %c0_7 = arith.constant 0 : index
    %c0_8 = arith.constant 0 : index
    %16 = vector.load %arg3[%c0, %c0_7, %c0_8] : memref<1x256x1xf32, #tpu.memory_space<vmem>>, vector<1x256x1xf32>
    %17 = vector.shape_cast %16 : vector<1x256x1xf32> to vector<256x1xf32>
    %18 = vector.shape_cast %17 : vector<256x1xf32> to vector<256x1xf32>
    %19 = vector.broadcast %18 : vector<256x1xf32> to vector<256x128xf32>
    %cst = arith.constant 5.000000e-01 : f32
    %20 = vector.broadcast %cst : f32 to vector<256x128xf32>
    %21 = arith.cmpf ogt, %19, %20 : vector<256x128xf32>
    %c0_9 = arith.constant 0 : index
    %c0_10 = arith.constant 0 : index
    %c0_11 = arith.constant 0 : index
    %22 = vector.load %arg8[%c0_9, %c0_10, %c0_11] : memref<18x18x128xf32, #tpu.memory_space<vmem>>, vector<18x16x128xf32>
    %23 = arith.truncf %22 : vector<18x16x128xf32> to vector<18x16x128xbf16>
    %c0_12 = arith.constant 0 : index
    %c1 = arith.constant 1 : index
    %c0_13 = arith.constant 0 : index
    %24 = vector.load %arg8[%c0_12, %c1, %c0_13] : memref<18x18x128xf32, #tpu.memory_space<vmem>>, vector<18x16x128xf32>
    %25 = arith.truncf %24 : vector<18x16x128xf32> to vector<18x16x128xbf16>
    %c0_14 = arith.constant 0 : index
    %c2 = arith.constant 2 : index
    %c0_15 = arith.constant 0 : index
    %26 = vector.load %arg8[%c0_14, %c2, %c0_15] : memref<18x18x128xf32, #tpu.memory_space<vmem>>, vector<18x16x128xf32>
    %27 = arith.truncf %26 : vector<18x16x128xf32> to vector<18x16x128xbf16>
    %cst_16 = arith.constant 0.000000e+00 : f32
    %28 = vector.broadcast %cst_16 : f32 to vector<256x128xf32>
    %29 = vector.extract_strided_slice %23 {offsets = [0, 0, 0], sizes = [16, 16, 128], strides = [1, 1, 1]} : vector<18x16x128xbf16> to vector<16x16x128xbf16>
    %30 = vector.shape_cast %29 : vector<16x16x128xbf16> to vector<256x128xbf16>
    %c0_17 = arith.constant 0 : index
    %c0_18 = arith.constant 0 : index
    %c0_19 = arith.constant 0 : index
    %c0_20 = arith.constant 0 : index
    %31 = vector.load %arg4[%c0_17, %c0_18, %c0_19, %c0_20] : memref<1x3x384x128xbf16, #tpu.memory_space<vmem>>, vector<1x1x128x128xbf16>
    %32 = vector.shape_cast %31 : vector<1x1x128x128xbf16> to vector<128x128xbf16>
    %cst_21 = arith.constant dense<0.000000e+00> : vector<256x128xf32>
    %33 = tpu.matmul %30, %32, %cst_21 {dimension_numbers = #tpu.dot_dimension_numbers<[1], [0], [0], [1], [0, 0, 1, 1], [], []>} : vector<256x128xbf16>, vector<128x128xbf16>, vector<256x128xf32> -> vector<256x128xf32>
    %34 = arith.addf %28, %33 : vector<256x128xf32>
    %35 = vector.extract_strided_slice %25 {offsets = [0, 0, 0], sizes = [16, 16, 128], strides = [1, 1, 1]} : vector<18x16x128xbf16> to vector<16x16x128xbf16>
    %36 = vector.shape_cast %35 : vector<16x16x128xbf16> to vector<256x128xbf16>
    %c0_22 = arith.constant 0 : index
    %c0_23 = arith.constant 0 : index
    %c128 = arith.constant 128 : index
    %c0_24 = arith.constant 0 : index
    %37 = vector.load %arg4[%c0_22, %c0_23, %c128, %c0_24] : memref<1x3x384x128xbf16, #tpu.memory_space<vmem>>, vector<1x1x128x128xbf16>
    %38 = vector.shape_cast %37 : vector<1x1x128x128xbf16> to vector<128x128xbf16>
    %cst_25 = arith.constant dense<0.000000e+00> : vector<256x128xf32>
    %39 = tpu.matmul %36, %38, %cst_25 {dimension_numbers = #tpu.dot_dimension_numbers<[1], [0], [0], [1], [0, 0, 1, 1], [], []>} : vector<256x128xbf16>, vector<128x128xbf16>, vector<256x128xf32> -> vector<256x128xf32>
    %40 = arith.addf %34, %39 : vector<256x128xf32>
    %41 = vector.extract_strided_slice %27 {offsets = [0, 0, 0], sizes = [16, 16, 128], strides = [1, 1, 1]} : vector<18x16x128xbf16> to vector<16x16x128xbf16>
    %42 = vector.shape_cast %41 : vector<16x16x128xbf16> to vector<256x128xbf16>
    %c0_26 = arith.constant 0 : index
    %c0_27 = arith.constant 0 : index
    %c256 = arith.constant 256 : index
    %c0_28 = arith.constant 0 : index
    %43 = vector.load %arg4[%c0_26, %c0_27, %c256, %c0_28] : memref<1x3x384x128xbf16, #tpu.memory_space<vmem>>, vector<1x1x128x128xbf16>
    %44 = vector.shape_cast %43 : vector<1x1x128x128xbf16> to vector<128x128xbf16>
    %cst_29 = arith.constant dense<0.000000e+00> : vector<256x128xf32>
    %45 = tpu.matmul %42, %44, %cst_29 {dimension_numbers = #tpu.dot_dimension_numbers<[1], [0], [0], [1], [0, 0, 1, 1], [], []>} : vector<256x128xbf16>, vector<128x128xbf16>, vector<256x128xf32> -> vector<256x128xf32>
    %46 = arith.addf %40, %45 : vector<256x128xf32>
    %47 = vector.extract_strided_slice %23 {offsets = [1, 0, 0], sizes = [16, 16, 128], strides = [1, 1, 1]} : vector<18x16x128xbf16> to vector<16x16x128xbf16>
    %48 = vector.shape_cast %47 : vector<16x16x128xbf16> to vector<256x128xbf16>
    %c0_30 = arith.constant 0 : index
    %c1_31 = arith.constant 1 : index
    %c0_32 = arith.constant 0 : index
    %c0_33 = arith.constant 0 : index
    %49 = vector.load %arg4[%c0_30, %c1_31, %c0_32, %c0_33] : memref<1x3x384x128xbf16, #tpu.memory_space<vmem>>, vector<1x1x128x128xbf16>
    %50 = vector.shape_cast %49 : vector<1x1x128x128xbf16> to vector<128x128xbf16>
    %cst_34 = arith.constant dense<0.000000e+00> : vector<256x128xf32>
    %51 = tpu.matmul %48, %50, %cst_34 {dimension_numbers = #tpu.dot_dimension_numbers<[1], [0], [0], [1], [0, 0, 1, 1], [], []>} : vector<256x128xbf16>, vector<128x128xbf16>, vector<256x128xf32> -> vector<256x128xf32>
    %52 = arith.addf %46, %51 : vector<256x128xf32>
    %53 = vector.extract_strided_slice %25 {offsets = [1, 0, 0], sizes = [16, 16, 128], strides = [1, 1, 1]} : vector<18x16x128xbf16> to vector<16x16x128xbf16>
    %54 = vector.shape_cast %53 : vector<16x16x128xbf16> to vector<256x128xbf16>
    %c0_35 = arith.constant 0 : index
    %c1_36 = arith.constant 1 : index
    %c128_37 = arith.constant 128 : index
    %c0_38 = arith.constant 0 : index
    %55 = vector.load %arg4[%c0_35, %c1_36, %c128_37, %c0_38] : memref<1x3x384x128xbf16, #tpu.memory_space<vmem>>, vector<1x1x128x128xbf16>
    %56 = vector.shape_cast %55 : vector<1x1x128x128xbf16> to vector<128x128xbf16>
    %cst_39 = arith.constant dense<0.000000e+00> : vector<256x128xf32>
    %57 = tpu.matmul %54, %56, %cst_39 {dimension_numbers = #tpu.dot_dimension_numbers<[1], [0], [0], [1], [0, 0, 1, 1], [], []>} : vector<256x128xbf16>, vector<128x128xbf16>, vector<256x128xf32> -> vector<256x128xf32>
    %58 = arith.addf %52, %57 : vector<256x128xf32>
    %59 = vector.extract_strided_slice %27 {offsets = [1, 0, 0], sizes = [16, 16, 128], strides = [1, 1, 1]} : vector<18x16x128xbf16> to vector<16x16x128xbf16>
    %60 = vector.shape_cast %59 : vector<16x16x128xbf16> to vector<256x128xbf16>
    %c0_40 = arith.constant 0 : index
    %c1_41 = arith.constant 1 : index
    %c256_42 = arith.constant 256 : index
    %c0_43 = arith.constant 0 : index
    %61 = vector.load %arg4[%c0_40, %c1_41, %c256_42, %c0_43] : memref<1x3x384x128xbf16, #tpu.memory_space<vmem>>, vector<1x1x128x128xbf16>
    %62 = vector.shape_cast %61 : vector<1x1x128x128xbf16> to vector<128x128xbf16>
    %cst_44 = arith.constant dense<0.000000e+00> : vector<256x128xf32>
    %63 = tpu.matmul %60, %62, %cst_44 {dimension_numbers = #tpu.dot_dimension_numbers<[1], [0], [0], [1], [0, 0, 1, 1], [], []>} : vector<256x128xbf16>, vector<128x128xbf16>, vector<256x128xf32> -> vector<256x128xf32>
    %64 = arith.addf %58, %63 : vector<256x128xf32>
    %65 = vector.extract_strided_slice %23 {offsets = [2, 0, 0], sizes = [16, 16, 128], strides = [1, 1, 1]} : vector<18x16x128xbf16> to vector<16x16x128xbf16>
    %66 = vector.shape_cast %65 : vector<16x16x128xbf16> to vector<256x128xbf16>
    %c0_45 = arith.constant 0 : index
    %c2_46 = arith.constant 2 : index
    %c0_47 = arith.constant 0 : index
    %c0_48 = arith.constant 0 : index
    %67 = vector.load %arg4[%c0_45, %c2_46, %c0_47, %c0_48] : memref<1x3x384x128xbf16, #tpu.memory_space<vmem>>, vector<1x1x128x128xbf16>
    %68 = vector.shape_cast %67 : vector<1x1x128x128xbf16> to vector<128x128xbf16>
    %cst_49 = arith.constant dense<0.000000e+00> : vector<256x128xf32>
    %69 = tpu.matmul %66, %68, %cst_49 {dimension_numbers = #tpu.dot_dimension_numbers<[1], [0], [0], [1], [0, 0, 1, 1], [], []>} : vector<256x128xbf16>, vector<128x128xbf16>, vector<256x128xf32> -> vector<256x128xf32>
    %70 = arith.addf %64, %69 : vector<256x128xf32>
    %71 = vector.extract_strided_slice %25 {offsets = [2, 0, 0], sizes = [16, 16, 128], strides = [1, 1, 1]} : vector<18x16x128xbf16> to vector<16x16x128xbf16>
    %72 = vector.shape_cast %71 : vector<16x16x128xbf16> to vector<256x128xbf16>
    %c0_50 = arith.constant 0 : index
    %c2_51 = arith.constant 2 : index
    %c128_52 = arith.constant 128 : index
    %c0_53 = arith.constant 0 : index
    %73 = vector.load %arg4[%c0_50, %c2_51, %c128_52, %c0_53] : memref<1x3x384x128xbf16, #tpu.memory_space<vmem>>, vector<1x1x128x128xbf16>
    %74 = vector.shape_cast %73 : vector<1x1x128x128xbf16> to vector<128x128xbf16>
    %cst_54 = arith.constant dense<0.000000e+00> : vector<256x128xf32>
    %75 = tpu.matmul %72, %74, %cst_54 {dimension_numbers = #tpu.dot_dimension_numbers<[1], [0], [0], [1], [0, 0, 1, 1], [], []>} : vector<256x128xbf16>, vector<128x128xbf16>, vector<256x128xf32> -> vector<256x128xf32>
    %76 = arith.addf %70, %75 : vector<256x128xf32>
    %77 = vector.extract_strided_slice %27 {offsets = [2, 0, 0], sizes = [16, 16, 128], strides = [1, 1, 1]} : vector<18x16x128xbf16> to vector<16x16x128xbf16>
    %78 = vector.shape_cast %77 : vector<16x16x128xbf16> to vector<256x128xbf16>
    %c0_55 = arith.constant 0 : index
    %c2_56 = arith.constant 2 : index
    %c256_57 = arith.constant 256 : index
    %c0_58 = arith.constant 0 : index
    %79 = vector.load %arg4[%c0_55, %c2_56, %c256_57, %c0_58] : memref<1x3x384x128xbf16, #tpu.memory_space<vmem>>, vector<1x1x128x128xbf16>
    %80 = vector.shape_cast %79 : vector<1x1x128x128xbf16> to vector<128x128xbf16>
    %cst_59 = arith.constant dense<0.000000e+00> : vector<256x128xf32>
    %81 = tpu.matmul %78, %80, %cst_59 {dimension_numbers = #tpu.dot_dimension_numbers<[1], [0], [0], [1], [0, 0, 1, 1], [], []>} : vector<256x128xbf16>, vector<128x128xbf16>, vector<256x128xf32> -> vector<256x128xf32>
    %82 = arith.addf %76, %81 : vector<256x128xf32>
    %83 = tpu.iota {dimensions = array<i32: 1>} : vector<1x128xi32>
    %c2_i32 = arith.constant 2 : i32
    %c0_i32_60 = arith.constant 0 : i32
    %84 = arith.cmpi eq, %c2_i32, %c0_i32_60 : i32
    %c1_i32_61 = arith.constant 1 : i32
    %85 = arith.select %84, %c1_i32_61, %c2_i32 : i32
    %86 = vector.broadcast %85 : i32 to vector<1x128xi32>
    %87 = arith.remsi %83, %86 : vector<1x128xi32>
    %c0_i32_62 = arith.constant 0 : i32
    %88 = vector.broadcast %c0_i32_62 : i32 to vector<1x128xi32>
    %89 = arith.cmpi ne, %87, %88 : vector<1x128xi32>
    %c0_i32_63 = arith.constant 0 : i32
    %90 = vector.broadcast %c0_i32_63 : i32 to vector<1x128xi32>
    %91 = arith.cmpi slt, %87, %90 : vector<1x128xi32>
    %c0_i32_64 = arith.constant 0 : i32
    %92 = arith.cmpi slt, %85, %c0_i32_64 : i32
    %93 = vector.broadcast %92 : i1 to vector<1x128xi1>
    %94 = vector.broadcast %93 : vector<1x128xi1> to vector<1x128xi1>
    %95 = arith.xori %91, %94 : vector<1x128xi1>
    %96 = arith.andi %95, %89 : vector<1x128xi1>
    %97 = vector.broadcast %85 : i32 to vector<1x128xi32>
    %98 = arith.addi %87, %97 : vector<1x128xi32>
    %99 = arith.select %96, %98, %87 : vector<1x128xi1>, vector<1x128xi32>
    %c0_i32_65 = arith.constant 0 : i32
    %100 = vector.broadcast %c0_i32_65 : i32 to vector<1x128xi32>
    %101 = arith.cmpi eq, %99, %100 : vector<1x128xi32>
    %102 = vector.shape_cast %101 : vector<1x128xi1> to vector<1x128xi1>
    %103 = vector.broadcast %102 : vector<1x128xi1> to vector<256x128xi1>
    %104 = vector.extract_strided_slice %82 {offsets = [0, 1], sizes = [256, 127], strides = [1, 1]} : vector<256x128xf32> to vector<256x127xf32>
    %105 = vector.extract_strided_slice %82 {offsets = [0, 0], sizes = [256, 1], strides = [1, 1]} : vector<256x128xf32> to vector<256x1xf32>
    %106 = tpu.concatenate %104, %105 in 1 : vector<256x127xf32>, vector<256x1xf32> -> vector<256x128xf32>
    %107 = vector.extract_strided_slice %82 {offsets = [0, 127], sizes = [256, 1], strides = [1, 1]} : vector<256x128xf32> to vector<256x1xf32>
    %108 = vector.extract_strided_slice %82 {offsets = [0, 0], sizes = [256, 127], strides = [1, 1]} : vector<256x128xf32> to vector<256x127xf32>
    %109 = tpu.concatenate %107, %108 in 1 : vector<256x1xf32>, vector<256x127xf32> -> vector<256x128xf32>
    %110 = arith.select %103, %106, %109 : vector<256x128xi1>, vector<256x128xf32>
    %111 = arith.subf %82, %110 : vector<256x128xf32>
    %cst_66 = arith.constant 5.000000e-01 : f32
    %112 = vector.broadcast %cst_66 : f32 to vector<256x128xf32>
    %113 = arith.mulf %112, %111 : vector<256x128xf32>
    %114 = arith.mulf %111, %111 : vector<256x128xf32>
    %cst_67 = arith.constant 2.500000e-01 : f32
    %115 = vector.broadcast %cst_67 : f32 to vector<256x128xf32>
    %116 = arith.mulf %115, %114 : vector<256x128xf32>
    %cst_68 = arith.constant 9.99999974E-6 : f32
    %117 = vector.broadcast %cst_68 : f32 to vector<256x128xf32>
    %118 = arith.addf %116, %117 : vector<256x128xf32>
    %119 = math.rsqrt %118 : vector<256x128xf32>
    %120 = arith.mulf %113, %119 : vector<256x128xf32>
    %c0_69 = arith.constant 0 : index
    %c0_70 = arith.constant 0 : index
    %c0_71 = arith.constant 0 : index
    %121 = vector.load %arg5[%c0_69, %c0_70, %c0_71] : memref<1x1x128xf32, #tpu.memory_space<vmem>>, vector<1x1x128xf32>
    %122 = vector.shape_cast %121 : vector<1x1x128xf32> to vector<1x128xf32>
    %123 = vector.broadcast %122 : vector<1x128xf32> to vector<256x128xf32>
    %124 = arith.mulf %120, %123 : vector<256x128xf32>
    %c0_72 = arith.constant 0 : index
    %c0_73 = arith.constant 0 : index
    %c0_74 = arith.constant 0 : index
    %125 = vector.load %arg6[%c0_72, %c0_73, %c0_74] : memref<1x1x128xf32, #tpu.memory_space<vmem>>, vector<1x1x128xf32>
    %126 = vector.shape_cast %125 : vector<1x1x128xf32> to vector<1x128xf32>
    %127 = vector.broadcast %126 : vector<1x128xf32> to vector<256x128xf32>
    %128 = arith.addf %124, %127 : vector<256x128xf32>
    %129 = arith.select %21, %128, %82 : vector<256x128xi1>, vector<256x128xf32>
    %cst_75 = arith.constant 0.000000e+00 : f32
    %130 = vector.broadcast %cst_75 : f32 to vector<256x128xf32>
    %131 = arith.maximumf %129, %130 : vector<256x128xf32>
    %c3_i32_76 = arith.constant 3 : i32
    %c0_i32_77 = arith.constant 0 : i32
    %132 = arith.cmpi eq, %c3_i32_76, %c0_i32_77 : i32
    %c1_i32_78 = arith.constant 1 : i32
    %133 = arith.select %132, %c1_i32_78, %c3_i32_76 : i32
    %134 = arith.remsi %arg1, %133 : i32
    %c0_i32_79 = arith.constant 0 : i32
    %135 = arith.cmpi ne, %134, %c0_i32_79 : i32
    %c0_i32_80 = arith.constant 0 : i32
    %136 = arith.cmpi slt, %134, %c0_i32_80 : i32
    %c0_i32_81 = arith.constant 0 : i32
    %137 = arith.cmpi slt, %133, %c0_i32_81 : i32
    %138 = arith.xori %136, %137 : i1
    %139 = arith.andi %138, %135 : i1
    %140 = arith.addi %134, %133 : i32
    %141 = arith.select %139, %140, %134 : i32
    %c1_i32_82 = arith.constant 1 : i32
    %142 = arith.cmpi eq, %141, %c1_i32_82 : i32
    %143 = arith.extui %142 : i1 to i32
    %c0_i32_83 = arith.constant 0 : i32
    %144 = arith.cmpi ne, %143, %c0_i32_83 : i32
    scf.if %144 {
      %c0_94 = arith.constant 0 : index
      %c0_95 = arith.constant 0 : index
      %161 = vector.load %arg9[%c0_94, %c0_95] : memref<256x128xf32, #tpu.memory_space<vmem>>, vector<256x128xf32>
      %162 = arith.addf %131, %161 : vector<256x128xf32>
      %163 = vector.shape_cast %162 : vector<256x128xf32> to vector<16x16x128xf32>
      %c1_96 = arith.constant 1 : index
      %c1_97 = arith.constant 1 : index
      %c0_98 = arith.constant 0 : index
      %164 = vector.load %arg8[%c1_96, %c1_97, %c0_98] : memref<18x18x128xf32, #tpu.memory_space<vmem>>, vector<16x16x128xf32>
      tpu.vector_store %arg8[%c1_96, %c1_97, %c0_98], %163 {strides = array<i32>} : memref<18x18x128xf32, #tpu.memory_space<vmem>>, vector<16x16x128xf32>,
    } else {
    }
    %c3_i32_84 = arith.constant 3 : i32
    %c0_i32_85 = arith.constant 0 : i32
    %145 = arith.cmpi eq, %c3_i32_84, %c0_i32_85 : i32
    %c1_i32_86 = arith.constant 1 : i32
    %146 = arith.select %145, %c1_i32_86, %c3_i32_84 : i32
    %147 = arith.remsi %arg1, %146 : i32
    %c0_i32_87 = arith.constant 0 : i32
    %148 = arith.cmpi ne, %147, %c0_i32_87 : i32
    %c0_i32_88 = arith.constant 0 : i32
    %149 = arith.cmpi slt, %147, %c0_i32_88 : i32
    %c0_i32_89 = arith.constant 0 : i32
    %150 = arith.cmpi slt, %146, %c0_i32_89 : i32
    %151 = arith.xori %149, %150 : i1
    %152 = arith.andi %151, %148 : i1
    %153 = arith.addi %147, %146 : i32
    %154 = arith.select %152, %153, %147 : i32
    %c1_i32_90 = arith.constant 1 : i32
    %155 = arith.cmpi ne, %154, %c1_i32_90 : i32
    %156 = arith.extui %155 : i1 to i32
    %c0_i32_91 = arith.constant 0 : i32
    %157 = arith.cmpi ne, %156, %c0_i32_91 : i32
    scf.if %157 {
      %161 = vector.shape_cast %131 : vector<256x128xf32> to vector<16x16x128xf32>
      %c1_94 = arith.constant 1 : index
      %c1_95 = arith.constant 1 : index
      %c0_96 = arith.constant 0 : index
      %162 = vector.load %arg8[%c1_94, %c1_95, %c0_96] : memref<18x18x128xf32, #tpu.memory_space<vmem>>, vector<16x16x128xf32>
      tpu.vector_store %arg8[%c1_94, %c1_95, %c0_96], %161 {strides = array<i32>} : memref<18x18x128xf32, #tpu.memory_space<vmem>>, vector<16x16x128xf32>,
    } else {
    }
    %c2_i32_92 = arith.constant 2 : i32
    %158 = arith.cmpi eq, %arg1, %c2_i32_92 : i32
    %159 = arith.extui %158 : i1 to i32
    %c0_i32_93 = arith.constant 0 : i32
    %160 = arith.cmpi ne, %159, %c0_i32_93 : i32
    scf.if %160 {
      %c1_94 = arith.constant 1 : index
      %c1_95 = arith.constant 1 : index
      %c0_96 = arith.constant 0 : index
      %161 = vector.load %arg8[%c1_94, %c1_95, %c0_96] : memref<18x18x128xf32, #tpu.memory_space<vmem>>, vector<16x16x128xf32>
      %c0_97 = arith.constant 0 : index
      %c0_98 = arith.constant 0 : index
      %c0_99 = arith.constant 0 : index
      %c0_100 = arith.constant 0 : index
      %162 = vector.load %arg7[%c0_97, %c0_98, %c0_99, %c0_100] : memref<1x16x16x128xf32, #tpu.memory_space<vmem>>, vector<1x16x16x128xf32>
      %163 = vector.shape_cast %162 : vector<1x16x16x128xf32> to vector<16x16x128xf32>
      %164 = vector.shape_cast %161 : vector<16x16x128xf32> to vector<1x16x16x128xf32>
      tpu.vector_store %arg7[%c0_97, %c0_98, %c0_99, %c0_100], %164 {strides = array<i32>} : memref<1x16x16x128xf32, #tpu.memory_space<vmem>>, vector<1x16x16x128xf32>,
    } else {
    }
    return
  }
  func.func @transform_0(%arg0: i32, %arg1: i32) -> (i32, i32, i32, i32) {
    %c0_i32 = arith.constant 0 : i32
    %c0_i32_0 = arith.constant 0 : i32
    %c0_i32_1 = arith.constant 0 : i32
    %c0_i32_2 = arith.constant 0 : i32
    return %arg0, %c0_i32, %c0_i32_0, %c0_i32_1 : i32, i32, i32, i32
  }
  func.func @transform_1(%arg0: i32, %arg1: i32) -> (i32, i32, i32) {
    %c0_i32 = arith.constant 0 : i32
    %c0_i32_0 = arith.constant 0 : i32
    %c0_i32_1 = arith.constant 0 : i32
    return %arg0, %c0_i32, %c0_i32_0 : i32, i32, i32
  }
  func.func @transform_2(%arg0: i32, %arg1: i32) -> (i32, i32, i32, i32) {
    %c0_i32 = arith.constant 0 : i32
    %c0_i32_0 = arith.constant 0 : i32
    %c0_i32_1 = arith.constant 0 : i32
    %c0_i32_2 = arith.constant 0 : i32
    return %arg1, %c0_i32, %c0_i32_0, %c0_i32_1 : i32, i32, i32, i32
  }
  func.func @transform_3(%arg0: i32, %arg1: i32) -> (i32, i32, i32) {
    %c0_i32 = arith.constant 0 : i32
    %c0_i32_0 = arith.constant 0 : i32
    %c0_i32_1 = arith.constant 0 : i32
    return %arg1, %c0_i32, %c0_i32_0 : i32, i32, i32
  }
  func.func @transform_4(%arg0: i32, %arg1: i32) -> (i32, i32, i32) {
    %c0_i32 = arith.constant 0 : i32
    %c0_i32_0 = arith.constant 0 : i32
    %c0_i32_1 = arith.constant 0 : i32
    return %arg1, %c0_i32, %c0_i32_0 : i32, i32, i32
  }
  func.func @transform_5(%arg0: i32, %arg1: i32) -> (i32, i32, i32, i32) {
    %c0_i32 = arith.constant 0 : i32
    %c0_i32_0 = arith.constant 0 : i32
    %c0_i32_1 = arith.constant 0 : i32
    %c0_i32_2 = arith.constant 0 : i32
    return %arg0, %c0_i32, %c0_i32_0, %c0_i32_1 : i32, i32, i32, i32
  }
}

</mosaic_0001>

<llo_original>
// kernel: tpu_custom_call.1
$region0: #{tpu_custom_call.1}
  #allocation0 [shape = 'u32[]', space=smem, size = 0x4, offset = 0x4, fixed_abs, tag = 'smem constant byte address 0x4 - core index']
  #allocation1 [shape = 'u32[144,128]{1,0:T(1,128)}', space=vmem, size = 0x12000, scoped, tag = 'internal scratch']
  #allocation2 [shape = 'f32[18,18,128]{2,1,0:T(8,128)}', space=vmem, size = 0x36000, scoped, tag = 'scratch operand']
  #allocation3 [shape = 'f32[256,128]{1,0:T(8,128)}', space=vmem, size = 0x20000, scoped, tag = 'scratch operand']
  %s0 = inlined_call_operand.vmem [shape: f32[2,16,16,128], index: 0, kind: input, shape index: {}]
  %s1 = inlined_call_operand.vmem [shape: f32[2,256,1], index: 1, kind: input, shape index: {}]
  %s2 = inlined_call_operand.hbm [shape: bf16[3,3,384,128], index: 2, kind: input, shape index: {}]
  %s3 = inlined_call_operand.vmem [shape: f32[3,1,128], index: 3, kind: input, shape index: {}]
  %s4 = inlined_call_operand.vmem [shape: f32[3,1,128], index: 4, kind: input, shape index: {}]
  %s5 = inlined_call_operand.hbm [shape: f32[2,16,16,128], index: 5, kind: output, shape index: {}]
  %s6 = sld [smem:[#allocation0]]
  $region77: #{tpu_custom_call.1} parent=0
    _
  %s8 = ssub.s32 1, %s6
  %s9 = scalar_select 0, %s8, %s6
  $region1: #{tpu_custom_call.1} parent=0
    #allocation4 [shape = 'u8[589824]{0}', space=vmem, size = 0x90000, scoped, tag = 'input window, operand 2']
    #allocation5 [shape = 's32[2]{0}', space=sflag, size = 0x8, scoped, tag = 'scoped memory for tpu_custom_call.1']
    #allocation6 [shape = 's32[2]{0}', space=sflag, size = 0x8, scoped, tag = 'scoped memory for tpu_custom_call.1']
    #allocation7 [shape = 'u8[262144]{0}', space=vmem, size = 0x40000, scoped, tag = 'output window, operand 0']
    %10 = vsyncpa [#allocation5], 0
    %s11 = scalar_lea.sflag [#allocation5], 1
    %12 = vsyncpa %s11, 0
    %13 = vsyncpa [#allocation6], 0
    %s14 = scalar_lea.sflag [#allocation6], 1
    %15 = vsyncpa %s14, 0
    loop: start=0, step=1, limit=8
    $region2: #{tpu_custom_call.1} parent=1 // loop_pre_header
      _
    $region3: #{tpu_custom_call.1} parent=1 // loop_header
      %s17 = sphi 0, %s21
      %p18 = scmp.ge.s32.totalorder %s17, 8
      %s24 = sphi 0, %s36
      %s25 = sphi 0, %s32
      %s26 = sphi 0, %s24
      %s27 = sphi 0, %s25
      %s28 = sphi 0, %s26
      %s29 = sphi 0, %s27
      %s39 = sphi 0, %s41
      %s42 = sphi 0, %s39
      %s43 = sphi 0, %s42
      %s59 = sphi 0, %s43
      %s65 = sphi 0, %s67
      %s68 = sphi 0, %s65
      %s69 = sphi 0, %s68
      %s85 = sphi 0, %s69
      %s91 = sphi 0, %s93
      %s94 = sphi 0, %s91
      %s95 = sphi 0, %s94
      %s111 = sphi 0, %s95
      %s117 = sphi 0, %s119
      %s120 = sphi 0, %s117
      %s121 = sphi 0, %s120
      %s137 = sphi 0, %s121
      %s143 = sphi 0, %s145
      %s146 = sphi 0, %s143
      %s147 = sphi 0, %s146
      %s163 = sphi 0, %s147
      %s169 = sphi 0, %s171
      %s172 = sphi 0, %s169
      %s173 = sphi 0, %s172
      %s189 = sphi 0, %s173
    $region4: #{tpu_custom_call.1} parent=1 // loop_header_branch
      %20 = sbr.rel (%p18) target = $region8
    $region5: #{tpu_custom_call.1} parent=1 // loop_body
      %s22 = ssub.s32 %s17, 1
      %s23 = ssub.s32 %s17, 2
      %s30 = sadd.s32 1, %s25
      %p31 = scmp.ge.s32.totalorder %s30, 3
      %s32 = scalar_select %p31, 0, %s30
      %s33 = sadd.s32 1, %s24
      %s34 = scalar_select %p31, %s33, %s24
      %p35 = scmp.ge.s32.totalorder %s34, 2
      %s36 = scalar_select %p35, 0, %s34
      %s37 = ssub.s32 %s24, %s36
      %p38 = scmp.eq.s32.totalorder %s37, 0
      %s40 = sadd.s32 %s39, 1
      %s41 = scalar_select %p38, %s39, %s40
      %p44 = pneg %p38
      %p45 = scmp.eq.s32.totalorder %s17, 5
      %p46 = por %p44, %p45
      %p47 = scmp.ne.s32.totalorder %s39, %s42
      %p48 = scmp.eq.s32.totalorder %s17, 0
      %p49 = por %p47, %p48
      %p50 = scmp.ne.s32.totalorder %s39, %s42
      %p51 = scmp.eq.s32.totalorder %s22, 5
      %p52 = por %p50, %p51
      %p53 = scmp.ne.s32.totalorder %s42, %s43
      %p54 = scmp.eq.s32.totalorder %s22, 0
      %p55 = por %p53, %p54
      %p56 = scmp.ne.s32.totalorder %s42, %s43
      %p57 = scmp.eq.s32.totalorder %s23, 5
      %p58 = por %p56, %p57
      %p60 = scmp.ne.s32.totalorder %s43, %s59
      %p61 = scmp.eq.s32.totalorder %s23, 0
      %p62 = por %p60, %p61
      %s63 = ssub.s32 %s24, %s36
      %p64 = scmp.eq.s32.totalorder %s63, 0
      %s66 = sadd.s32 %s65, 1
      %s67 = scalar_select %p64, %s65, %s66
      %p70 = pneg %p64
      %p71 = scmp.eq.s32.totalorder %s17, 5
      %p72 = por %p70, %p71
      %p73 = scmp.ne.s32.totalorder %s65, %s68
      %p74 = scmp.eq.s32.totalorder %s17, 0
      %p75 = por %p73, %p74
      %p76 = scmp.ne.s32.totalorder %s65, %s68
      %p77 = scmp.eq.s32.totalorder %s22, 5
      %p78 = por %p76, %p77
      %p79 = scmp.ne.s32.totalorder %s68, %s69
      %p80 = scmp.eq.s32.totalorder %s22, 0
      %p81 = por %p79, %p80
      %p82 = scmp.ne.s32.totalorder %s68, %s69
      %p83 = scmp.eq.s32.totalorder %s23, 5
      %p84 = por %p82, %p83
      %p86 = scmp.ne.s32.totalorder %s69, %s85
      %p87 = scmp.eq.s32.totalorder %s23, 0
      %p88 = por %p86, %p87
      %s89 = ssub.s32 %s25, %s32
      %p90 = scmp.eq.s32.totalorder %s89, 0
      %s92 = sadd.s32 %s91, 1
      %s93 = scalar_select %p90, %s91, %s92
      %p96 = pneg %p90
      %p97 = scmp.eq.s32.totalorder %s17, 5
      %p98 = por %p96, %p97
      %p99 = scmp.ne.s32.totalorder %s91, %s94
      %p100 = scmp.eq.s32.totalorder %s17, 0
      %p101 = por %p99, %p100
      %p102 = scmp.ne.s32.totalorder %s91, %s94
      %p103 = scmp.eq.s32.totalorder %s22, 5
      %p104 = por %p102, %p103
      %p105 = scmp.ne.s32.totalorder %s94, %s95
      %p106 = scmp.eq.s32.totalorder %s22, 0
      %p107 = por %p105, %p106
      %p108 = scmp.ne.s32.totalorder %s94, %s95
      %p109 = scmp.eq.s32.totalorder %s23, 5
      %p110 = por %p108, %p109
      %p112 = scmp.ne.s32.totalorder %s95, %s111
      %p113 = scmp.eq.s32.totalorder %s23, 0
      %p114 = por %p112, %p113
      %s115 = ssub.s32 %s25, %s32
      %p116 = scmp.eq.s32.totalorder %s115, 0
      %s118 = sadd.s32 %s117, 1
      %s119 = scalar_select %p116, %s117, %s118
      %p122 = pneg %p116
      %p123 = scmp.eq.s32.totalorder %s17, 5
      %p124 = por %p122, %p123
      %p125 = scmp.ne.s32.totalorder %s117, %s120
      %p126 = scmp.eq.s32.totalorder %s17, 0
      %p127 = por %p125, %p126
      %p128 = scmp.ne.s32.totalorder %s117, %s120
      %p129 = scmp.eq.s32.totalorder %s22, 5
      %p130 = por %p128, %p129
      %p131 = scmp.ne.s32.totalorder %s120, %s121
      %p132 = scmp.eq.s32.totalorder %s22, 0
      %p133 = por %p131, %p132
      %p134 = scmp.ne.s32.totalorder %s120, %s121
      %p135 = scmp.eq.s32.totalorder %s23, 5
      %p136 = por %p134, %p135
      %p138 = scmp.ne.s32.totalorder %s121, %s137
      %p139 = scmp.eq.s32.totalorder %s23, 0
      %p140 = por %p138, %p139
      %s141 = ssub.s32 %s25, %s32
      %p142 = scmp.eq.s32.totalorder %s141, 0
      %s144 = sadd.s32 %s143, 1
      %s145 = scalar_select %p142, %s143, %s144
      %p148 = pneg %p142
      %p149 = scmp.eq.s32.totalorder %s17, 5
      %p150 = por %p148, %p149
      %p151 = scmp.ne.s32.totalorder %s143, %s146
      %p152 = scmp.eq.s32.totalorder %s17, 0
      %p153 = por %p151, %p152
      %p154 = scmp.ne.s32.totalorder %s143, %s146
      %p155 = scmp.eq.s32.totalorder %s22, 5
      %p156 = por %p154, %p155
      %p157 = scmp.ne.s32.totalorder %s146, %s147
      %p158 = scmp.eq.s32.totalorder %s22, 0
      %p159 = por %p157, %p158
      %p160 = scmp.ne.s32.totalorder %s146, %s147
      %p161 = scmp.eq.s32.totalorder %s23, 5
      %p162 = por %p160, %p161
      %p164 = scmp.ne.s32.totalorder %s147, %s163
      %p165 = scmp.eq.s32.totalorder %s23, 0
      %p166 = por %p164, %p165
      %s167 = ssub.s32 %s24, %s36
      %p168 = scmp.eq.s32.totalorder %s167, 0
      %s170 = sadd.s32 %s169, 1
      %s171 = scalar_select %p168, %s169, %s170
      %p174 = pneg %p168
      %p175 = scmp.eq.s32.totalorder %s17, 5
      %p176 = por %p174, %p175
      %p177 = scmp.ne.s32.totalorder %s169, %s172
      %p178 = scmp.eq.s32.totalorder %s17, 0
      %p179 = por %p177, %p178
      %p180 = scmp.ne.s32.totalorder %s169, %s172
      %p181 = scmp.eq.s32.totalorder %s22, 5
      %p182 = por %p180, %p181
      %p183 = scmp.ne.s32.totalorder %s172, %s173
      %p184 = scmp.eq.s32.totalorder %s22, 0
      %p185 = por %p183, %p184
      %p186 = scmp.ne.s32.totalorder %s172, %s173
      %p187 = scmp.eq.s32.totalorder %s23, 5
      %p188 = por %p186, %p187
      %p190 = scmp.ne.s32.totalorder %s173, %s189
      %p191 = scmp.eq.s32.totalorder %s23, 0
      %p192 = por %p190, %p191
      %p193 = scmp.le.s32.totalorder 1, %s17
      %p194 = scmp.lt.s32.totalorder %s17, 7
      %p195 = pnand %p193, %p194
      %p196 = pneg %p195
      // Predicated region
      $region9: #{tpu_custom_call.1} parent=5 // pred_check
        _
      $region10: #{tpu_custom_call.1} parent=5 // pred_check_branch
        %198 = sbr.rel (%p195) target = $region12
      $region11: #{tpu_custom_call.1} parent=5 // pred_region
        %s199 = ssub.s32 %s17, 1
      $region12: #{tpu_custom_call.1} parent=5 // pred_fallthru
        _
      %p200 = scmp.lt.s32.totalorder %s17, 6
      // Predicated region
      $region13: #{tpu_custom_call.1} parent=5 // pred_check
        %p201 = pneg %p200
      $region14: #{tpu_custom_call.1} parent=5 // pred_check_branch
        %203 = sbr.rel (%p201) target = $region16
      $region15: #{tpu_custom_call.1} parent=5 // pred_region
        // Predicated region
        $region17: #{tpu_custom_call.1} parent=15 // pred_check
          %p204 = pneg %p49
        $region18: #{tpu_custom_call.1} parent=15 // pred_check_branch
          %206 = sbr.rel (%p204) target = $region20
        $region19: #{tpu_custom_call.1} parent=15 // pred_region
          %p207 = scmp.lt.s32.totalorder %s24, 1
          %s208 = scalar_select %p207, %s24, 1
          %s209 = smul.addr %s208, 32
          %s210 = smul.addr %s209, 8
          %s211 = scalar_lea.vmem %s0, %s210
        $region20: #{tpu_custom_call.1} parent=15 // pred_fallthru
          _
        // Predicated region
        $region21: #{tpu_custom_call.1} parent=15 // pred_check
          %p212 = pneg %p75
        $region22: #{tpu_custom_call.1} parent=15 // pred_check_branch
          %214 = sbr.rel (%p212) target = $region24
        $region23: #{tpu_custom_call.1} parent=15 // pred_region
          %p215 = scmp.lt.s32.totalorder %s24, 1
          %s216 = scalar_select %p215, %s24, 1
          %s217 = smul.addr %s216, 32
          %s218 = smul.addr %s217, 8
          %s219 = scalar_lea.vmem %s1, %s218
        $region24: #{tpu_custom_call.1} parent=15 // pred_fallthru
          _
        // Predicated region
        $region25: #{tpu_custom_call.1} parent=15 // pred_check
          %p220 = pneg %p101
        $region26: #{tpu_custom_call.1} parent=15 // pred_check_branch
          %222 = sbr.rel (%p220) target = $region28
        $region27: #{tpu_custom_call.1} parent=15 // pred_region
          %s223 = sand.u32 %s91, 1
          %s224 = scalar_lea.sflag [#allocation5], %s223
          %s225 = sand.u32 %s91, 1
          %s226 = smul.addr %s225, 576
          %s227 = scalar_lea.vmem [#allocation4], %s226
          %s229 = ssub.s32 9216, 9216
          %230 = vsyncadd %s224, %s229
          %s231 = smul.addr %s25, 144
          %s232 = smul.addr %s231, 64
          %s233 = scalar_lea.hbm %s2, %s232
          %s234 = sshll.u32 %s227, 4
          %s235 = int_to_ptr.vmem [resolvable:$true] %s234
          %240 = dma.hbm_to_vmem [thread:$0]  %s233, 9216, %s235, %s224, 64, 64, 4
        $region28: #{tpu_custom_call.1} parent=15 // pred_fallthru
          _
        // Predicated region
        $region29: #{tpu_custom_call.1} parent=15 // pred_check
          %p241 = pneg %p127
        $region30: #{tpu_custom_call.1} parent=15 // pred_check_branch
          %243 = sbr.rel (%p241) target = $region32
        $region31: #{tpu_custom_call.1} parent=15 // pred_region
          %p244 = scmp.lt.s32.totalorder %s25, 2
          %s245 = scalar_select %p244, %s25, 2
          %s246 = scalar_lea.vmem %s3, %s245
        $region32: #{tpu_custom_call.1} parent=15 // pred_fallthru
          _
        // Predicated region
        $region33: #{tpu_custom_call.1} parent=15 // pred_check
          %p247 = pneg %p153
        $region34: #{tpu_custom_call.1} parent=15 // pred_check_branch
          %249 = sbr.rel (%p247) target = $region36
        $region35: #{tpu_custom_call.1} parent=15 // pred_region
          %p250 = scmp.lt.s32.totalorder %s25, 2
          %s251 = scalar_select %p250, %s25, 2
          %s252 = scalar_lea.vmem %s4, %s251
        $region36: #{tpu_custom_call.1} parent=15 // pred_fallthru
          _
      $region16: #{tpu_custom_call.1} parent=5 // pred_fallthru
        _
      %p253 = scmp.le.s32.totalorder 1, %s17
      %p254 = scmp.lt.s32.totalorder %s17, 7
      %p255 = pnand %p253, %p254
      %p256 = pneg %p255
      // Predicated region
      $region37: #{tpu_custom_call.1} parent=5 // pred_check
        _
      $region38: #{tpu_custom_call.1} parent=5 // pred_check_branch
        %258 = sbr.rel (%p255) target = $region40
      $region39: #{tpu_custom_call.1} parent=5 // pred_region
        %s259 = ssub.s32 %s17, 1
        %s260 = sand.u32 %s94, 1
        %s261 = scalar_lea.sflag [#allocation5], %s260
        %s262 = sand.u32 %s94, 1
        %s263 = smul.addr %s262, 576
        %s264 = scalar_lea.vmem [#allocation4], %s263
        // Predicated region
        $region41: #{tpu_custom_call.1} parent=39 // pred_check
          %p265 = pneg %p107
        $region42: #{tpu_custom_call.1} parent=39 // pred_check_branch
          %267 = sbr.rel (%p265) target = $region44
        $region43: #{tpu_custom_call.1} parent=39 // pred_region
          %268 = dma.done %s261, 9216
        $region44: #{tpu_custom_call.1} parent=39 // pred_fallthru
          _
        %p269 = scmp.lt.s32.totalorder %s26, 1
        %s270 = scalar_select %p269, %s26, 1
        %s271 = smul.addr %s270, 32
        %s272 = smul.addr %s271, 8
        %s273 = scalar_lea.vmem %s0, %s272
        %p274 = pneg %p55
        %p275 = pneg %p52
        %p276 = scmp.lt.s32.totalorder %s26, 1
        %s277 = scalar_select %p276, %s26, 1
        %s278 = smul.addr %s277, 32
        %s279 = smul.addr %s278, 8
        %s280 = scalar_lea.vmem %s1, %s279
        %p281 = pneg %p81
        %p282 = pneg %p78
        %s283 = sand.u32 %s94, 1
        %s284 = scalar_lea.sflag [#allocation5], %s283
        %s285 = sand.u32 %s94, 1
        %s286 = smul.addr %s285, 576
        %s287 = scalar_lea.vmem [#allocation4], %s286
        %p288 = pneg %p107
        %p289 = pneg %p104
        %p290 = scmp.lt.s32.totalorder %s27, 2
        %s291 = scalar_select %p290, %s27, 2
        %s292 = scalar_lea.vmem %s3, %s291
        %p293 = pneg %p133
        %p294 = pneg %p130
        %p295 = scmp.lt.s32.totalorder %s27, 2
        %s296 = scalar_select %p295, %s27, 2
        %s297 = scalar_lea.vmem %s4, %s296
        %p298 = pneg %p159
        %p299 = pneg %p156
        %p300 = pneg %p185
        %p301 = pneg %p182
        %s302 = sand.u32 %s172, 1
        %s303 = scalar_lea.sflag [#allocation6], %s302
        %s304 = sand.u32 %s172, 1
        %s305 = smul.addr %s304, 256
        %s306 = scalar_lea.vmem [#allocation7], %s305
        %p307 = scmp.lt.s32.totalorder %s26, 1
        %s308 = scalar_select %p307, %s26, 1
        %s309 = smul.addr %s308, 32
        %s310 = smul.addr %s309, 8
        %s311 = scalar_lea.vmem %s0, %s310
        %p312 = scmp.lt.s32.totalorder %s26, 1
        %s313 = scalar_select %p312, %s26, 1
        %s314 = smul.addr %s313, 32
        %s315 = smul.addr %s314, 8
        %s316 = scalar_lea.vmem %s1, %s315
        %p317 = scmp.lt.s32.totalorder %s27, 2
        %s318 = scalar_select %p317, %s27, 2
        %s319 = scalar_lea.vmem %s3, %s318
        %p320 = scmp.lt.s32.totalorder %s27, 2
        %s321 = scalar_select %p320, %s27, 2
        %s322 = scalar_lea.vmem %s4, %s321
        %p324 = scmp.eq.s32.totalorder %s27, 0
        // Predicated region
        $region45: #{tpu_custom_call.1} parent=39 // pred_check
          %p325 = pneg %p324
        $region46: #{tpu_custom_call.1} parent=39 // pred_check_branch
          %327 = sbr.rel (%p325) target = $region48
        $region47: #{tpu_custom_call.1} parent=39 // pred_region
          %328 = vst [vmem:[#allocation2] sm:$0xff] 0.0
          %329 = vst [vmem:[#allocation2 + $0x8] sm:$0xff] 0.0
          %330 = vst [vmem:[#allocation2 + $0x10] sm:$0x3] 0.0
          %331 = vst [vmem:[#allocation2 + $0x18] sm:$0xff] 0.0
          %332 = vst [vmem:[#allocation2 + $0x20] sm:$0xff] 0.0
          %333 = vst [vmem:[#allocation2 + $0x28] sm:$0x3] 0.0
          %334 = vst [vmem:[#allocation2 + $0x30] sm:$0xff] 0.0
          %335 = vst [vmem:[#allocation2 + $0x38] sm:$0xff] 0.0
          %336 = vst [vmem:[#allocation2 + $0x40] sm:$0x3] 0.0
          %337 = vst [vmem:[#allocation2 + $0x48] sm:$0xff] 0.0
          %338 = vst [vmem:[#allocation2 + $0x50] sm:$0xff] 0.0
          %339 = vst [vmem:[#allocation2 + $0x58] sm:$0x3] 0.0
          %340 = vst [vmem:[#allocation2 + $0x60] sm:$0xff] 0.0
          %341 = vst [vmem:[#allocation2 + $0x68] sm:$0xff] 0.0
          %342 = vst [vmem:[#allocation2 + $0x70] sm:$0x3] 0.0
          %343 = vst [vmem:[#allocation2 + $0x78] sm:$0xff] 0.0
          %344 = vst [vmem:[#allocation2 + $0x80] sm:$0xff] 0.0
          %345 = vst [vmem:[#allocation2 + $0x88] sm:$0x3] 0.0
          %346 = vst [vmem:[#allocation2 + $0x90] sm:$0xff] 0.0
          %347 = vst [vmem:[#allocation2 + $0x98] sm:$0xff] 0.0
          %348 = vst [vmem:[#allocation2 + $0xa0] sm:$0x3] 0.0
          %349 = vst [vmem:[#allocation2 + $0xa8] sm:$0xff] 0.0
          %350 = vst [vmem:[#allocation2 + $0xb0] sm:$0xff] 0.0
          %351 = vst [vmem:[#allocation2 + $0xb8] sm:$0x3] 0.0
          %352 = vst [vmem:[#allocation2 + $0xc0] sm:$0xff] 0.0
          %353 = vst [vmem:[#allocation2 + $0xc8] sm:$0xff] 0.0
          %354 = vst [vmem:[#allocation2 + $0xd0] sm:$0x3] 0.0
          %355 = vst [vmem:[#allocation2 + $0xd8] sm:$0xff] 0.0
          %356 = vst [vmem:[#allocation2 + $0xe0] sm:$0xff] 0.0
          %357 = vst [vmem:[#allocation2 + $0xe8] sm:$0x3] 0.0
          %358 = vst [vmem:[#allocation2 + $0xf0] sm:$0xff] 0.0
          %359 = vst [vmem:[#allocation2 + $0xf8] sm:$0xff] 0.0
          %360 = vst [vmem:[#allocation2 + $0x100] sm:$0x3] 0.0
          %361 = vst [vmem:[#allocation2 + $0x108] sm:$0xff] 0.0
          %362 = vst [vmem:[#allocation2 + $0x110] sm:$0xff] 0.0
          %363 = vst [vmem:[#allocation2 + $0x118] sm:$0x3] 0.0
          %364 = vst [vmem:[#allocation2 + $0x120] sm:$0xff] 0.0
          %365 = vst [vmem:[#allocation2 + $0x128] sm:$0xff] 0.0
          %366 = vst [vmem:[#allocation2 + $0x130] sm:$0x3] 0.0
          %367 = vst [vmem:[#allocation2 + $0x138] sm:$0xff] 0.0
          %368 = vst [vmem:[#allocation2 + $0x140] sm:$0xff] 0.0
          %369 = vst [vmem:[#allocation2 + $0x148] sm:$0x3] 0.0
          %370 = vst [vmem:[#allocation2 + $0x150] sm:$0xff] 0.0
          %371 = vst [vmem:[#allocation2 + $0x158] sm:$0xff] 0.0
          %372 = vst [vmem:[#allocation2 + $0x160] sm:$0x3] 0.0
          %373 = vst [vmem:[#allocation2 + $0x168] sm:$0xff] 0.0
          %374 = vst [vmem:[#allocation2 + $0x170] sm:$0xff] 0.0
          %375 = vst [vmem:[#allocation2 + $0x178] sm:$0x3] 0.0
          %376 = vst [vmem:[#allocation2 + $0x180] sm:$0xff] 0.0
          %377 = vst [vmem:[#allocation2 + $0x188] sm:$0xff] 0.0
          %378 = vst [vmem:[#allocation2 + $0x190] sm:$0x3] 0.0
          %379 = vst [vmem:[#allocation2 + $0x198] sm:$0xff] 0.0
          %380 = vst [vmem:[#allocation2 + $0x1a0] sm:$0xff] 0.0
          %381 = vst [vmem:[#allocation2 + $0x1a8] sm:$0x3] 0.0
          %v382 = vld [vmem:[%s311] sm:$0xff]
          %v383 = vld [vmem:[%s311 + $0x8] sm:$0xff]
          %v384 = vld [vmem:[%s311 + $0x10] sm:$0xff]
          %v385 = vld [vmem:[%s311 + $0x18] sm:$0xff]
          %v386 = vld [vmem:[%s311 + $0x20] sm:$0xff]
          %v387 = vld [vmem:[%s311 + $0x28] sm:$0xff]
          %v388 = vld [vmem:[%s311 + $0x30] sm:$0xff]
          %v389 = vld [vmem:[%s311 + $0x38] sm:$0xff]
          %v390 = vld [vmem:[%s311 + $0x40] sm:$0xff]
          %v391 = vld [vmem:[%s311 + $0x48] sm:$0xff]
          %v392 = vld [vmem:[%s311 + $0x50] sm:$0xff]
          %v393 = vld [vmem:[%s311 + $0x58] sm:$0xff]
          %v394 = vld [vmem:[%s311 + $0x60] sm:$0xff]
          %v395 = vld [vmem:[%s311 + $0x68] sm:$0xff]
          %v396 = vld [vmem:[%s311 + $0x70] sm:$0xff]
          %v397 = vld [vmem:[%s311 + $0x78] sm:$0xff]
          %v398 = vld [vmem:[%s311 + $0x80] sm:$0xff]
          %v399 = vld [vmem:[%s311 + $0x88] sm:$0xff]
          %v400 = vld [vmem:[%s311 + $0x90] sm:$0xff]
          %v401 = vld [vmem:[%s311 + $0x98] sm:$0xff]
          %v402 = vld [vmem:[%s311 + $0xa0] sm:$0xff]
          %v403 = vld [vmem:[%s311 + $0xa8] sm:$0xff]
          %v404 = vld [vmem:[%s311 + $0xb0] sm:$0xff]
          %v405 = vld [vmem:[%s311 + $0xb8] sm:$0xff]
          %v406 = vld [vmem:[%s311 + $0xc0] sm:$0xff]
          %v407 = vld [vmem:[%s311 + $0xc8] sm:$0xff]
          %v408 = vld [vmem:[%s311 + $0xd0] sm:$0xff]
          %v409 = vld [vmem:[%s311 + $0xd8] sm:$0xff]
          %v410 = vld [vmem:[%s311 + $0xe0] sm:$0xff]
          %v411 = vld [vmem:[%s311 + $0xe8] sm:$0xff]
          %v412 = vld [vmem:[%s311 + $0xf0] sm:$0xff]
          %v413 = vld [vmem:[%s311 + $0xf8] sm:$0xff]
          %s414 = scalar_lea.vmem [#allocation2], 24
          %415 = vst [vmem:[%s414 + $0x1] sm:$0xff] %v382
          %416 = vst [vmem:[%s414 + $0x9] sm:$0xff] %v383
          %417 = vst [vmem:[%s414 + $0x19] sm:$0xff] %v384
          %418 = vst [vmem:[%s414 + $0x21] sm:$0xff] %v385
          %419 = vst [vmem:[%s414 + $0x31] sm:$0xff] %v386
          %420 = vst [vmem:[%s414 + $0x39] sm:$0xff] %v387
          %421 = vst [vmem:[%s414 + $0x49] sm:$0xff] %v388
          %422 = vst [vmem:[%s414 + $0x51] sm:$0xff] %v389
          %423 = vst [vmem:[%s414 + $0x61] sm:$0xff] %v390
          %424 = vst [vmem:[%s414 + $0x69] sm:$0xff] %v391
          %425 = vst [vmem:[%s414 + $0x79] sm:$0xff] %v392
          %426 = vst [vmem:[%s414 + $0x81] sm:$0xff] %v393
          %427 = vst [vmem:[%s414 + $0x91] sm:$0xff] %v394
          %428 = vst [vmem:[%s414 + $0x99] sm:$0xff] %v395
          %429 = vst [vmem:[%s414 + $0xa9] sm:$0xff] %v396
          %430 = vst [vmem:[%s414 + $0xb1] sm:$0xff] %v397
          %431 = vst [vmem:[%s414 + $0xc1] sm:$0xff] %v398
          %432 = vst [vmem:[%s414 + $0xc9] sm:$0xff] %v399
          %433 = vst [vmem:[%s414 + $0xd9] sm:$0xff] %v400
          %434 = vst [vmem:[%s414 + $0xe1] sm:$0xff] %v401
          %435 = vst [vmem:[%s414 + $0xf1] sm:$0xff] %v402
          %436 = vst [vmem:[%s414 + $0xf9] sm:$0xff] %v403
          %437 = vst [vmem:[%s414 + $0x109] sm:$0xff] %v404
          %438 = vst [vmem:[%s414 + $0x111] sm:$0xff] %v405
          %439 = vst [vmem:[%s414 + $0x121] sm:$0xff] %v406
          %440 = vst [vmem:[%s414 + $0x129] sm:$0xff] %v407
          %441 = vst [vmem:[%s414 + $0x139] sm:$0xff] %v408
          %442 = vst [vmem:[%s414 + $0x141] sm:$0xff] %v409
          %443 = vst [vmem:[%s414 + $0x151] sm:$0xff] %v410
          %444 = vst [vmem:[%s414 + $0x159] sm:$0xff] %v411
          %445 = vst [vmem:[%s414 + $0x169] sm:$0xff] %v412
          %446 = vst [vmem:[%s414 + $0x171] sm:$0xff] %v413
        $region48: #{tpu_custom_call.1} parent=39 // pred_fallthru
          _
        %p447 = scmp.lt.s32.totalorder %s27, 0
        %s448 = ssub.s32 0, %s27
        %s449 = scalar_select %p447, %s448, %s27
        %s450 = sdiv.u32.pop %s449, 3
        %s451 = srem.u32.pop %s449, 3
        %s452 = ssub.s32 0, %s451
        %s453 = scalar_select %p447, %s452, %s451
        %p454 = scmp.ne.s32.totalorder %s453, 0
        %p455 = scmp.lt.s32.totalorder %s453, 0
        %p456 = pnand %p455, %p454
        %p457 = pneg %p456
        %s458 = sadd.s32 %s453, 3
        %s459 = scalar_select %p457, %s458, %s453
        %p460 = scmp.eq.s32.totalorder %s459, 0
        // Predicated region
        $region49: #{tpu_custom_call.1} parent=39 // pred_check
          %p461 = pneg %p460
        $region50: #{tpu_custom_call.1} parent=39 // pred_check_branch
          %463 = sbr.rel (%p461) target = $region52
        $region51: #{tpu_custom_call.1} parent=39 // pred_region
          %s464 = scalar_lea.vmem [#allocation2], 24
          %v465 = vld [vmem:[%s464 + $0x1] sm:$0xff]
          %v466 = vld [vmem:[%s464 + $0x9] sm:$0xff]
          %v467 = vld [vmem:[%s464 + $0x19] sm:$0xff]
          %v468 = vld [vmem:[%s464 + $0x21] sm:$0xff]
          %v469 = vld [vmem:[%s464 + $0x31] sm:$0xff]
          %v470 = vld [vmem:[%s464 + $0x39] sm:$0xff]
          %v471 = vld [vmem:[%s464 + $0x49] sm:$0xff]
          %v472 = vld [vmem:[%s464 + $0x51] sm:$0xff]
          %v473 = vld [vmem:[%s464 + $0x61] sm:$0xff]
          %v474 = vld [vmem:[%s464 + $0x69] sm:$0xff]
          %v475 = vld [vmem:[%s464 + $0x79] sm:$0xff]
          %v476 = vld [vmem:[%s464 + $0x81] sm:$0xff]
          %v477 = vld [vmem:[%s464 + $0x91] sm:$0xff]
          %v478 = vld [vmem:[%s464 + $0x99] sm:$0xff]
          %v479 = vld [vmem:[%s464 + $0xa9] sm:$0xff]
          %v480 = vld [vmem:[%s464 + $0xb1] sm:$0xff]
          %v481 = vld [vmem:[%s464 + $0xc1] sm:$0xff]
          %v482 = vld [vmem:[%s464 + $0xc9] sm:$0xff]
          %v483 = vld [vmem:[%s464 + $0xd9] sm:$0xff]
          %v484 = vld [vmem:[%s464 + $0xe1] sm:$0xff]
          %v485 = vld [vmem:[%s464 + $0xf1] sm:$0xff]
          %v486 = vld [vmem:[%s464 + $0xf9] sm:$0xff]
          %v487 = vld [vmem:[%s464 + $0x109] sm:$0xff]
          %v488 = vld [vmem:[%s464 + $0x111] sm:$0xff]
          %v489 = vld [vmem:[%s464 + $0x121] sm:$0xff]
          %v490 = vld [vmem:[%s464 + $0x129] sm:$0xff]
          %v491 = vld [vmem:[%s464 + $0x139] sm:$0xff]
          %v492 = vld [vmem:[%s464 + $0x141] sm:$0xff]
          %v493 = vld [vmem:[%s464 + $0x151] sm:$0xff]
          %v494 = vld [vmem:[%s464 + $0x159] sm:$0xff]
          %v495 = vld [vmem:[%s464 + $0x169] sm:$0xff]
          %v496 = vld [vmem:[%s464 + $0x171] sm:$0xff]
          %497 = vst [vmem:[#allocation3] sm:$0xff] %v465
          %498 = vst [vmem:[#allocation3 + $0x8] sm:$0xff] %v466
          %499 = vst [vmem:[#allocation3 + $0x10] sm:$0xff] %v467
          %500 = vst [vmem:[#allocation3 + $0x18] sm:$0xff] %v468
          %501 = vst [vmem:[#allocation3 + $0x20] sm:$0xff] %v469
          %502 = vst [vmem:[#allocation3 + $0x28] sm:$0xff] %v470
          %503 = vst [vmem:[#allocation3 + $0x30] sm:$0xff] %v471
          %504 = vst [vmem:[#allocation3 + $0x38] sm:$0xff] %v472
          %505 = vst [vmem:[#allocation3 + $0x40] sm:$0xff] %v473
          %506 = vst [vmem:[#allocation3 + $0x48] sm:$0xff] %v474
          %507 = vst [vmem:[#allocation3 + $0x50] sm:$0xff] %v475
          %508 = vst [vmem:[#allocation3 + $0x58] sm:$0xff] %v476
          %509 = vst [vmem:[#allocation3 + $0x60] sm:$0xff] %v477
          %510 = vst [vmem:[#allocation3 + $0x68] sm:$0xff] %v478
          %511 = vst [vmem:[#allocation3 + $0x70] sm:$0xff] %v479
          %512 = vst [vmem:[#allocation3 + $0x78] sm:$0xff] %v480
          %513 = vst [vmem:[#allocation3 + $0x80] sm:$0xff] %v481
          %514 = vst [vmem:[#allocation3 + $0x88] sm:$0xff] %v482
          %515 = vst [vmem:[#allocation3 + $0x90] sm:$0xff] %v483
          %516 = vst [vmem:[#allocation3 + $0x98] sm:$0xff] %v484
          %517 = vst [vmem:[#allocation3 + $0xa0] sm:$0xff] %v485
          %518 = vst [vmem:[#allocation3 + $0xa8] sm:$0xff] %v486
          %519 = vst [vmem:[#allocation3 + $0xb0] sm:$0xff] %v487
          %520 = vst [vmem:[#allocation3 + $0xb8] sm:$0xff] %v488
          %521 = vst [vmem:[#allocation3 + $0xc0] sm:$0xff] %v489
          %522 = vst [vmem:[#allocation3 + $0xc8] sm:$0xff] %v490
          %523 = vst [vmem:[#allocation3 + $0xd0] sm:$0xff] %v491
          %524 = vst [vmem:[#allocation3 + $0xd8] sm:$0xff] %v492
          %525 = vst [vmem:[#allocation3 + $0xe0] sm:$0xff] %v493
          %526 = vst [vmem:[#allocation3 + $0xe8] sm:$0xff] %v494
          %527 = vst [vmem:[#allocation3 + $0xf0] sm:$0xff] %v495
          %528 = vst [vmem:[#allocation3 + $0xf8] sm:$0xff] %v496
        $region52: #{tpu_custom_call.1} parent=39 // pred_fallthru
          _
        %v529 = vld [vmem:[%s316] sm:$0xff]
        %v530 = vld [vmem:[%s316 + $0x8] sm:$0xff]
        %v531 = vld [vmem:[%s316 + $0x10] sm:$0xff]
        %v532 = vld [vmem:[%s316 + $0x18] sm:$0xff]
        %v533 = vld [vmem:[%s316 + $0x20] sm:$0xff]
        %v534 = vld [vmem:[%s316 + $0x28] sm:$0xff]
        %v535 = vld [vmem:[%s316 + $0x30] sm:$0xff]
        %v536 = vld [vmem:[%s316 + $0x38] sm:$0xff]
        %v537 = vld [vmem:[%s316 + $0x40] sm:$0xff]
        %v538 = vld [vmem:[%s316 + $0x48] sm:$0xff]
        %v539 = vld [vmem:[%s316 + $0x50] sm:$0xff]
        %v540 = vld [vmem:[%s316 + $0x58] sm:$0xff]
        %v541 = vld [vmem:[%s316 + $0x60] sm:$0xff]
        %v542 = vld [vmem:[%s316 + $0x68] sm:$0xff]
        %v543 = vld [vmem:[%s316 + $0x70] sm:$0xff]
        %v544 = vld [vmem:[%s316 + $0x78] sm:$0xff]
        %v545 = vld [vmem:[%s316 + $0x80] sm:$0xff]
        %v546 = vld [vmem:[%s316 + $0x88] sm:$0xff]
        %v547 = vld [vmem:[%s316 + $0x90] sm:$0xff]
        %v548 = vld [vmem:[%s316 + $0x98] sm:$0xff]
        %v549 = vld [vmem:[%s316 + $0xa0] sm:$0xff]
        %v550 = vld [vmem:[%s316 + $0xa8] sm:$0xff]
        %v551 = vld [vmem:[%s316 + $0xb0] sm:$0xff]
        %v552 = vld [vmem:[%s316 + $0xb8] sm:$0xff]
        %v553 = vld [vmem:[%s316 + $0xc0] sm:$0xff]
        %v554 = vld [vmem:[%s316 + $0xc8] sm:$0xff]
        %v555 = vld [vmem:[%s316 + $0xd0] sm:$0xff]
        %v556 = vld [vmem:[%s316 + $0xd8] sm:$0xff]
        %v557 = vld [vmem:[%s316 + $0xe0] sm:$0xff]
        %v558 = vld [vmem:[%s316 + $0xe8] sm:$0xff]
        %v559 = vld [vmem:[%s316 + $0xf0] sm:$0xff]
        %v560 = vld [vmem:[%s316 + $0xf8] sm:$0xff]
        %562 = vset.pattern.permute.xlu0 0
        %563 = vperm.xlu0 %562, %v529
        %v564 = vpop.permute.xlu0 %563
        %567 = vset.pattern.permute.xlu0 0
        %568 = vperm.xlu0 %567, %v530
        %v569 = vpop.permute.xlu0 %568
        %572 = vset.pattern.permute.xlu0 0
        %573 = vperm.xlu0 %572, %v531
        %v574 = vpop.permute.xlu0 %573
        %577 = vset.pattern.permute.xlu0 0
        %578 = vperm.xlu0 %577, %v532
        %v579 = vpop.permute.xlu0 %578
        %582 = vset.pattern.permute.xlu0 0
        %583 = vperm.xlu0 %582, %v533
        %v584 = vpop.permute.xlu0 %583
        %587 = vset.pattern.permute.xlu0 0
        %588 = vperm.xlu0 %587, %v534
        %v589 = vpop.permute.xlu0 %588
        %592 = vset.pattern.permute.xlu0 0
        %593 = vperm.xlu0 %592, %v535
        %v594 = vpop.permute.xlu0 %593
        %597 = vset.pattern.permute.xlu0 0
        %598 = vperm.xlu0 %597, %v536
        %v599 = vpop.permute.xlu0 %598
        %602 = vset.pattern.permute.xlu0 0
        %603 = vperm.xlu0 %602, %v537
        %v604 = vpop.permute.xlu0 %603
        %607 = vset.pattern.permute.xlu0 0
        %608 = vperm.xlu0 %607, %v538
        %v609 = vpop.permute.xlu0 %608
        %612 = vset.pattern.permute.xlu0 0
        %613 = vperm.xlu0 %612, %v539
        %v614 = vpop.permute.xlu0 %613
        %617 = vset.pattern.permute.xlu0 0
        %618 = vperm.xlu0 %617, %v540
        %v619 = vpop.permute.xlu0 %618
        %622 = vset.pattern.permute.xlu0 0
        %623 = vperm.xlu0 %622, %v541
        %v624 = vpop.permute.xlu0 %623
        %627 = vset.pattern.permute.xlu0 0
        %628 = vperm.xlu0 %627, %v542
        %v629 = vpop.permute.xlu0 %628
        %632 = vset.pattern.permute.xlu0 0
        %633 = vperm.xlu0 %632, %v543
        %v634 = vpop.permute.xlu0 %633
        %637 = vset.pattern.permute.xlu0 0
        %638 = vperm.xlu0 %637, %v544
        %v639 = vpop.permute.xlu0 %638
        %642 = vset.pattern.permute.xlu0 0
        %643 = vperm.xlu0 %642, %v545
        %v644 = vpop.permute.xlu0 %643
        %647 = vset.pattern.permute.xlu0 0
        %648 = vperm.xlu0 %647, %v546
        %v649 = vpop.permute.xlu0 %648
        %652 = vset.pattern.permute.xlu0 0
        %653 = vperm.xlu0 %652, %v547
        %v654 = vpop.permute.xlu0 %653
        %657 = vset.pattern.permute.xlu0 0
        %658 = vperm.xlu0 %657, %v548
        %v659 = vpop.permute.xlu0 %658
        %662 = vset.pattern.permute.xlu0 0
        %663 = vperm.xlu0 %662, %v549
        %v664 = vpop.permute.xlu0 %663
        %667 = vset.pattern.permute.xlu0 0
        %668 = vperm.xlu0 %667, %v550
        %v669 = vpop.permute.xlu0 %668
        %672 = vset.pattern.permute.xlu0 0
        %673 = vperm.xlu0 %672, %v551
        %v674 = vpop.permute.xlu0 %673
        %677 = vset.pattern.permute.xlu0 0
        %678 = vperm.xlu0 %677, %v552
        %v679 = vpop.permute.xlu0 %678
        %682 = vset.pattern.permute.xlu0 0
        %683 = vperm.xlu0 %682, %v553
        %v684 = vpop.permute.xlu0 %683
        %687 = vset.pattern.permute.xlu0 0
        %688 = vperm.xlu0 %687, %v554
        %v689 = vpop.permute.xlu0 %688
        %692 = vset.pattern.permute.xlu0 0
        %693 = vperm.xlu0 %692, %v555
        %v694 = vpop.permute.xlu0 %693
        %697 = vset.pattern.permute.xlu0 0
        %698 = vperm.xlu0 %697, %v556
        %v699 = vpop.permute.xlu0 %698
        %702 = vset.pattern.permute.xlu0 0
        %703 = vperm.xlu0 %702, %v557
        %v704 = vpop.permute.xlu0 %703
        %707 = vset.pattern.permute.xlu0 0
        %708 = vperm.xlu0 %707, %v558
        %v709 = vpop.permute.xlu0 %708
        %712 = vset.pattern.permute.xlu0 0
        %713 = vperm.xlu0 %712, %v559
        %v714 = vpop.permute.xlu0 %713
        %717 = vset.pattern.permute.xlu0 0
        %718 = vperm.xlu0 %717, %v560
        %v719 = vpop.permute.xlu0 %718
        %vm721 = vcmp.gt.f32.partialorder %v564, 0.5
        %vm722 = vcmp.gt.f32.partialorder %v569, 0.5
        %vm723 = vcmp.gt.f32.partialorder %v574, 0.5
        %vm724 = vcmp.gt.f32.partialorder %v579, 0.5
        %vm725 = vcmp.gt.f32.partialorder %v584, 0.5
        %vm726 = vcmp.gt.f32.partialorder %v589, 0.5
        %vm727 = vcmp.gt.f32.partialorder %v594, 0.5
        %vm728 = vcmp.gt.f32.partialorder %v599, 0.5
        %vm729 = vcmp.gt.f32.partialorder %v604, 0.5
        %vm730 = vcmp.gt.f32.partialorder %v609, 0.5
        %vm731 = vcmp.gt.f32.partialorder %v614, 0.5
        %vm732 = vcmp.gt.f32.partialorder %v619, 0.5
        %vm733 = vcmp.gt.f32.partialorder %v624, 0.5
        %vm734 = vcmp.gt.f32.partialorder %v629, 0.5
        %vm735 = vcmp.gt.f32.partialorder %v634, 0.5
        %vm736 = vcmp.gt.f32.partialorder %v639, 0.5
        %vm737 = vcmp.gt.f32.partialorder %v644, 0.5
        %vm738 = vcmp.gt.f32.partialorder %v649, 0.5
        %vm739 = vcmp.gt.f32.partialorder %v654, 0.5
        %vm740 = vcmp.gt.f32.partialorder %v659, 0.5
        %vm741 = vcmp.gt.f32.partialorder %v664, 0.5
        %vm742 = vcmp.gt.f32.partialorder %v669, 0.5
        %vm743 = vcmp.gt.f32.partialorder %v674, 0.5
        %vm744 = vcmp.gt.f32.partialorder %v679, 0.5
        %vm745 = vcmp.gt.f32.partialorder %v684, 0.5
        %vm746 = vcmp.gt.f32.partialorder %v689, 0.5
        %vm747 = vcmp.gt.f32.partialorder %v694, 0.5
        %vm748 = vcmp.gt.f32.partialorder %v699, 0.5
        %vm749 = vcmp.gt.f32.partialorder %v704, 0.5
        %vm750 = vcmp.gt.f32.partialorder %v709, 0.5
        %vm751 = vcmp.gt.f32.partialorder %v714, 0.5
        %vm752 = vcmp.gt.f32.partialorder %v719, 0.5
        %v753 = vld [vmem:[#allocation2] sm:$0xff]
        %v754 = vld [vmem:[#allocation2 + $0x8] sm:$0xff]
        %v755 = vld [vmem:[#allocation2 + $0x18] sm:$0xff]
        %v756 = vld [vmem:[#allocation2 + $0x20] sm:$0xff]
        %v757 = vld [vmem:[#allocation2 + $0x30] sm:$0xff]
        %v758 = vld [vmem:[#allocation2 + $0x38] sm:$0xff]
        %v759 = vld [vmem:[#allocation2 + $0x48] sm:$0xff]
        %v760 = vld [vmem:[#allocation2 + $0x50] sm:$0xff]
        %v761 = vld [vmem:[#allocation2 + $0x60] sm:$0xff]
        %v762 = vld [vmem:[#allocation2 + $0x68] sm:$0xff]
        %v763 = vld [vmem:[#allocation2 + $0x78] sm:$0xff]
        %v764 = vld [vmem:[#allocation2 + $0x80] sm:$0xff]
        %v765 = vld [vmem:[#allocation2 + $0x90] sm:$0xff]
        %v766 = vld [vmem:[#allocation2 + $0x98] sm:$0xff]
        %v767 = vld [vmem:[#allocation2 + $0xa8] sm:$0xff]
        %v768 = vld [vmem:[#allocation2 + $0xb0] sm:$0xff]
        %v769 = vld [vmem:[#allocation2 + $0xc0] sm:$0xff]
        %v770 = vld [vmem:[#allocation2 + $0xc8] sm:$0xff]
        %v771 = vld [vmem:[#allocation2 + $0xd8] sm:$0xff]
        %v772 = vld [vmem:[#allocation2 + $0xe0] sm:$0xff]
        %v773 = vld [vmem:[#allocation2 + $0xf0] sm:$0xff]
        %v774 = vld [vmem:[#allocation2 + $0xf8] sm:$0xff]
        %v775 = vld [vmem:[#allocation2 + $0x108] sm:$0xff]
        %v776 = vld [vmem:[#allocation2 + $0x110] sm:$0xff]
        %v777 = vld [vmem:[#allocation2 + $0x120] sm:$0xff]
        %v778 = vld [vmem:[#allocation2 + $0x128] sm:$0xff]
        %v779 = vld [vmem:[#allocation2 + $0x138] sm:$0xff]
        %v780 = vld [vmem:[#allocation2 + $0x140] sm:$0xff]
        %v781 = vld [vmem:[#allocation2 + $0x150] sm:$0xff]
        %v782 = vld [vmem:[#allocation2 + $0x158] sm:$0xff]
        %v783 = vld [vmem:[#allocation2 + $0x168] sm:$0xff]
        %v784 = vld [vmem:[#allocation2 + $0x170] sm:$0xff]
        %v785 = vld [vmem:[#allocation2 + $0x180] sm:$0xff]
        %v786 = vld [vmem:[#allocation2 + $0x188] sm:$0xff]
        %v787 = vld [vmem:[#allocation2 + $0x198] sm:$0xff]
        %v788 = vld [vmem:[#allocation2 + $0x1a0] sm:$0xff]
        %v789 = vpack.c.bf16 %v754, %v753
        %v790 = vpack.c.bf16 %v756, %v755
        %v791 = vpack.c.bf16 %v758, %v757
        %v792 = vpack.c.bf16 %v760, %v759
        %v793 = vpack.c.bf16 %v762, %v761
        %v794 = vpack.c.bf16 %v764, %v763
        %v795 = vpack.c.bf16 %v766, %v765
        %v796 = vpack.c.bf16 %v768, %v767
        %v797 = vpack.c.bf16 %v770, %v769
        %v798 = vpack.c.bf16 %v772, %v771
        %v799 = vpack.c.bf16 %v774, %v773
        %v800 = vpack.c.bf16 %v776, %v775
        %v801 = vpack.c.bf16 %v778, %v777
        %v802 = vpack.c.bf16 %v780, %v779
        %v803 = vpack.c.bf16 %v782, %v781
        %v804 = vpack.c.bf16 %v784, %v783
        %v805 = vpack.c.bf16 %v786, %v785
        %v806 = vpack.c.bf16 %v788, %v787
        %v807 = vld [vmem:[#allocation2 + $0x1] sm:$0xff]
        %v808 = vld [vmem:[#allocation2 + $0x9] sm:$0xff]
        %v809 = vld [vmem:[#allocation2 + $0x19] sm:$0xff]
        %v810 = vld [vmem:[#allocation2 + $0x21] sm:$0xff]
        %v811 = vld [vmem:[#allocation2 + $0x31] sm:$0xff]
        %v812 = vld [vmem:[#allocation2 + $0x39] sm:$0xff]
        %v813 = vld [vmem:[#allocation2 + $0x49] sm:$0xff]
        %v814 = vld [vmem:[#allocation2 + $0x51] sm:$0xff]
        %v815 = vld [vmem:[#allocation2 + $0x61] sm:$0xff]
        %v816 = vld [vmem:[#allocation2 + $0x69] sm:$0xff]
        %v817 = vld [vmem:[#allocation2 + $0x79] sm:$0xff]
        %v818 = vld [vmem:[#allocation2 + $0x81] sm:$0xff]
        %v819 = vld [vmem:[#allocation2 + $0x91] sm:$0xff]
        %v820 = vld [vmem:[#allocation2 + $0x99] sm:$0xff]
        %v821 = vld [vmem:[#allocation2 + $0xa9] sm:$0xff]
        %v822 = vld [vmem:[#allocation2 + $0xb1] sm:$0xff]
        %v823 = vld [vmem:[#allocation2 + $0xc1] sm:$0xff]
        %v824 = vld [vmem:[#allocation2 + $0xc9] sm:$0xff]
        %v825 = vld [vmem:[#allocation2 + $0xd9] sm:$0xff]
        %v826 = vld [vmem:[#allocation2 + $0xe1] sm:$0xff]
        %v827 = vld [vmem:[#allocation2 + $0xf1] sm:$0xff]
        %v828 = vld [vmem:[#allocation2 + $0xf9] sm:$0xff]
        %v829 = vld [vmem:[#allocation2 + $0x109] sm:$0xff]
        %v830 = vld [vmem:[#allocation2 + $0x111] sm:$0xff]
        %v831 = vld [vmem:[#allocation2 + $0x121] sm:$0xff]
        %v832 = vld [vmem:[#allocation2 + $0x129] sm:$0xff]
        %v833 = vld [vmem:[#allocation2 + $0x139] sm:$0xff]
        %v834 = vld [vmem:[#allocation2 + $0x141] sm:$0xff]
        %v835 = vld [vmem:[#allocation2 + $0x151] sm:$0xff]
        %v836 = vld [vmem:[#allocation2 + $0x159] sm:$0xff]
        %v837 = vld [vmem:[#allocation2 + $0x169] sm:$0xff]
        %v838 = vld [vmem:[#allocation2 + $0x171] sm:$0xff]
        %v839 = vld [vmem:[#allocation2 + $0x181] sm:$0xff]
        %v840 = vld [vmem:[#allocation2 + $0x189] sm:$0xff]
        %v841 = vld [vmem:[#allocation2 + $0x199] sm:$0xff]
        %v842 = vld [vmem:[#allocation2 + $0x1a1] sm:$0xff]
        %v843 = vpack.c.bf16 %v808, %v807
        %v844 = vpack.c.bf16 %v810, %v809
        %v845 = vpack.c.bf16 %v812, %v811
        %v846 = vpack.c.bf16 %v814, %v813
        %v847 = vpack.c.bf16 %v816, %v815
        %v848 = vpack.c.bf16 %v818, %v817
        %v849 = vpack.c.bf16 %v820, %v819
        %v850 = vpack.c.bf16 %v822, %v821
        %v851 = vpack.c.bf16 %v824, %v823
        %v852 = vpack.c.bf16 %v826, %v825
        %v853 = vpack.c.bf16 %v828, %v827
        %v854 = vpack.c.bf16 %v830, %v829
        %v855 = vpack.c.bf16 %v832, %v831
        %v856 = vpack.c.bf16 %v834, %v833
        %v857 = vpack.c.bf16 %v836, %v835
        %v858 = vpack.c.bf16 %v838, %v837
        %v859 = vpack.c.bf16 %v840, %v839
        %v860 = vpack.c.bf16 %v842, %v841
        %v861 = vld [vmem:[#allocation2 + $0x2] sm:$0xff]
        %v862 = vld [vmem:[#allocation2 + $0xa] sm:$0xff]
        %v863 = vld [vmem:[#allocation2 + $0x1a] sm:$0xff]
        %v864 = vld [vmem:[#allocation2 + $0x22] sm:$0xff]
        %v865 = vld [vmem:[#allocation2 + $0x32] sm:$0xff]
        %v866 = vld [vmem:[#allocation2 + $0x3a] sm:$0xff]
        %v867 = vld [vmem:[#allocation2 + $0x4a] sm:$0xff]
        %v868 = vld [vmem:[#allocation2 + $0x52] sm:$0xff]
        %v869 = vld [vmem:[#allocation2 + $0x62] sm:$0xff]
        %v870 = vld [vmem:[#allocation2 + $0x6a] sm:$0xff]
        %v871 = vld [vmem:[#allocation2 + $0x7a] sm:$0xff]
        %v872 = vld [vmem:[#allocation2 + $0x82] sm:$0xff]
        %v873 = vld [vmem:[#allocation2 + $0x92] sm:$0xff]
        %v874 = vld [vmem:[#allocation2 + $0x9a] sm:$0xff]
        %v875 = vld [vmem:[#allocation2 + $0xaa] sm:$0xff]
        %v876 = vld [vmem:[#allocation2 + $0xb2] sm:$0xff]
        %v877 = vld [vmem:[#allocation2 + $0xc2] sm:$0xff]
        %v878 = vld [vmem:[#allocation2 + $0xca] sm:$0xff]
        %v879 = vld [vmem:[#allocation2 + $0xda] sm:$0xff]
        %v880 = vld [vmem:[#allocation2 + $0xe2] sm:$0xff]
        %v881 = vld [vmem:[#allocation2 + $0xf2] sm:$0xff]
        %v882 = vld [vmem:[#allocation2 + $0xfa] sm:$0xff]
        %v883 = vld [vmem:[#allocation2 + $0x10a] sm:$0xff]
        %v884 = vld [vmem:[#allocation2 + $0x112] sm:$0xff]
        %v885 = vld [vmem:[#allocation2 + $0x122] sm:$0xff]
        %v886 = vld [vmem:[#allocation2 + $0x12a] sm:$0xff]
        %v887 = vld [vmem:[#allocation2 + $0x13a] sm:$0xff]
        %v888 = vld [vmem:[#allocation2 + $0x142] sm:$0xff]
        %v889 = vld [vmem:[#allocation2 + $0x152] sm:$0xff]
        %v890 = vld [vmem:[#allocation2 + $0x15a] sm:$0xff]
        %v891 = vld [vmem:[#allocation2 + $0x16a] sm:$0xff]
        %v892 = vld [vmem:[#allocation2 + $0x172] sm:$0xff]
        %v893 = vld [vmem:[#allocation2 + $0x182] sm:$0xff]
        %v894 = vld [vmem:[#allocation2 + $0x18a] sm:$0xff]
        %v895 = vld [vmem:[#allocation2 + $0x19a] sm:$0xff]
        %v896 = vld [vmem:[#allocation2 + $0x1a2] sm:$0xff]
        %v897 = vpack.c.bf16 %v862, %v861
        %v898 = vpack.c.bf16 %v864, %v863
        %v899 = vpack.c.bf16 %v866, %v865
        %v900 = vpack.c.bf16 %v868, %v867
        %v901 = vpack.c.bf16 %v870, %v869
        %v902 = vpack.c.bf16 %v872, %v871
        %v903 = vpack.c.bf16 %v874, %v873
        %v904 = vpack.c.bf16 %v876, %v875
        %v905 = vpack.c.bf16 %v878, %v877
        %v906 = vpack.c.bf16 %v880, %v879
        %v907 = vpack.c.bf16 %v882, %v881
        %v908 = vpack.c.bf16 %v884, %v883
        %v909 = vpack.c.bf16 %v886, %v885
        %v910 = vpack.c.bf16 %v888, %v887
        %v911 = vpack.c.bf16 %v890, %v889
        %v912 = vpack.c.bf16 %v892, %v891
        %v913 = vpack.c.bf16 %v894, %v893
        %v914 = vpack.c.bf16 %v896, %v895
        %v915 = vld [vmem:[%s264] sm:$0xf]
        %v916 = vld [vmem:[%s264 + $0x4] sm:$0xf]
        %v917 = vld [vmem:[%s264 + $0x8] sm:$0xf]
        %v918 = vld [vmem:[%s264 + $0xc] sm:$0xf]
        %v919 = vld [vmem:[%s264 + $0x10] sm:$0xf]
        %v920 = vld [vmem:[%s264 + $0x14] sm:$0xf]
        %v921 = vld [vmem:[%s264 + $0x18] sm:$0xf]
        %v922 = vld [vmem:[%s264 + $0x1c] sm:$0xf]
        %v923 = vld [vmem:[%s264 + $0x20] sm:$0xf]
        %v924 = vld [vmem:[%s264 + $0x24] sm:$0xf]
        %v925 = vld [vmem:[%s264 + $0x28] sm:$0xf]
        %v926 = vld [vmem:[%s264 + $0x2c] sm:$0xf]
        %v927 = vld [vmem:[%s264 + $0x30] sm:$0xf]
        %v928 = vld [vmem:[%s264 + $0x34] sm:$0xf]
        %v929 = vld [vmem:[%s264 + $0x38] sm:$0xf]
        %v930 = vld [vmem:[%s264 + $0x3c] sm:$0xf]
        %v931 = vld [vmem:[%s264 + $0x40] sm:$0xf]
        %v932 = vld [vmem:[%s264 + $0x44] sm:$0xf]
        %v933 = vld [vmem:[%s264 + $0x48] sm:$0xf]
        %v934 = vld [vmem:[%s264 + $0x4c] sm:$0xf]
        %v935 = vld [vmem:[%s264 + $0x50] sm:$0xf]
        %v936 = vld [vmem:[%s264 + $0x54] sm:$0xf]
        %v937 = vld [vmem:[%s264 + $0x58] sm:$0xf]
        %v938 = vld [vmem:[%s264 + $0x5c] sm:$0xf]
        %v939 = vld [vmem:[%s264 + $0x60] sm:$0xf]
        %v940 = vld [vmem:[%s264 + $0x64] sm:$0xf]
        %v941 = vld [vmem:[%s264 + $0x68] sm:$0xf]
        %v942 = vld [vmem:[%s264 + $0x6c] sm:$0xf]
        %v943 = vld [vmem:[%s264 + $0x70] sm:$0xf]
        %v944 = vld [vmem:[%s264 + $0x74] sm:$0xf]
        %v945 = vld [vmem:[%s264 + $0x78] sm:$0xf]
        %v946 = vld [vmem:[%s264 + $0x7c] sm:$0xf]
        %v963 = vunpack.c.l.b16 %v931
        %v964 = vunpack.c.l.b16 %v932
        %v965 = vunpack.c.l.b16 %v933
        %v966 = vunpack.c.l.b16 %v934
        %v967 = vunpack.c.l.b16 %v935
        %v968 = vunpack.c.l.b16 %v936
        %v969 = vunpack.c.l.b16 %v937
        %v970 = vunpack.c.l.b16 %v938
        %v971 = vunpack.c.l.b16 %v939
        %v972 = vunpack.c.l.b16 %v940
        %v973 = vunpack.c.l.b16 %v941
        %v974 = vunpack.c.l.b16 %v942
        %v975 = vunpack.c.l.b16 %v943
        %v976 = vunpack.c.l.b16 %v944
        %v977 = vunpack.c.l.b16 %v945
        %v978 = vunpack.c.l.b16 %v946
        %v979 = vpack.c.b16 %v964, %v963
        %v980 = vpack.c.b16 %v966, %v965
        %v981 = vpack.c.b16 %v968, %v967
        %v982 = vpack.c.b16 %v970, %v969
        %v983 = vpack.c.b16 %v972, %v971
        %v984 = vpack.c.b16 %v974, %v973
        %v985 = vpack.c.b16 %v976, %v975
        %v986 = vpack.c.b16 %v978, %v977
        %995 = vmatprep.subr.bf16.mxu0 0
        %996 = vmatpush1.bf16.msra.mxu0 %v986
        %997 = vmatprep.subr.bf16.mxu0 0
        %998 = vmatpush1.bf16.msra.mxu0 %v985
        %999 = vmatprep.subr.bf16.mxu0 0
        %1000 = vmatpush1.bf16.msra.mxu0 %v984
        %1001 = vmatprep.subr.bf16.mxu0 0
        %1002 = vmatpush1.bf16.msra.mxu0 %v983
        %1003 = vmatprep.subr.bf16.mxu0 0
        %1004 = vmatpush1.bf16.msra.mxu0 %v982
        %1005 = vmatprep.subr.bf16.mxu0 0
        %1006 = vmatpush1.bf16.msra.mxu0 %v981
        %1007 = vmatprep.subr.bf16.mxu0 0
        %1008 = vmatpush1.bf16.msra.mxu0 %v980
        %1009 = vmatprep.subr.bf16.mxu0 0
        %1010 = vmatpush1.bf16.msra.mxu0 %v979
        %1011 = vmatprep.subr.bf16.mxu0 0
        %1012 = vmatpush2.bf16.msra.mxu0 0
        %1013 = vmatprep.subr.bf16.mxu0 0
        %1014 = vmatpush2.bf16.msra.mxu0 0
        %1015 = vmatprep.subr.bf16.mxu0 0
        %1016 = vmatpush2.bf16.msra.mxu0 0
        %1017 = vmatprep.subr.bf16.mxu0 0
        %1018 = vmatpush2.bf16.msra.mxu0 0
        %1019 = vmatprep.subr.bf16.mxu0 0
        %1020 = vmatpush2.bf16.msra.mxu0 0
        %1021 = vmatprep.subr.bf16.mxu0 0
        %1022 = vmatpush2.bf16.msra.mxu0 0
        %1023 = vmatprep.subr.bf16.mxu0 0
        %1024 = vmatpush2.bf16.msra.mxu0 0
        %1025 = vmatprep.subr.bf16.mxu0 0
        %1026 = vmatpush2.bf16.msra.mxu0 0
        %1027 = vmatprep.mubr.bf16.mxu0 0
        %1028 = vmatmul.mubr.bf16.gmra.mxu0 %v843
        %v1029 = vpop.f32.mrf.mxu0
        %v1030 = vadd.f32 0.0, %v1029
        %v1031 = vpop.f32.mrf.mxu0
        %v1032 = vpop.f32.mrf.mxu0
        %v1033 = vadd.f32 0.0, %v1032
        %v1034 = vpop.f32.mrf.mxu0
        %1035 = vmatprep.mubr.bf16.mxu0 0
        %1036 = vmatmul.mubr.bf16.gmra.mxu0 %v844
        %v1037 = vpop.f32.mrf.mxu0
        %v1038 = vadd.f32 0.0, %v1037
        %v1039 = vpop.f32.mrf.mxu0
        %v1040 = vpop.f32.mrf.mxu0
        %v1041 = vadd.f32 0.0, %v1040
        %v1042 = vpop.f32.mrf.mxu0
        %1043 = vmatprep.mubr.bf16.mxu0 0
        %1044 = vmatmul.mubr.bf16.gmra.mxu0 %v845
        %v1045 = vpop.f32.mrf.mxu0
        %v1046 = vadd.f32 0.0, %v1045
        %v1047 = vpop.f32.mrf.mxu0
        %v1048 = vpop.f32.mrf.mxu0
        %v1049 = vadd.f32 0.0, %v1048
        %v1050 = vpop.f32.mrf.mxu0
        %1051 = vmatprep.mubr.bf16.mxu0 0
        %1052 = vmatmul.mubr.bf16.gmra.mxu0 %v846
        %v1053 = vpop.f32.mrf.mxu0
        %v1054 = vadd.f32 0.0, %v1053
        %v1055 = vpop.f32.mrf.mxu0
        %v1056 = vpop.f32.mrf.mxu0
        %v1057 = vadd.f32 0.0, %v1056
        %v1058 = vpop.f32.mrf.mxu0
        %1059 = vmatprep.mubr.bf16.mxu0 0
        %1060 = vmatmul.mubr.bf16.gmra.mxu0 %v847
        %v1061 = vpop.f32.mrf.mxu0
        %v1062 = vadd.f32 0.0, %v1061
        %v1063 = vpop.f32.mrf.mxu0
        %v1064 = vpop.f32.mrf.mxu0
        %v1065 = vadd.f32 0.0, %v1064
        %v1066 = vpop.f32.mrf.mxu0
        %1067 = vmatprep.mubr.bf16.mxu0 0
        %1068 = vmatmul.mubr.bf16.gmra.mxu0 %v848
        %v1069 = vpop.f32.mrf.mxu0
        %v1070 = vadd.f32 0.0, %v1069
        %v1071 = vpop.f32.mrf.mxu0
        %v1072 = vpop.f32.mrf.mxu0
        %v1073 = vadd.f32 0.0, %v1072
        %v1074 = vpop.f32.mrf.mxu0
        %1075 = vmatprep.mubr.bf16.mxu0 0
        %1076 = vmatmul.mubr.bf16.gmra.mxu0 %v849
        %v1077 = vpop.f32.mrf.mxu0
        %v1078 = vadd.f32 0.0, %v1077
        %v1079 = vpop.f32.mrf.mxu0
        %v1080 = vpop.f32.mrf.mxu0
        %v1081 = vadd.f32 0.0, %v1080
        %v1082 = vpop.f32.mrf.mxu0
        %1083 = vmatprep.mubr.bf16.mxu0 0
        %1084 = vmatmul.mubr.bf16.gmra.mxu0 %v850
        %v1085 = vpop.f32.mrf.mxu0
        %v1086 = vadd.f32 0.0, %v1085
        %v1087 = vpop.f32.mrf.mxu0
        %v1088 = vpop.f32.mrf.mxu0
        %v1089 = vadd.f32 0.0, %v1088
        %v1090 = vpop.f32.mrf.mxu0
        %1091 = vmatprep.mubr.bf16.mxu0 0
        %1092 = vmatmul.mubr.bf16.gmra.mxu0 %v851
        %v1093 = vpop.f32.mrf.mxu0
        %v1094 = vadd.f32 0.0, %v1093
        %v1095 = vpop.f32.mrf.mxu0
        %v1096 = vpop.f32.mrf.mxu0
        %v1097 = vadd.f32 0.0, %v1096
        %v1098 = vpop.f32.mrf.mxu0
        %1099 = vmatprep.mubr.bf16.mxu0 0
        %1100 = vmatmul.mubr.bf16.gmra.mxu0 %v852
        %v1101 = vpop.f32.mrf.mxu0
        %v1102 = vadd.f32 0.0, %v1101
        %v1103 = vpop.f32.mrf.mxu0
        %v1104 = vpop.f32.mrf.mxu0
        %v1105 = vadd.f32 0.0, %v1104
        %v1106 = vpop.f32.mrf.mxu0
        %1107 = vmatprep.mubr.bf16.mxu0 0
        %1108 = vmatmul.mubr.bf16.gmra.mxu0 %v853
        %v1109 = vpop.f32.mrf.mxu0
        %v1110 = vadd.f32 0.0, %v1109
        %v1111 = vpop.f32.mrf.mxu0
        %v1112 = vpop.f32.mrf.mxu0
        %v1113 = vadd.f32 0.0, %v1112
        %v1114 = vpop.f32.mrf.mxu0
        %1115 = vmatprep.mubr.bf16.mxu0 0
        %1116 = vmatmul.mubr.bf16.gmra.mxu0 %v854
        %v1117 = vpop.f32.mrf.mxu0
        %v1118 = vadd.f32 0.0, %v1117
        %v1119 = vpop.f32.mrf.mxu0
        %v1120 = vpop.f32.mrf.mxu0
        %v1121 = vadd.f32 0.0, %v1120
        %v1122 = vpop.f32.mrf.mxu0
        %1123 = vmatprep.mubr.bf16.mxu0 0
        %1124 = vmatmul.mubr.bf16.gmra.mxu0 %v855
        %v1125 = vpop.f32.mrf.mxu0
        %v1126 = vadd.f32 0.0, %v1125
        %v1127 = vpop.f32.mrf.mxu0
        %v1128 = vpop.f32.mrf.mxu0
        %v1129 = vadd.f32 0.0, %v1128
        %v1130 = vpop.f32.mrf.mxu0
        %1131 = vmatprep.mubr.bf16.mxu0 0
        %1132 = vmatmul.mubr.bf16.gmra.mxu0 %v856
        %v1133 = vpop.f32.mrf.mxu0
        %v1134 = vadd.f32 0.0, %v1133
        %v1135 = vpop.f32.mrf.mxu0
        %v1136 = vpop.f32.mrf.mxu0
        %v1137 = vadd.f32 0.0, %v1136
        %v1138 = vpop.f32.mrf.mxu0
        %1139 = vmatprep.mubr.bf16.mxu0 0
        %1140 = vmatmul.mubr.bf16.gmra.mxu0 %v857
        %v1141 = vpop.f32.mrf.mxu0
        %v1142 = vadd.f32 0.0, %v1141
        %v1143 = vpop.f32.mrf.mxu0
        %v1144 = vpop.f32.mrf.mxu0
        %v1145 = vadd.f32 0.0, %v1144
        %v1146 = vpop.f32.mrf.mxu0
        %1147 = vmatprep.mubr.bf16.mxu0 0
        %1148 = vmatmul.mubr.bf16.gmra.mxu0 %v858
        %v1149 = vpop.f32.mrf.mxu0
        %v1150 = vadd.f32 0.0, %v1149
        %v1151 = vpop.f32.mrf.mxu0
        %v1152 = vpop.f32.mrf.mxu0
        %v1153 = vadd.f32 0.0, %v1152
        %v1154 = vpop.f32.mrf.mxu0
        %1155 = vdwg.mxu0
        %v1172 = vunpack.c.l.b16 %v915
        %v1173 = vunpack.c.l.b16 %v916
        %v1174 = vunpack.c.l.b16 %v917
        %v1175 = vunpack.c.l.b16 %v918
        %v1176 = vunpack.c.l.b16 %v919
        %v1177 = vunpack.c.l.b16 %v920
        %v1178 = vunpack.c.l.b16 %v921
        %v1179 = vunpack.c.l.b16 %v922
        %v1180 = vunpack.c.l.b16 %v923
        %v1181 = vunpack.c.l.b16 %v924
        %v1182 = vunpack.c.l.b16 %v925
        %v1183 = vunpack.c.l.b16 %v926
        %v1184 = vunpack.c.l.b16 %v927
        %v1185 = vunpack.c.l.b16 %v928
        %v1186 = vunpack.c.l.b16 %v929
        %v1187 = vunpack.c.l.b16 %v930
        %v1188 = vpack.c.b16 %v1173, %v1172
        %v1189 = vpack.c.b16 %v1175, %v1174
        %v1190 = vpack.c.b16 %v1177, %v1176
        %v1191 = vpack.c.b16 %v1179, %v1178
        %v1192 = vpack.c.b16 %v1181, %v1180
        %v1193 = vpack.c.b16 %v1183, %v1182
        %v1194 = vpack.c.b16 %v1185, %v1184
        %v1195 = vpack.c.b16 %v1187, %v1186
        %1204 = vmatprep.subr.bf16.mxu0 0
        %1205 = vmatpush1.bf16.msra.mxu0 %v1195
        %1206 = vmatprep.subr.bf16.mxu0 0
        %1207 = vmatpush1.bf16.msra.mxu0 %v1194
        %1208 = vmatprep.subr.bf16.mxu0 0
        %1209 = vmatpush1.bf16.msra.mxu0 %v1193
        %1210 = vmatprep.subr.bf16.mxu0 0
        %1211 = vmatpush1.bf16.msra.mxu0 %v1192
        %1212 = vmatprep.subr.bf16.mxu0 0
        %1213 = vmatpush1.bf16.msra.mxu0 %v1191
        %1214 = vmatprep.subr.bf16.mxu0 0
        %1215 = vmatpush1.bf16.msra.mxu0 %v1190
        %1216 = vmatprep.subr.bf16.mxu0 0
        %1217 = vmatpush1.bf16.msra.mxu0 %v1189
        %1218 = vmatprep.subr.bf16.mxu0 0
        %1219 = vmatpush1.bf16.msra.mxu0 %v1188
        %1220 = vmatprep.subr.bf16.mxu0 0
        %1221 = vmatpush2.bf16.msra.mxu0 0
        %1222 = vmatprep.subr.bf16.mxu0 0
        %1223 = vmatpush2.bf16.msra.mxu0 0
        %1224 = vmatprep.subr.bf16.mxu0 0
        %1225 = vmatpush2.bf16.msra.mxu0 0
        %1226 = vmatprep.subr.bf16.mxu0 0
        %1227 = vmatpush2.bf16.msra.mxu0 0
        %1228 = vmatprep.subr.bf16.mxu0 0
        %1229 = vmatpush2.bf16.msra.mxu0 0
        %1230 = vmatprep.subr.bf16.mxu0 0
        %1231 = vmatpush2.bf16.msra.mxu0 0
        %1232 = vmatprep.subr.bf16.mxu0 0
        %1233 = vmatpush2.bf16.msra.mxu0 0
        %1234 = vmatprep.subr.bf16.mxu0 0
        %1235 = vmatpush2.bf16.msra.mxu0 0
        %1236 = vmatprep.mubr.bf16.mxu0 0
        %1237 = vmatmul.mubr.bf16.gmra.mxu0 %v789
        %v1238 = vpop.f32.mrf.mxu0
        %v1239 = vadd.f32 %v1030, %v1238
        %v1240 = vpop.f32.mrf.mxu0
        %v1241 = vpop.f32.mrf.mxu0
        %v1242 = vadd.f32 %v1033, %v1241
        %v1243 = vpop.f32.mrf.mxu0
        %1244 = vmatprep.mubr.bf16.mxu0 0
        %1245 = vmatmul.mubr.bf16.gmra.mxu0 %v790
        %v1246 = vpop.f32.mrf.mxu0
        %v1247 = vadd.f32 %v1038, %v1246
        %v1248 = vpop.f32.mrf.mxu0
        %v1249 = vpop.f32.mrf.mxu0
        %v1250 = vadd.f32 %v1041, %v1249
        %v1251 = vpop.f32.mrf.mxu0
        %1252 = vmatprep.mubr.bf16.mxu0 0
        %1253 = vmatmul.mubr.bf16.gmra.mxu0 %v791
        %v1254 = vpop.f32.mrf.mxu0
        %v1255 = vadd.f32 %v1046, %v1254
        %v1256 = vpop.f32.mrf.mxu0
        %v1257 = vpop.f32.mrf.mxu0
        %v1258 = vadd.f32 %v1049, %v1257
        %v1259 = vpop.f32.mrf.mxu0
        %1260 = vmatprep.mubr.bf16.mxu0 0
        %1261 = vmatmul.mubr.bf16.gmra.mxu0 %v792
        %v1262 = vpop.f32.mrf.mxu0
        %v1263 = vadd.f32 %v1054, %v1262
        %v1264 = vpop.f32.mrf.mxu0
        %v1265 = vpop.f32.mrf.mxu0
        %v1266 = vadd.f32 %v1057, %v1265
        %v1267 = vpop.f32.mrf.mxu0
        %1268 = vmatprep.mubr.bf16.mxu0 0
        %1269 = vmatmul.mubr.bf16.gmra.mxu0 %v793
        %v1270 = vpop.f32.mrf.mxu0
        %v1271 = vadd.f32 %v1062, %v1270
        %v1272 = vpop.f32.mrf.mxu0
        %v1273 = vpop.f32.mrf.mxu0
        %v1274 = vadd.f32 %v1065, %v1273
        %v1275 = vpop.f32.mrf.mxu0
        %1276 = vmatprep.mubr.bf16.mxu0 0
        %1277 = vmatmul.mubr.bf16.gmra.mxu0 %v794
        %v1278 = vpop.f32.mrf.mxu0
        %v1279 = vadd.f32 %v1070, %v1278
        %v1280 = vpop.f32.mrf.mxu0
        %v1281 = vpop.f32.mrf.mxu0
        %v1282 = vadd.f32 %v1073, %v1281
        %v1283 = vpop.f32.mrf.mxu0
        %1284 = vmatprep.mubr.bf16.mxu0 0
        %1285 = vmatmul.mubr.bf16.gmra.mxu0 %v795
        %v1286 = vpop.f32.mrf.mxu0
        %v1287 = vadd.f32 %v1078, %v1286
        %v1288 = vpop.f32.mrf.mxu0
        %v1289 = vpop.f32.mrf.mxu0
        %v1290 = vadd.f32 %v1081, %v1289
        %v1291 = vpop.f32.mrf.mxu0
        %1292 = vmatprep.mubr.bf16.mxu0 0
        %1293 = vmatmul.mubr.bf16.gmra.mxu0 %v796
        %v1294 = vpop.f32.mrf.mxu0
        %v1295 = vadd.f32 %v1086, %v1294
        %v1296 = vpop.f32.mrf.mxu0
        %v1297 = vpop.f32.mrf.mxu0
        %v1298 = vadd.f32 %v1089, %v1297
        %v1299 = vpop.f32.mrf.mxu0
        %1300 = vmatprep.mubr.bf16.mxu0 0
        %1301 = vmatmul.mubr.bf16.gmra.mxu0 %v797
        %v1302 = vpop.f32.mrf.mxu0
        %v1303 = vadd.f32 %v1094, %v1302
        %v1304 = vpop.f32.mrf.mxu0
        %v1305 = vpop.f32.mrf.mxu0
        %v1306 = vadd.f32 %v1097, %v1305
        %v1307 = vpop.f32.mrf.mxu0
        %1308 = vmatprep.mubr.bf16.mxu0 0
        %1309 = vmatmul.mubr.bf16.gmra.mxu0 %v798
        %v1310 = vpop.f32.mrf.mxu0
        %v1311 = vadd.f32 %v1102, %v1310
        %v1312 = vpop.f32.mrf.mxu0
        %v1313 = vpop.f32.mrf.mxu0
        %v1314 = vadd.f32 %v1105, %v1313
        %v1315 = vpop.f32.mrf.mxu0
        %1316 = vmatprep.mubr.bf16.mxu0 0
        %1317 = vmatmul.mubr.bf16.gmra.mxu0 %v799
        %v1318 = vpop.f32.mrf.mxu0
        %v1319 = vadd.f32 %v1110, %v1318
        %v1320 = vpop.f32.mrf.mxu0
        %v1321 = vpop.f32.mrf.mxu0
        %v1322 = vadd.f32 %v1113, %v1321
        %v1323 = vpop.f32.mrf.mxu0
        %1324 = vmatprep.mubr.bf16.mxu0 0
        %1325 = vmatmul.mubr.bf16.gmra.mxu0 %v800
        %v1326 = vpop.f32.mrf.mxu0
        %v1327 = vadd.f32 %v1118, %v1326
        %v1328 = vpop.f32.mrf.mxu0
        %v1329 = vpop.f32.mrf.mxu0
        %v1330 = vadd.f32 %v1121, %v1329
        %v1331 = vpop.f32.mrf.mxu0
        %1332 = vmatprep.mubr.bf16.mxu0 0
        %1333 = vmatmul.mubr.bf16.gmra.mxu0 %v801
        %v1334 = vpop.f32.mrf.mxu0
        %v1335 = vadd.f32 %v1126, %v1334
        %v1336 = vpop.f32.mrf.mxu0
        %v1337 = vpop.f32.mrf.mxu0
        %v1338 = vadd.f32 %v1129, %v1337
        %v1339 = vpop.f32.mrf.mxu0
        %1340 = vmatprep.mubr.bf16.mxu0 0
        %1341 = vmatmul.mubr.bf16.gmra.mxu0 %v802
        %v1342 = vpop.f32.mrf.mxu0
        %v1343 = vadd.f32 %v1134, %v1342
        %v1344 = vpop.f32.mrf.mxu0
        %v1345 = vpop.f32.mrf.mxu0
        %v1346 = vadd.f32 %v1137, %v1345
        %v1347 = vpop.f32.mrf.mxu0
        %1348 = vmatprep.mubr.bf16.mxu0 0
        %1349 = vmatmul.mubr.bf16.gmra.mxu0 %v803
        %v1350 = vpop.f32.mrf.mxu0
        %v1351 = vadd.f32 %v1142, %v1350
        %v1352 = vpop.f32.mrf.mxu0
        %v1353 = vpop.f32.mrf.mxu0
        %v1354 = vadd.f32 %v1145, %v1353
        %v1355 = vpop.f32.mrf.mxu0
        %1356 = vmatprep.mubr.bf16.mxu0 0
        %1357 = vmatmul.mubr.bf16.gmra.mxu0 %v804
        %v1358 = vpop.f32.mrf.mxu0
        %v1359 = vadd.f32 %v1150, %v1358
        %v1360 = vpop.f32.mrf.mxu0
        %v1361 = vpop.f32.mrf.mxu0
        %v1362 = vadd.f32 %v1153, %v1361
        %v1363 = vpop.f32.mrf.mxu0
        %1364 = vdwg.mxu0
        %v1365 = vld [vmem:[%s264 + $0x80] sm:$0xf]
        %v1366 = vld [vmem:[%s264 + $0x84] sm:$0xf]
        %v1367 = vld [vmem:[%s264 + $0x88] sm:$0xf]
        %v1368 = vld [vmem:[%s264 + $0x8c] sm:$0xf]
        %v1369 = vld [vmem:[%s264 + $0x90] sm:$0xf]
        %v1370 = vld [vmem:[%s264 + $0x94] sm:$0xf]
        %v1371 = vld [vmem:[%s264 + $0x98] sm:$0xf]
        %v1372 = vld [vmem:[%s264 + $0x9c] sm:$0xf]
        %v1373 = vld [vmem:[%s264 + $0xa0] sm:$0xf]
        %v1374 = vld [vmem:[%s264 + $0xa4] sm:$0xf]
        %v1375 = vld [vmem:[%s264 + $0xa8] sm:$0xf]
        %v1376 = vld [vmem:[%s264 + $0xac] sm:$0xf]
        %v1377 = vld [vmem:[%s264 + $0xb0] sm:$0xf]
        %v1378 = vld [vmem:[%s264 + $0xb4] sm:$0xf]
        %v1379 = vld [vmem:[%s264 + $0xb8] sm:$0xf]
        %v1380 = vld [vmem:[%s264 + $0xbc] sm:$0xf]
        %v1397 = vunpack.c.l.b16 %v1365
        %v1398 = vunpack.c.l.b16 %v1366
        %v1399 = vunpack.c.l.b16 %v1367
        %v1400 = vunpack.c.l.b16 %v1368
        %v1401 = vunpack.c.l.b16 %v1369
        %v1402 = vunpack.c.l.b16 %v1370
        %v1403 = vunpack.c.l.b16 %v1371
        %v1404 = vunpack.c.l.b16 %v1372
        %v1405 = vunpack.c.l.b16 %v1373
        %v1406 = vunpack.c.l.b16 %v1374
        %v1407 = vunpack.c.l.b16 %v1375
        %v1408 = vunpack.c.l.b16 %v1376
        %v1409 = vunpack.c.l.b16 %v1377
        %v1410 = vunpack.c.l.b16 %v1378
        %v1411 = vunpack.c.l.b16 %v1379
        %v1412 = vunpack.c.l.b16 %v1380
        %v1413 = vpack.c.b16 %v1398, %v1397
        %v1414 = vpack.c.b16 %v1400, %v1399
        %v1415 = vpack.c.b16 %v1402, %v1401
        %v1416 = vpack.c.b16 %v1404, %v1403
        %v1417 = vpack.c.b16 %v1406, %v1405
        %v1418 = vpack.c.b16 %v1408, %v1407
        %v1419 = vpack.c.b16 %v1410, %v1409
        %v1420 = vpack.c.b16 %v1412, %v1411
        %1429 = vmatprep.subr.bf16.mxu0 0
        %1430 = vmatpush1.bf16.msra.mxu0 %v1420
        %1431 = vmatprep.subr.bf16.mxu0 0
        %1432 = vmatpush1.bf16.msra.mxu0 %v1419
        %1433 = vmatprep.subr.bf16.mxu0 0
        %1434 = vmatpush1.bf16.msra.mxu0 %v1418
        %1435 = vmatprep.subr.bf16.mxu0 0
        %1436 = vmatpush1.bf16.msra.mxu0 %v1417
        %1437 = vmatprep.subr.bf16.mxu0 0
        %1438 = vmatpush1.bf16.msra.mxu0 %v1416
        %1439 = vmatprep.subr.bf16.mxu0 0
        %1440 = vmatpush1.bf16.msra.mxu0 %v1415
        %1441 = vmatprep.subr.bf16.mxu0 0
        %1442 = vmatpush1.bf16.msra.mxu0 %v1414
        %1443 = vmatprep.subr.bf16.mxu0 0
        %1444 = vmatpush1.bf16.msra.mxu0 %v1413
        %1445 = vmatprep.subr.bf16.mxu0 0
        %1446 = vmatpush2.bf16.msra.mxu0 0
        %1447 = vmatprep.subr.bf16.mxu0 0
        %1448 = vmatpush2.bf16.msra.mxu0 0
        %1449 = vmatprep.subr.bf16.mxu0 0
        %1450 = vmatpush2.bf16.msra.mxu0 0
        %1451 = vmatprep.subr.bf16.mxu0 0
        %1452 = vmatpush2.bf16.msra.mxu0 0
        %1453 = vmatprep.subr.bf16.mxu0 0
        %1454 = vmatpush2.bf16.msra.mxu0 0
        %1455 = vmatprep.subr.bf16.mxu0 0
        %1456 = vmatpush2.bf16.msra.mxu0 0
        %1457 = vmatprep.subr.bf16.mxu0 0
        %1458 = vmatpush2.bf16.msra.mxu0 0
        %1459 = vmatprep.subr.bf16.mxu0 0
        %1460 = vmatpush2.bf16.msra.mxu0 0
        %1461 = vmatprep.mubr.bf16.mxu0 0
        %1462 = vmatmul.mubr.bf16.gmra.mxu0 %v897
        %v1463 = vpop.f32.mrf.mxu0
        %v1464 = vadd.f32 0.0, %v1463
        %v1465 = vpop.f32.mrf.mxu0
        %v1466 = vpop.f32.mrf.mxu0
        %v1467 = vadd.f32 0.0, %v1466
        %v1468 = vpop.f32.mrf.mxu0
        %1469 = vmatprep.mubr.bf16.mxu0 0
        %1470 = vmatmul.mubr.bf16.gmra.mxu0 %v898
        %v1471 = vpop.f32.mrf.mxu0
        %v1472 = vadd.f32 0.0, %v1471
        %v1473 = vpop.f32.mrf.mxu0
        %v1474 = vpop.f32.mrf.mxu0
        %v1475 = vadd.f32 0.0, %v1474
        %v1476 = vpop.f32.mrf.mxu0
        %1477 = vmatprep.mubr.bf16.mxu0 0
        %1478 = vmatmul.mubr.bf16.gmra.mxu0 %v899
        %v1479 = vpop.f32.mrf.mxu0
        %v1480 = vadd.f32 0.0, %v1479
        %v1481 = vpop.f32.mrf.mxu0
        %v1482 = vpop.f32.mrf.mxu0
        %v1483 = vadd.f32 0.0, %v1482
        %v1484 = vpop.f32.mrf.mxu0
        %1485 = vmatprep.mubr.bf16.mxu0 0
        %1486 = vmatmul.mubr.bf16.gmra.mxu0 %v900
        %v1487 = vpop.f32.mrf.mxu0
        %v1488 = vadd.f32 0.0, %v1487
        %v1489 = vpop.f32.mrf.mxu0
        %v1490 = vpop.f32.mrf.mxu0
        %v1491 = vadd.f32 0.0, %v1490
        %v1492 = vpop.f32.mrf.mxu0
        %1493 = vmatprep.mubr.bf16.mxu0 0
        %1494 = vmatmul.mubr.bf16.gmra.mxu0 %v901
        %v1495 = vpop.f32.mrf.mxu0
        %v1496 = vadd.f32 0.0, %v1495
        %v1497 = vpop.f32.mrf.mxu0
        %v1498 = vpop.f32.mrf.mxu0
        %v1499 = vadd.f32 0.0, %v1498
        %v1500 = vpop.f32.mrf.mxu0
        %1501 = vmatprep.mubr.bf16.mxu0 0
        %1502 = vmatmul.mubr.bf16.gmra.mxu0 %v902
        %v1503 = vpop.f32.mrf.mxu0
        %v1504 = vadd.f32 0.0, %v1503
        %v1505 = vpop.f32.mrf.mxu0
        %v1506 = vpop.f32.mrf.mxu0
        %v1507 = vadd.f32 0.0, %v1506
        %v1508 = vpop.f32.mrf.mxu0
        %1509 = vmatprep.mubr.bf16.mxu0 0
        %1510 = vmatmul.mubr.bf16.gmra.mxu0 %v903
        %v1511 = vpop.f32.mrf.mxu0
        %v1512 = vadd.f32 0.0, %v1511
        %v1513 = vpop.f32.mrf.mxu0
        %v1514 = vpop.f32.mrf.mxu0
        %v1515 = vadd.f32 0.0, %v1514
        %v1516 = vpop.f32.mrf.mxu0
        %1517 = vmatprep.mubr.bf16.mxu0 0
        %1518 = vmatmul.mubr.bf16.gmra.mxu0 %v904
        %v1519 = vpop.f32.mrf.mxu0
        %v1520 = vadd.f32 0.0, %v1519
        %v1521 = vpop.f32.mrf.mxu0
        %v1522 = vpop.f32.mrf.mxu0
        %v1523 = vadd.f32 0.0, %v1522
        %v1524 = vpop.f32.mrf.mxu0
        %1525 = vmatprep.mubr.bf16.mxu0 0
        %1526 = vmatmul.mubr.bf16.gmra.mxu0 %v905
        %v1527 = vpop.f32.mrf.mxu0
        %v1528 = vadd.f32 0.0, %v1527
        %v1529 = vpop.f32.mrf.mxu0
        %v1530 = vpop.f32.mrf.mxu0
        %v1531 = vadd.f32 0.0, %v1530
        %v1532 = vpop.f32.mrf.mxu0
        %1533 = vmatprep.mubr.bf16.mxu0 0
        %1534 = vmatmul.mubr.bf16.gmra.mxu0 %v906
        %v1535 = vpop.f32.mrf.mxu0
        %v1536 = vadd.f32 0.0, %v1535
        %v1537 = vpop.f32.mrf.mxu0
        %v1538 = vpop.f32.mrf.mxu0
        %v1539 = vadd.f32 0.0, %v1538
        %v1540 = vpop.f32.mrf.mxu0
        %1541 = vmatprep.mubr.bf16.mxu0 0
        %1542 = vmatmul.mubr.bf16.gmra.mxu0 %v907
        %v1543 = vpop.f32.mrf.mxu0
        %v1544 = vadd.f32 0.0, %v1543
        %v1545 = vpop.f32.mrf.mxu0
        %v1546 = vpop.f32.mrf.mxu0
        %v1547 = vadd.f32 0.0, %v1546
        %v1548 = vpop.f32.mrf.mxu0
        %1549 = vmatprep.mubr.bf16.mxu0 0
        %1550 = vmatmul.mubr.bf16.gmra.mxu0 %v908
        %v1551 = vpop.f32.mrf.mxu0
        %v1552 = vadd.f32 0.0, %v1551
        %v1553 = vpop.f32.mrf.mxu0
        %v1554 = vpop.f32.mrf.mxu0
        %v1555 = vadd.f32 0.0, %v1554
        %v1556 = vpop.f32.mrf.mxu0
        %1557 = vmatprep.mubr.bf16.mxu0 0
        %1558 = vmatmul.mubr.bf16.gmra.mxu0 %v909
        %v1559 = vpop.f32.mrf.mxu0
        %v1560 = vadd.f32 0.0, %v1559
        %v1561 = vpop.f32.mrf.mxu0
        %v1562 = vpop.f32.mrf.mxu0
        %v1563 = vadd.f32 0.0, %v1562
        %v1564 = vpop.f32.mrf.mxu0
        %1565 = vmatprep.mubr.bf16.mxu0 0
        %1566 = vmatmul.mubr.bf16.gmra.mxu0 %v910
        %v1567 = vpop.f32.mrf.mxu0
        %v1568 = vadd.f32 0.0, %v1567
        %v1569 = vpop.f32.mrf.mxu0
        %v1570 = vpop.f32.mrf.mxu0
        %v1571 = vadd.f32 0.0, %v1570
        %v1572 = vpop.f32.mrf.mxu0
        %1573 = vmatprep.mubr.bf16.mxu0 0
        %1574 = vmatmul.mubr.bf16.gmra.mxu0 %v911
        %v1575 = vpop.f32.mrf.mxu0
        %v1576 = vadd.f32 0.0, %v1575
        %v1577 = vpop.f32.mrf.mxu0
        %v1578 = vpop.f32.mrf.mxu0
        %v1579 = vadd.f32 0.0, %v1578
        %v1580 = vpop.f32.mrf.mxu0
        %1581 = vmatprep.mubr.bf16.mxu0 0
        %1582 = vmatmul.mubr.bf16.gmra.mxu0 %v912
        %v1583 = vpop.f32.mrf.mxu0
        %v1584 = vadd.f32 0.0, %v1583
        %v1585 = vpop.f32.mrf.mxu0
        %v1586 = vpop.f32.mrf.mxu0
        %v1587 = vadd.f32 0.0, %v1586
        %v1588 = vpop.f32.mrf.mxu0
        %1589 = vdwg.mxu0
        %v1590 = vadd.f32 %v1239, %v1464
        %v1591 = vadd.f32 %v1242, %v1467
        %v1592 = vadd.f32 %v1247, %v1472
        %v1593 = vadd.f32 %v1250, %v1475
        %v1594 = vadd.f32 %v1255, %v1480
        %v1595 = vadd.f32 %v1258, %v1483
        %v1596 = vadd.f32 %v1263, %v1488
        %v1597 = vadd.f32 %v1266, %v1491
        %v1598 = vadd.f32 %v1271, %v1496
        %v1599 = vadd.f32 %v1274, %v1499
        %v1600 = vadd.f32 %v1279, %v1504
        %v1601 = vadd.f32 %v1282, %v1507
        %v1602 = vadd.f32 %v1287, %v1512
        %v1603 = vadd.f32 %v1290, %v1515
        %v1604 = vadd.f32 %v1295, %v1520
        %v1605 = vadd.f32 %v1298, %v1523
        %v1606 = vadd.f32 %v1303, %v1528
        %v1607 = vadd.f32 %v1306, %v1531
        %v1608 = vadd.f32 %v1311, %v1536
        %v1609 = vadd.f32 %v1314, %v1539
        %v1610 = vadd.f32 %v1319, %v1544
        %v1611 = vadd.f32 %v1322, %v1547
        %v1612 = vadd.f32 %v1327, %v1552
        %v1613 = vadd.f32 %v1330, %v1555
        %v1614 = vadd.f32 %v1335, %v1560
        %v1615 = vadd.f32 %v1338, %v1563
        %v1616 = vadd.f32 %v1343, %v1568
        %v1617 = vadd.f32 %v1346, %v1571
        %v1618 = vadd.f32 %v1351, %v1576
        %v1619 = vadd.f32 %v1354, %v1579
        %v1620 = vadd.f32 %v1359, %v1584
        %v1621 = vadd.f32 %v1362, %v1587
        %s1622 = scalar_lea.vmem %s264, 192 [#allocation4]
        %v1623 = vld [vmem:[%s1622] sm:$0xf]
        %v1624 = vld [vmem:[%s1622 + $0x4] sm:$0xf]
        %v1625 = vld [vmem:[%s1622 + $0x8] sm:$0xf]
        %v1626 = vld [vmem:[%s1622 + $0xc] sm:$0xf]
        %v1627 = vld [vmem:[%s1622 + $0x10] sm:$0xf]
        %v1628 = vld [vmem:[%s1622 + $0x14] sm:$0xf]
        %v1629 = vld [vmem:[%s1622 + $0x18] sm:$0xf]
        %v1630 = vld [vmem:[%s1622 + $0x1c] sm:$0xf]
        %v1631 = vld [vmem:[%s1622 + $0x20] sm:$0xf]
        %v1632 = vld [vmem:[%s1622 + $0x24] sm:$0xf]
        %v1633 = vld [vmem:[%s1622 + $0x28] sm:$0xf]
        %v1634 = vld [vmem:[%s1622 + $0x2c] sm:$0xf]
        %v1635 = vld [vmem:[%s1622 + $0x30] sm:$0xf]
        %v1636 = vld [vmem:[%s1622 + $0x34] sm:$0xf]
        %v1637 = vld [vmem:[%s1622 + $0x38] sm:$0xf]
        %v1638 = vld [vmem:[%s1622 + $0x3c] sm:$0xf]
        %v1655 = vunpack.c.l.b16 %v1623
        %v1656 = vunpack.c.l.b16 %v1624
        %v1657 = vunpack.c.l.b16 %v1625
        %v1658 = vunpack.c.l.b16 %v1626
        %v1659 = vunpack.c.l.b16 %v1627
        %v1660 = vunpack.c.l.b16 %v1628
        %v1661 = vunpack.c.l.b16 %v1629
        %v1662 = vunpack.c.l.b16 %v1630
        %v1663 = vunpack.c.l.b16 %v1631
        %v1664 = vunpack.c.l.b16 %v1632
        %v1665 = vunpack.c.l.b16 %v1633
        %v1666 = vunpack.c.l.b16 %v1634
        %v1667 = vunpack.c.l.b16 %v1635
        %v1668 = vunpack.c.l.b16 %v1636
        %v1669 = vunpack.c.l.b16 %v1637
        %v1670 = vunpack.c.l.b16 %v1638
        %v1671 = vpack.c.b16 %v1656, %v1655
        %v1672 = vpack.c.b16 %v1658, %v1657
        %v1673 = vpack.c.b16 %v1660, %v1659
        %v1674 = vpack.c.b16 %v1662, %v1661
        %v1675 = vpack.c.b16 %v1664, %v1663
        %v1676 = vpack.c.b16 %v1666, %v1665
        %v1677 = vpack.c.b16 %v1668, %v1667
        %v1678 = vpack.c.b16 %v1670, %v1669
        %1687 = vmatprep.subr.bf16.mxu0 0
        %1688 = vmatpush1.bf16.msra.mxu0 %v1678
        %1689 = vmatprep.subr.bf16.mxu0 0
        %1690 = vmatpush1.bf16.msra.mxu0 %v1677
        %1691 = vmatprep.subr.bf16.mxu0 0
        %1692 = vmatpush1.bf16.msra.mxu0 %v1676
        %1693 = vmatprep.subr.bf16.mxu0 0
        %1694 = vmatpush1.bf16.msra.mxu0 %v1675
        %1695 = vmatprep.subr.bf16.mxu0 0
        %1696 = vmatpush1.bf16.msra.mxu0 %v1674
        %1697 = vmatprep.subr.bf16.mxu0 0
        %1698 = vmatpush1.bf16.msra.mxu0 %v1673
        %1699 = vmatprep.subr.bf16.mxu0 0
        %1700 = vmatpush1.bf16.msra.mxu0 %v1672
        %1701 = vmatprep.subr.bf16.mxu0 0
        %1702 = vmatpush1.bf16.msra.mxu0 %v1671
        %1703 = vmatprep.subr.bf16.mxu0 0
        %1704 = vmatpush2.bf16.msra.mxu0 0
        %1705 = vmatprep.subr.bf16.mxu0 0
        %1706 = vmatpush2.bf16.msra.mxu0 0
        %1707 = vmatprep.subr.bf16.mxu0 0
        %1708 = vmatpush2.bf16.msra.mxu0 0
        %1709 = vmatprep.subr.bf16.mxu0 0
        %1710 = vmatpush2.bf16.msra.mxu0 0
        %1711 = vmatprep.subr.bf16.mxu0 0
        %1712 = vmatpush2.bf16.msra.mxu0 0
        %1713 = vmatprep.subr.bf16.mxu0 0
        %1714 = vmatpush2.bf16.msra.mxu0 0
        %1715 = vmatprep.subr.bf16.mxu0 0
        %1716 = vmatpush2.bf16.msra.mxu0 0
        %1717 = vmatprep.subr.bf16.mxu0 0
        %1718 = vmatpush2.bf16.msra.mxu0 0
        %1719 = vmatprep.mubr.bf16.mxu0 0
        %1720 = vmatmul.mubr.bf16.gmra.mxu0 %v790
        %v1721 = vpop.f32.mrf.mxu0
        %v1722 = vadd.f32 0.0, %v1721
        %v1723 = vpop.f32.mrf.mxu0
        %v1724 = vpop.f32.mrf.mxu0
        %v1725 = vadd.f32 0.0, %v1724
        %v1726 = vpop.f32.mrf.mxu0
        %1727 = vmatprep.mubr.bf16.mxu0 0
        %1728 = vmatmul.mubr.bf16.gmra.mxu0 %v791
        %v1729 = vpop.f32.mrf.mxu0
        %v1730 = vadd.f32 0.0, %v1729
        %v1731 = vpop.f32.mrf.mxu0
        %v1732 = vpop.f32.mrf.mxu0
        %v1733 = vadd.f32 0.0, %v1732
        %v1734 = vpop.f32.mrf.mxu0
        %1735 = vmatprep.mubr.bf16.mxu0 0
        %1736 = vmatmul.mubr.bf16.gmra.mxu0 %v792
        %v1737 = vpop.f32.mrf.mxu0
        %v1738 = vadd.f32 0.0, %v1737
        %v1739 = vpop.f32.mrf.mxu0
        %v1740 = vpop.f32.mrf.mxu0
        %v1741 = vadd.f32 0.0, %v1740
        %v1742 = vpop.f32.mrf.mxu0
        %1743 = vmatprep.mubr.bf16.mxu0 0
        %1744 = vmatmul.mubr.bf16.gmra.mxu0 %v793
        %v1745 = vpop.f32.mrf.mxu0
        %v1746 = vadd.f32 0.0, %v1745
        %v1747 = vpop.f32.mrf.mxu0
        %v1748 = vpop.f32.mrf.mxu0
        %v1749 = vadd.f32 0.0, %v1748
        %v1750 = vpop.f32.mrf.mxu0
        %1751 = vmatprep.mubr.bf16.mxu0 0
        %1752 = vmatmul.mubr.bf16.gmra.mxu0 %v794
        %v1753 = vpop.f32.mrf.mxu0
        %v1754 = vadd.f32 0.0, %v1753
        %v1755 = vpop.f32.mrf.mxu0
        %v1756 = vpop.f32.mrf.mxu0
        %v1757 = vadd.f32 0.0, %v1756
        %v1758 = vpop.f32.mrf.mxu0
        %1759 = vmatprep.mubr.bf16.mxu0 0
        %1760 = vmatmul.mubr.bf16.gmra.mxu0 %v795
        %v1761 = vpop.f32.mrf.mxu0
        %v1762 = vadd.f32 0.0, %v1761
        %v1763 = vpop.f32.mrf.mxu0
        %v1764 = vpop.f32.mrf.mxu0
        %v1765 = vadd.f32 0.0, %v1764
        %v1766 = vpop.f32.mrf.mxu0
        %1767 = vmatprep.mubr.bf16.mxu0 0
        %1768 = vmatmul.mubr.bf16.gmra.mxu0 %v796
        %v1769 = vpop.f32.mrf.mxu0
        %v1770 = vadd.f32 0.0, %v1769
        %v1771 = vpop.f32.mrf.mxu0
        %v1772 = vpop.f32.mrf.mxu0
        %v1773 = vadd.f32 0.0, %v1772
        %v1774 = vpop.f32.mrf.mxu0
        %1775 = vmatprep.mubr.bf16.mxu0 0
        %1776 = vmatmul.mubr.bf16.gmra.mxu0 %v797
        %v1777 = vpop.f32.mrf.mxu0
        %v1778 = vadd.f32 0.0, %v1777
        %v1779 = vpop.f32.mrf.mxu0
        %v1780 = vpop.f32.mrf.mxu0
        %v1781 = vadd.f32 0.0, %v1780
        %v1782 = vpop.f32.mrf.mxu0
        %1783 = vmatprep.mubr.bf16.mxu0 0
        %1784 = vmatmul.mubr.bf16.gmra.mxu0 %v798
        %v1785 = vpop.f32.mrf.mxu0
        %v1786 = vadd.f32 0.0, %v1785
        %v1787 = vpop.f32.mrf.mxu0
        %v1788 = vpop.f32.mrf.mxu0
        %v1789 = vadd.f32 0.0, %v1788
        %v1790 = vpop.f32.mrf.mxu0
        %1791 = vmatprep.mubr.bf16.mxu0 0
        %1792 = vmatmul.mubr.bf16.gmra.mxu0 %v799
        %v1793 = vpop.f32.mrf.mxu0
        %v1794 = vadd.f32 0.0, %v1793
        %v1795 = vpop.f32.mrf.mxu0
        %v1796 = vpop.f32.mrf.mxu0
        %v1797 = vadd.f32 0.0, %v1796
        %v1798 = vpop.f32.mrf.mxu0
        %1799 = vmatprep.mubr.bf16.mxu0 0
        %1800 = vmatmul.mubr.bf16.gmra.mxu0 %v800
        %v1801 = vpop.f32.mrf.mxu0
        %v1802 = vadd.f32 0.0, %v1801
        %v1803 = vpop.f32.mrf.mxu0
        %v1804 = vpop.f32.mrf.mxu0
        %v1805 = vadd.f32 0.0, %v1804
        %v1806 = vpop.f32.mrf.mxu0
        %1807 = vmatprep.mubr.bf16.mxu0 0
        %1808 = vmatmul.mubr.bf16.gmra.mxu0 %v801
        %v1809 = vpop.f32.mrf.mxu0
        %v1810 = vadd.f32 0.0, %v1809
        %v1811 = vpop.f32.mrf.mxu0
        %v1812 = vpop.f32.mrf.mxu0
        %v1813 = vadd.f32 0.0, %v1812
        %v1814 = vpop.f32.mrf.mxu0
        %1815 = vmatprep.mubr.bf16.mxu0 0
        %1816 = vmatmul.mubr.bf16.gmra.mxu0 %v802
        %v1817 = vpop.f32.mrf.mxu0
        %v1818 = vadd.f32 0.0, %v1817
        %v1819 = vpop.f32.mrf.mxu0
        %v1820 = vpop.f32.mrf.mxu0
        %v1821 = vadd.f32 0.0, %v1820
        %v1822 = vpop.f32.mrf.mxu0
        %1823 = vmatprep.mubr.bf16.mxu0 0
        %1824 = vmatmul.mubr.bf16.gmra.mxu0 %v803
        %v1825 = vpop.f32.mrf.mxu0
        %v1826 = vadd.f32 0.0, %v1825
        %v1827 = vpop.f32.mrf.mxu0
        %v1828 = vpop.f32.mrf.mxu0
        %v1829 = vadd.f32 0.0, %v1828
        %v1830 = vpop.f32.mrf.mxu0
        %1831 = vmatprep.mubr.bf16.mxu0 0
        %1832 = vmatmul.mubr.bf16.gmra.mxu0 %v804
        %v1833 = vpop.f32.mrf.mxu0
        %v1834 = vadd.f32 0.0, %v1833
        %v1835 = vpop.f32.mrf.mxu0
        %v1836 = vpop.f32.mrf.mxu0
        %v1837 = vadd.f32 0.0, %v1836
        %v1838 = vpop.f32.mrf.mxu0
        %1839 = vmatprep.mubr.bf16.mxu0 0
        %1840 = vmatmul.mubr.bf16.gmra.mxu0 %v805
        %v1841 = vpop.f32.mrf.mxu0
        %v1842 = vadd.f32 0.0, %v1841
        %v1843 = vpop.f32.mrf.mxu0
        %v1844 = vpop.f32.mrf.mxu0
        %v1845 = vadd.f32 0.0, %v1844
        %v1846 = vpop.f32.mrf.mxu0
        %1847 = vdwg.mxu0
        %v1848 = vadd.f32 %v1590, %v1722
        %v1849 = vadd.f32 %v1591, %v1725
        %v1850 = vadd.f32 %v1592, %v1730
        %v1851 = vadd.f32 %v1593, %v1733
        %v1852 = vadd.f32 %v1594, %v1738
        %v1853 = vadd.f32 %v1595, %v1741
        %v1854 = vadd.f32 %v1596, %v1746
        %v1855 = vadd.f32 %v1597, %v1749
        %v1856 = vadd.f32 %v1598, %v1754
        %v1857 = vadd.f32 %v1599, %v1757
        %v1858 = vadd.f32 %v1600, %v1762
        %v1859 = vadd.f32 %v1601, %v1765
        %v1860 = vadd.f32 %v1602, %v1770
        %v1861 = vadd.f32 %v1603, %v1773
        %v1862 = vadd.f32 %v1604, %v1778
        %v1863 = vadd.f32 %v1605, %v1781
        %v1864 = vadd.f32 %v1606, %v1786
        %v1865 = vadd.f32 %v1607, %v1789
        %v1866 = vadd.f32 %v1608, %v1794
        %v1867 = vadd.f32 %v1609, %v1797
        %v1868 = vadd.f32 %v1610, %v1802
        %v1869 = vadd.f32 %v1611, %v1805
        %v1870 = vadd.f32 %v1612, %v1810
        %v1871 = vadd.f32 %v1613, %v1813
        %v1872 = vadd.f32 %v1614, %v1818
        %v1873 = vadd.f32 %v1615, %v1821
        %v1874 = vadd.f32 %v1616, %v1826
        %v1875 = vadd.f32 %v1617, %v1829
        %v1876 = vadd.f32 %v1618, %v1834
        %v1877 = vadd.f32 %v1619, %v1837
        %v1878 = vadd.f32 %v1620, %v1842
        %v1879 = vadd.f32 %v1621, %v1845
        %v1880 = vld [vmem:[%s1622 + $0x40] sm:$0xf]
        %v1881 = vld [vmem:[%s1622 + $0x44] sm:$0xf]
        %v1882 = vld [vmem:[%s1622 + $0x48] sm:$0xf]
        %v1883 = vld [vmem:[%s1622 + $0x4c] sm:$0xf]
        %v1884 = vld [vmem:[%s1622 + $0x50] sm:$0xf]
        %v1885 = vld [vmem:[%s1622 + $0x54] sm:$0xf]
        %v1886 = vld [vmem:[%s1622 + $0x58] sm:$0xf]
        %v1887 = vld [vmem:[%s1622 + $0x5c] sm:$0xf]
        %v1888 = vld [vmem:[%s1622 + $0x60] sm:$0xf]
        %v1889 = vld [vmem:[%s1622 + $0x64] sm:$0xf]
        %v1890 = vld [vmem:[%s1622 + $0x68] sm:$0xf]
        %v1891 = vld [vmem:[%s1622 + $0x6c] sm:$0xf]
        %v1892 = vld [vmem:[%s1622 + $0x70] sm:$0xf]
        %v1893 = vld [vmem:[%s1622 + $0x74] sm:$0xf]
        %v1894 = vld [vmem:[%s1622 + $0x78] sm:$0xf]
        %v1895 = vld [vmem:[%s1622 + $0x7c] sm:$0xf]
        %v1912 = vunpack.c.l.b16 %v1880
        %v1913 = vunpack.c.l.b16 %v1881
        %v1914 = vunpack.c.l.b16 %v1882
        %v1915 = vunpack.c.l.b16 %v1883
        %v1916 = vunpack.c.l.b16 %v1884
        %v1917 = vunpack.c.l.b16 %v1885
        %v1918 = vunpack.c.l.b16 %v1886
        %v1919 = vunpack.c.l.b16 %v1887
        %v1920 = vunpack.c.l.b16 %v1888
        %v1921 = vunpack.c.l.b16 %v1889
        %v1922 = vunpack.c.l.b16 %v1890
        %v1923 = vunpack.c.l.b16 %v1891
        %v1924 = vunpack.c.l.b16 %v1892
        %v1925 = vunpack.c.l.b16 %v1893
        %v1926 = vunpack.c.l.b16 %v1894
        %v1927 = vunpack.c.l.b16 %v1895
        %v1928 = vpack.c.b16 %v1913, %v1912
        %v1929 = vpack.c.b16 %v1915, %v1914
        %v1930 = vpack.c.b16 %v1917, %v1916
        %v1931 = vpack.c.b16 %v1919, %v1918
        %v1932 = vpack.c.b16 %v1921, %v1920
        %v1933 = vpack.c.b16 %v1923, %v1922
        %v1934 = vpack.c.b16 %v1925, %v1924
        %v1935 = vpack.c.b16 %v1927, %v1926
        %1944 = vmatprep.subr.bf16.mxu0 0
        %1945 = vmatpush1.bf16.msra.mxu0 %v1935
        %1946 = vmatprep.subr.bf16.mxu0 0
        %1947 = vmatpush1.bf16.msra.mxu0 %v1934
        %1948 = vmatprep.subr.bf16.mxu0 0
        %1949 = vmatpush1.bf16.msra.mxu0 %v1933
        %1950 = vmatprep.subr.bf16.mxu0 0
        %1951 = vmatpush1.bf16.msra.mxu0 %v1932
        %1952 = vmatprep.subr.bf16.mxu0 0
        %1953 = vmatpush1.bf16.msra.mxu0 %v1931
        %1954 = vmatprep.subr.bf16.mxu0 0
        %1955 = vmatpush1.bf16.msra.mxu0 %v1930
        %1956 = vmatprep.subr.bf16.mxu0 0
        %1957 = vmatpush1.bf16.msra.mxu0 %v1929
        %1958 = vmatprep.subr.bf16.mxu0 0
        %1959 = vmatpush1.bf16.msra.mxu0 %v1928
        %1960 = vmatprep.subr.bf16.mxu0 0
        %1961 = vmatpush2.bf16.msra.mxu0 0
        %1962 = vmatprep.subr.bf16.mxu0 0
        %1963 = vmatpush2.bf16.msra.mxu0 0
        %1964 = vmatprep.subr.bf16.mxu0 0
        %1965 = vmatpush2.bf16.msra.mxu0 0
        %1966 = vmatprep.subr.bf16.mxu0 0
        %1967 = vmatpush2.bf16.msra.mxu0 0
        %1968 = vmatprep.subr.bf16.mxu0 0
        %1969 = vmatpush2.bf16.msra.mxu0 0
        %1970 = vmatprep.subr.bf16.mxu0 0
        %1971 = vmatpush2.bf16.msra.mxu0 0
        %1972 = vmatprep.subr.bf16.mxu0 0
        %1973 = vmatpush2.bf16.msra.mxu0 0
        %1974 = vmatprep.subr.bf16.mxu0 0
        %1975 = vmatpush2.bf16.msra.mxu0 0
        %1976 = vmatprep.mubr.bf16.mxu0 0
        %1977 = vmatmul.mubr.bf16.gmra.mxu0 %v844
        %v1978 = vpop.f32.mrf.mxu0
        %v1979 = vadd.f32 0.0, %v1978
        %v1980 = vpop.f32.mrf.mxu0
        %v1981 = vpop.f32.mrf.mxu0
        %v1982 = vadd.f32 0.0, %v1981
        %v1983 = vpop.f32.mrf.mxu0
        %1984 = vmatprep.mubr.bf16.mxu0 0
        %1985 = vmatmul.mubr.bf16.gmra.mxu0 %v845
        %v1986 = vpop.f32.mrf.mxu0
        %v1987 = vadd.f32 0.0, %v1986
        %v1988 = vpop.f32.mrf.mxu0
        %v1989 = vpop.f32.mrf.mxu0
        %v1990 = vadd.f32 0.0, %v1989
        %v1991 = vpop.f32.mrf.mxu0
        %1992 = vmatprep.mubr.bf16.mxu0 0
        %1993 = vmatmul.mubr.bf16.gmra.mxu0 %v846
        %v1994 = vpop.f32.mrf.mxu0
        %v1995 = vadd.f32 0.0, %v1994
        %v1996 = vpop.f32.mrf.mxu0
        %v1997 = vpop.f32.mrf.mxu0
        %v1998 = vadd.f32 0.0, %v1997
        %v1999 = vpop.f32.mrf.mxu0
        %2000 = vmatprep.mubr.bf16.mxu0 0
        %2001 = vmatmul.mubr.bf16.gmra.mxu0 %v847
        %v2002 = vpop.f32.mrf.mxu0
        %v2003 = vadd.f32 0.0, %v2002
        %v2004 = vpop.f32.mrf.mxu0
        %v2005 = vpop.f32.mrf.mxu0
        %v2006 = vadd.f32 0.0, %v2005
        %v2007 = vpop.f32.mrf.mxu0
        %2008 = vmatprep.mubr.bf16.mxu0 0
        %2009 = vmatmul.mubr.bf16.gmra.mxu0 %v848
        %v2010 = vpop.f32.mrf.mxu0
        %v2011 = vadd.f32 0.0, %v2010
        %v2012 = vpop.f32.mrf.mxu0
        %v2013 = vpop.f32.mrf.mxu0
        %v2014 = vadd.f32 0.0, %v2013
        %v2015 = vpop.f32.mrf.mxu0
        %2016 = vmatprep.mubr.bf16.mxu0 0
        %2017 = vmatmul.mubr.bf16.gmra.mxu0 %v849
        %v2018 = vpop.f32.mrf.mxu0
        %v2019 = vadd.f32 0.0, %v2018
        %v2020 = vpop.f32.mrf.mxu0
        %v2021 = vpop.f32.mrf.mxu0
        %v2022 = vadd.f32 0.0, %v2021
        %v2023 = vpop.f32.mrf.mxu0
        %2024 = vmatprep.mubr.bf16.mxu0 0
        %2025 = vmatmul.mubr.bf16.gmra.mxu0 %v850
        %v2026 = vpop.f32.mrf.mxu0
        %v2027 = vadd.f32 0.0, %v2026
        %v2028 = vpop.f32.mrf.mxu0
        %v2029 = vpop.f32.mrf.mxu0
        %v2030 = vadd.f32 0.0, %v2029
        %v2031 = vpop.f32.mrf.mxu0
        %2032 = vmatprep.mubr.bf16.mxu0 0
        %2033 = vmatmul.mubr.bf16.gmra.mxu0 %v851
        %v2034 = vpop.f32.mrf.mxu0
        %v2035 = vadd.f32 0.0, %v2034
        %v2036 = vpop.f32.mrf.mxu0
        %v2037 = vpop.f32.mrf.mxu0
        %v2038 = vadd.f32 0.0, %v2037
        %v2039 = vpop.f32.mrf.mxu0
        %2040 = vmatprep.mubr.bf16.mxu0 0
        %2041 = vmatmul.mubr.bf16.gmra.mxu0 %v852
        %v2042 = vpop.f32.mrf.mxu0
        %v2043 = vadd.f32 0.0, %v2042
        %v2044 = vpop.f32.mrf.mxu0
        %v2045 = vpop.f32.mrf.mxu0
        %v2046 = vadd.f32 0.0, %v2045
        %v2047 = vpop.f32.mrf.mxu0
        %2048 = vmatprep.mubr.bf16.mxu0 0
        %2049 = vmatmul.mubr.bf16.gmra.mxu0 %v853
        %v2050 = vpop.f32.mrf.mxu0
        %v2051 = vadd.f32 0.0, %v2050
        %v2052 = vpop.f32.mrf.mxu0
        %v2053 = vpop.f32.mrf.mxu0
        %v2054 = vadd.f32 0.0, %v2053
        %v2055 = vpop.f32.mrf.mxu0
        %2056 = vmatprep.mubr.bf16.mxu0 0
        %2057 = vmatmul.mubr.bf16.gmra.mxu0 %v854
        %v2058 = vpop.f32.mrf.mxu0
        %v2059 = vadd.f32 0.0, %v2058
        %v2060 = vpop.f32.mrf.mxu0
        %v2061 = vpop.f32.mrf.mxu0
        %v2062 = vadd.f32 0.0, %v2061
        %v2063 = vpop.f32.mrf.mxu0
        %2064 = vmatprep.mubr.bf16.mxu0 0
        %2065 = vmatmul.mubr.bf16.gmra.mxu0 %v855
        %v2066 = vpop.f32.mrf.mxu0
        %v2067 = vadd.f32 0.0, %v2066
        %v2068 = vpop.f32.mrf.mxu0
        %v2069 = vpop.f32.mrf.mxu0
        %v2070 = vadd.f32 0.0, %v2069
        %v2071 = vpop.f32.mrf.mxu0
        %2072 = vmatprep.mubr.bf16.mxu0 0
        %2073 = vmatmul.mubr.bf16.gmra.mxu0 %v856
        %v2074 = vpop.f32.mrf.mxu0
        %v2075 = vadd.f32 0.0, %v2074
        %v2076 = vpop.f32.mrf.mxu0
        %v2077 = vpop.f32.mrf.mxu0
        %v2078 = vadd.f32 0.0, %v2077
        %v2079 = vpop.f32.mrf.mxu0
        %2080 = vmatprep.mubr.bf16.mxu0 0
        %2081 = vmatmul.mubr.bf16.gmra.mxu0 %v857
        %v2082 = vpop.f32.mrf.mxu0
        %v2083 = vadd.f32 0.0, %v2082
        %v2084 = vpop.f32.mrf.mxu0
        %v2085 = vpop.f32.mrf.mxu0
        %v2086 = vadd.f32 0.0, %v2085
        %v2087 = vpop.f32.mrf.mxu0
        %2088 = vmatprep.mubr.bf16.mxu0 0
        %2089 = vmatmul.mubr.bf16.gmra.mxu0 %v858
        %v2090 = vpop.f32.mrf.mxu0
        %v2091 = vadd.f32 0.0, %v2090
        %v2092 = vpop.f32.mrf.mxu0
        %v2093 = vpop.f32.mrf.mxu0
        %v2094 = vadd.f32 0.0, %v2093
        %v2095 = vpop.f32.mrf.mxu0
        %2096 = vmatprep.mubr.bf16.mxu0 0
        %2097 = vmatmul.mubr.bf16.gmra.mxu0 %v859
        %v2098 = vpop.f32.mrf.mxu0
        %v2099 = vadd.f32 0.0, %v2098
        %v2100 = vpop.f32.mrf.mxu0
        %v2101 = vpop.f32.mrf.mxu0
        %v2102 = vadd.f32 0.0, %v2101
        %v2103 = vpop.f32.mrf.mxu0
        %2104 = vdwg.mxu0
        %v2105 = vadd.f32 %v1848, %v1979
        %v2106 = vadd.f32 %v1849, %v1982
        %v2107 = vadd.f32 %v1850, %v1987
        %v2108 = vadd.f32 %v1851, %v1990
        %v2109 = vadd.f32 %v1852, %v1995
        %v2110 = vadd.f32 %v1853, %v1998
        %v2111 = vadd.f32 %v1854, %v2003
        %v2112 = vadd.f32 %v1855, %v2006
        %v2113 = vadd.f32 %v1856, %v2011
        %v2114 = vadd.f32 %v1857, %v2014
        %v2115 = vadd.f32 %v1858, %v2019
        %v2116 = vadd.f32 %v1859, %v2022
        %v2117 = vadd.f32 %v1860, %v2027
        %v2118 = vadd.f32 %v1861, %v2030
        %v2119 = vadd.f32 %v1862, %v2035
        %v2120 = vadd.f32 %v1863, %v2038
        %v2121 = vadd.f32 %v1864, %v2043
        %v2122 = vadd.f32 %v1865, %v2046
        %v2123 = vadd.f32 %v1866, %v2051
        %v2124 = vadd.f32 %v1867, %v2054
        %v2125 = vadd.f32 %v1868, %v2059
        %v2126 = vadd.f32 %v1869, %v2062
        %v2127 = vadd.f32 %v1870, %v2067
        %v2128 = vadd.f32 %v1871, %v2070
        %v2129 = vadd.f32 %v1872, %v2075
        %v2130 = vadd.f32 %v1873, %v2078
        %v2131 = vadd.f32 %v1874, %v2083
        %v2132 = vadd.f32 %v1875, %v2086
        %v2133 = vadd.f32 %v1876, %v2091
        %v2134 = vadd.f32 %v1877, %v2094
        %v2135 = vadd.f32 %v1878, %v2099
        %v2136 = vadd.f32 %v1879, %v2102
        %v2137 = vld [vmem:[%s1622 + $0x80] sm:$0xf]
        %v2138 = vld [vmem:[%s1622 + $0x84] sm:$0xf]
        %v2139 = vld [vmem:[%s1622 + $0x88] sm:$0xf]
        %v2140 = vld [vmem:[%s1622 + $0x8c] sm:$0xf]
        %v2141 = vld [vmem:[%s1622 + $0x90] sm:$0xf]
        %v2142 = vld [vmem:[%s1622 + $0x94] sm:$0xf]
        %v2143 = vld [vmem:[%s1622 + $0x98] sm:$0xf]
        %v2144 = vld [vmem:[%s1622 + $0x9c] sm:$0xf]
        %v2145 = vld [vmem:[%s1622 + $0xa0] sm:$0xf]
        %v2146 = vld [vmem:[%s1622 + $0xa4] sm:$0xf]
        %v2147 = vld [vmem:[%s1622 + $0xa8] sm:$0xf]
        %v2148 = vld [vmem:[%s1622 + $0xac] sm:$0xf]
        %v2149 = vld [vmem:[%s1622 + $0xb0] sm:$0xf]
        %v2150 = vld [vmem:[%s1622 + $0xb4] sm:$0xf]
        %v2151 = vld [vmem:[%s1622 + $0xb8] sm:$0xf]
        %v2152 = vld [vmem:[%s1622 + $0xbc] sm:$0xf]
        %v2169 = vunpack.c.l.b16 %v2137
        %v2170 = vunpack.c.l.b16 %v2138
        %v2171 = vunpack.c.l.b16 %v2139
        %v2172 = vunpack.c.l.b16 %v2140
        %v2173 = vunpack.c.l.b16 %v2141
        %v2174 = vunpack.c.l.b16 %v2142
        %v2175 = vunpack.c.l.b16 %v2143
        %v2176 = vunpack.c.l.b16 %v2144
        %v2177 = vunpack.c.l.b16 %v2145
        %v2178 = vunpack.c.l.b16 %v2146
        %v2179 = vunpack.c.l.b16 %v2147
        %v2180 = vunpack.c.l.b16 %v2148
        %v2181 = vunpack.c.l.b16 %v2149
        %v2182 = vunpack.c.l.b16 %v2150
        %v2183 = vunpack.c.l.b16 %v2151
        %v2184 = vunpack.c.l.b16 %v2152
        %v2185 = vpack.c.b16 %v2170, %v2169
        %v2186 = vpack.c.b16 %v2172, %v2171
        %v2187 = vpack.c.b16 %v2174, %v2173
        %v2188 = vpack.c.b16 %v2176, %v2175
        %v2189 = vpack.c.b16 %v2178, %v2177
        %v2190 = vpack.c.b16 %v2180, %v2179
        %v2191 = vpack.c.b16 %v2182, %v2181
        %v2192 = vpack.c.b16 %v2184, %v2183
        %2201 = vmatprep.subr.bf16.mxu0 0
        %2202 = vmatpush1.bf16.msra.mxu0 %v2192
        %2203 = vmatprep.subr.bf16.mxu0 0
        %2204 = vmatpush1.bf16.msra.mxu0 %v2191
        %2205 = vmatprep.subr.bf16.mxu0 0
        %2206 = vmatpush1.bf16.msra.mxu0 %v2190
        %2207 = vmatprep.subr.bf16.mxu0 0
        %2208 = vmatpush1.bf16.msra.mxu0 %v2189
        %2209 = vmatprep.subr.bf16.mxu0 0
        %2210 = vmatpush1.bf16.msra.mxu0 %v2188
        %2211 = vmatprep.subr.bf16.mxu0 0
        %2212 = vmatpush1.bf16.msra.mxu0 %v2187
        %2213 = vmatprep.subr.bf16.mxu0 0
        %2214 = vmatpush1.bf16.msra.mxu0 %v2186
        %2215 = vmatprep.subr.bf16.mxu0 0
        %2216 = vmatpush1.bf16.msra.mxu0 %v2185
        %2217 = vmatprep.subr.bf16.mxu0 0
        %2218 = vmatpush2.bf16.msra.mxu0 0
        %2219 = vmatprep.subr.bf16.mxu0 0
        %2220 = vmatpush2.bf16.msra.mxu0 0
        %2221 = vmatprep.subr.bf16.mxu0 0
        %2222 = vmatpush2.bf16.msra.mxu0 0
        %2223 = vmatprep.subr.bf16.mxu0 0
        %2224 = vmatpush2.bf16.msra.mxu0 0
        %2225 = vmatprep.subr.bf16.mxu0 0
        %2226 = vmatpush2.bf16.msra.mxu0 0
        %2227 = vmatprep.subr.bf16.mxu0 0
        %2228 = vmatpush2.bf16.msra.mxu0 0
        %2229 = vmatprep.subr.bf16.mxu0 0
        %2230 = vmatpush2.bf16.msra.mxu0 0
        %2231 = vmatprep.subr.bf16.mxu0 0
        %2232 = vmatpush2.bf16.msra.mxu0 0
        %2233 = vmatprep.mubr.bf16.mxu0 0
        %2234 = vmatmul.mubr.bf16.gmra.mxu0 %v898
        %v2235 = vpop.f32.mrf.mxu0
        %v2236 = vadd.f32 0.0, %v2235
        %v2237 = vpop.f32.mrf.mxu0
        %v2238 = vpop.f32.mrf.mxu0
        %v2239 = vadd.f32 0.0, %v2238
        %v2240 = vpop.f32.mrf.mxu0
        %2241 = vmatprep.mubr.bf16.mxu0 0
        %2242 = vmatmul.mubr.bf16.gmra.mxu0 %v899
        %v2243 = vpop.f32.mrf.mxu0
        %v2244 = vadd.f32 0.0, %v2243
        %v2245 = vpop.f32.mrf.mxu0
        %v2246 = vpop.f32.mrf.mxu0
        %v2247 = vadd.f32 0.0, %v2246
        %v2248 = vpop.f32.mrf.mxu0
        %2249 = vmatprep.mubr.bf16.mxu0 0
        %2250 = vmatmul.mubr.bf16.gmra.mxu0 %v900
        %v2251 = vpop.f32.mrf.mxu0
        %v2252 = vadd.f32 0.0, %v2251
        %v2253 = vpop.f32.mrf.mxu0
        %v2254 = vpop.f32.mrf.mxu0
        %v2255 = vadd.f32 0.0, %v2254
        %v2256 = vpop.f32.mrf.mxu0
        %2257 = vmatprep.mubr.bf16.mxu0 0
        %2258 = vmatmul.mubr.bf16.gmra.mxu0 %v901
        %v2259 = vpop.f32.mrf.mxu0
        %v2260 = vadd.f32 0.0, %v2259
        %v2261 = vpop.f32.mrf.mxu0
        %v2262 = vpop.f32.mrf.mxu0
        %v2263 = vadd.f32 0.0, %v2262
        %v2264 = vpop.f32.mrf.mxu0
        %2265 = vmatprep.mubr.bf16.mxu0 0
        %2266 = vmatmul.mubr.bf16.gmra.mxu0 %v902
        %v2267 = vpop.f32.mrf.mxu0
        %v2268 = vadd.f32 0.0, %v2267
        %v2269 = vpop.f32.mrf.mxu0
        %v2270 = vpop.f32.mrf.mxu0
        %v2271 = vadd.f32 0.0, %v2270
        %v2272 = vpop.f32.mrf.mxu0
        %2273 = vmatprep.mubr.bf16.mxu0 0
        %2274 = vmatmul.mubr.bf16.gmra.mxu0 %v903
        %v2275 = vpop.f32.mrf.mxu0
        %v2276 = vadd.f32 0.0, %v2275
        %v2277 = vpop.f32.mrf.mxu0
        %v2278 = vpop.f32.mrf.mxu0
        %v2279 = vadd.f32 0.0, %v2278
        %v2280 = vpop.f32.mrf.mxu0
        %2281 = vmatprep.mubr.bf16.mxu0 0
        %2282 = vmatmul.mubr.bf16.gmra.mxu0 %v904
        %v2283 = vpop.f32.mrf.mxu0
        %v2284 = vadd.f32 0.0, %v2283
        %v2285 = vpop.f32.mrf.mxu0
        %v2286 = vpop.f32.mrf.mxu0
        %v2287 = vadd.f32 0.0, %v2286
        %v2288 = vpop.f32.mrf.mxu0
        %2289 = vmatprep.mubr.bf16.mxu0 0
        %2290 = vmatmul.mubr.bf16.gmra.mxu0 %v905
        %v2291 = vpop.f32.mrf.mxu0
        %v2292 = vadd.f32 0.0, %v2291
        %v2293 = vpop.f32.mrf.mxu0
        %v2294 = vpop.f32.mrf.mxu0
        %v2295 = vadd.f32 0.0, %v2294
        %v2296 = vpop.f32.mrf.mxu0
        %2297 = vmatprep.mubr.bf16.mxu0 0
        %2298 = vmatmul.mubr.bf16.gmra.mxu0 %v906
        %v2299 = vpop.f32.mrf.mxu0
        %v2300 = vadd.f32 0.0, %v2299
        %v2301 = vpop.f32.mrf.mxu0
        %v2302 = vpop.f32.mrf.mxu0
        %v2303 = vadd.f32 0.0, %v2302
        %v2304 = vpop.f32.mrf.mxu0
        %2305 = vmatprep.mubr.bf16.mxu0 0
        %2306 = vmatmul.mubr.bf16.gmra.mxu0 %v907
        %v2307 = vpop.f32.mrf.mxu0
        %v2308 = vadd.f32 0.0, %v2307
        %v2309 = vpop.f32.mrf.mxu0
        %v2310 = vpop.f32.mrf.mxu0
        %v2311 = vadd.f32 0.0, %v2310
        %v2312 = vpop.f32.mrf.mxu0
        %2313 = vmatprep.mubr.bf16.mxu0 0
        %2314 = vmatmul.mubr.bf16.gmra.mxu0 %v908
        %v2315 = vpop.f32.mrf.mxu0
        %v2316 = vadd.f32 0.0, %v2315
        %v2317 = vpop.f32.mrf.mxu0
        %v2318 = vpop.f32.mrf.mxu0
        %v2319 = vadd.f32 0.0, %v2318
        %v2320 = vpop.f32.mrf.mxu0
        %2321 = vmatprep.mubr.bf16.mxu0 0
        %2322 = vmatmul.mubr.bf16.gmra.mxu0 %v909
        %v2323 = vpop.f32.mrf.mxu0
        %v2324 = vadd.f32 0.0, %v2323
        %v2325 = vpop.f32.mrf.mxu0
        %v2326 = vpop.f32.mrf.mxu0
        %v2327 = vadd.f32 0.0, %v2326
        %v2328 = vpop.f32.mrf.mxu0
        %2329 = vmatprep.mubr.bf16.mxu0 0
        %2330 = vmatmul.mubr.bf16.gmra.mxu0 %v910
        %v2331 = vpop.f32.mrf.mxu0
        %v2332 = vadd.f32 0.0, %v2331
        %v2333 = vpop.f32.mrf.mxu0
        %v2334 = vpop.f32.mrf.mxu0
        %v2335 = vadd.f32 0.0, %v2334
        %v2336 = vpop.f32.mrf.mxu0
        %2337 = vmatprep.mubr.bf16.mxu0 0
        %2338 = vmatmul.mubr.bf16.gmra.mxu0 %v911
        %v2339 = vpop.f32.mrf.mxu0
        %v2340 = vadd.f32 0.0, %v2339
        %v2341 = vpop.f32.mrf.mxu0
        %v2342 = vpop.f32.mrf.mxu0
        %v2343 = vadd.f32 0.0, %v2342
        %v2344 = vpop.f32.mrf.mxu0
        %2345 = vmatprep.mubr.bf16.mxu0 0
        %2346 = vmatmul.mubr.bf16.gmra.mxu0 %v912
        %v2347 = vpop.f32.mrf.mxu0
        %v2348 = vadd.f32 0.0, %v2347
        %v2349 = vpop.f32.mrf.mxu0
        %v2350 = vpop.f32.mrf.mxu0
        %v2351 = vadd.f32 0.0, %v2350
        %v2352 = vpop.f32.mrf.mxu0
        %2353 = vmatprep.mubr.bf16.mxu0 0
        %2354 = vmatmul.mubr.bf16.gmra.mxu0 %v913
        %v2355 = vpop.f32.mrf.mxu0
        %v2356 = vadd.f32 0.0, %v2355
        %v2357 = vpop.f32.mrf.mxu0
        %v2358 = vpop.f32.mrf.mxu0
        %v2359 = vadd.f32 0.0, %v2358
        %v2360 = vpop.f32.mrf.mxu0
        %2361 = vdwg.mxu0
        %v2362 = vadd.f32 %v2105, %v2236
        %v2363 = vadd.f32 %v2106, %v2239
        %v2364 = vadd.f32 %v2107, %v2244
        %v2365 = vadd.f32 %v2108, %v2247
        %v2366 = vadd.f32 %v2109, %v2252
        %v2367 = vadd.f32 %v2110, %v2255
        %v2368 = vadd.f32 %v2111, %v2260
        %v2369 = vadd.f32 %v2112, %v2263
        %v2370 = vadd.f32 %v2113, %v2268
        %v2371 = vadd.f32 %v2114, %v2271
        %v2372 = vadd.f32 %v2115, %v2276
        %v2373 = vadd.f32 %v2116, %v2279
        %v2374 = vadd.f32 %v2117, %v2284
        %v2375 = vadd.f32 %v2118, %v2287
        %v2376 = vadd.f32 %v2119, %v2292
        %v2377 = vadd.f32 %v2120, %v2295
        %v2378 = vadd.f32 %v2121, %v2300
        %v2379 = vadd.f32 %v2122, %v2303
        %v2380 = vadd.f32 %v2123, %v2308
        %v2381 = vadd.f32 %v2124, %v2311
        %v2382 = vadd.f32 %v2125, %v2316
        %v2383 = vadd.f32 %v2126, %v2319
        %v2384 = vadd.f32 %v2127, %v2324
        %v2385 = vadd.f32 %v2128, %v2327
        %v2386 = vadd.f32 %v2129, %v2332
        %v2387 = vadd.f32 %v2130, %v2335
        %v2388 = vadd.f32 %v2131, %v2340
        %v2389 = vadd.f32 %v2132, %v2343
        %v2390 = vadd.f32 %v2133, %v2348
        %v2391 = vadd.f32 %v2134, %v2351
        %v2392 = vadd.f32 %v2135, %v2356
        %v2393 = vadd.f32 %v2136, %v2359
        %s2394 = scalar_lea.vmem %s264, 384 [#allocation4]
        %v2395 = vld [vmem:[%s2394] sm:$0xf]
        %v2396 = vld [vmem:[%s2394 + $0x4] sm:$0xf]
        %v2397 = vld [vmem:[%s2394 + $0x8] sm:$0xf]
        %v2398 = vld [vmem:[%s2394 + $0xc] sm:$0xf]
        %v2399 = vld [vmem:[%s2394 + $0x10] sm:$0xf]
        %v2400 = vld [vmem:[%s2394 + $0x14] sm:$0xf]
        %v2401 = vld [vmem:[%s2394 + $0x18] sm:$0xf]
        %v2402 = vld [vmem:[%s2394 + $0x1c] sm:$0xf]
        %v2403 = vld [vmem:[%s2394 + $0x20] sm:$0xf]
        %v2404 = vld [vmem:[%s2394 + $0x24] sm:$0xf]
        %v2405 = vld [vmem:[%s2394 + $0x28] sm:$0xf]
        %v2406 = vld [vmem:[%s2394 + $0x2c] sm:$0xf]
        %v2407 = vld [vmem:[%s2394 + $0x30] sm:$0xf]
        %v2408 = vld [vmem:[%s2394 + $0x34] sm:$0xf]
        %v2409 = vld [vmem:[%s2394 + $0x38] sm:$0xf]
        %v2410 = vld [vmem:[%s2394 + $0x3c] sm:$0xf]
        %v2427 = vunpack.c.l.b16 %v2395
        %v2428 = vunpack.c.l.b16 %v2396
        %v2429 = vunpack.c.l.b16 %v2397
        %v2430 = vunpack.c.l.b16 %v2398
        %v2431 = vunpack.c.l.b16 %v2399
        %v2432 = vunpack.c.l.b16 %v2400
        %v2433 = vunpack.c.l.b16 %v2401
        %v2434 = vunpack.c.l.b16 %v2402
        %v2435 = vunpack.c.l.b16 %v2403
        %v2436 = vunpack.c.l.b16 %v2404
        %v2437 = vunpack.c.l.b16 %v2405
        %v2438 = vunpack.c.l.b16 %v2406
        %v2439 = vunpack.c.l.b16 %v2407
        %v2440 = vunpack.c.l.b16 %v2408
        %v2441 = vunpack.c.l.b16 %v2409
        %v2442 = vunpack.c.l.b16 %v2410
        %v2443 = vpack.c.b16 %v2428, %v2427
        %v2444 = vpack.c.b16 %v2430, %v2429
        %v2445 = vpack.c.b16 %v2432, %v2431
        %v2446 = vpack.c.b16 %v2434, %v2433
        %v2447 = vpack.c.b16 %v2436, %v2435
        %v2448 = vpack.c.b16 %v2438, %v2437
        %v2449 = vpack.c.b16 %v2440, %v2439
        %v2450 = vpack.c.b16 %v2442, %v2441
        %2459 = vmatprep.subr.bf16.mxu0 0
        %2460 = vmatpush1.bf16.msra.mxu0 %v2450
        %2461 = vmatprep.subr.bf16.mxu0 0
        %2462 = vmatpush1.bf16.msra.mxu0 %v2449
        %2463 = vmatprep.subr.bf16.mxu0 0
        %2464 = vmatpush1.bf16.msra.mxu0 %v2448
        %2465 = vmatprep.subr.bf16.mxu0 0
        %2466 = vmatpush1.bf16.msra.mxu0 %v2447
        %2467 = vmatprep.subr.bf16.mxu0 0
        %2468 = vmatpush1.bf16.msra.mxu0 %v2446
        %2469 = vmatprep.subr.bf16.mxu0 0
        %2470 = vmatpush1.bf16.msra.mxu0 %v2445
        %2471 = vmatprep.subr.bf16.mxu0 0
        %2472 = vmatpush1.bf16.msra.mxu0 %v2444
        %2473 = vmatprep.subr.bf16.mxu0 0
        %2474 = vmatpush1.bf16.msra.mxu0 %v2443
        %2475 = vmatprep.subr.bf16.mxu0 0
        %2476 = vmatpush2.bf16.msra.mxu0 0
        %2477 = vmatprep.subr.bf16.mxu0 0
        %2478 = vmatpush2.bf16.msra.mxu0 0
        %2479 = vmatprep.subr.bf16.mxu0 0
        %2480 = vmatpush2.bf16.msra.mxu0 0
        %2481 = vmatprep.subr.bf16.mxu0 0
        %2482 = vmatpush2.bf16.msra.mxu0 0
        %2483 = vmatprep.subr.bf16.mxu0 0
        %2484 = vmatpush2.bf16.msra.mxu0 0
        %2485 = vmatprep.subr.bf16.mxu0 0
        %2486 = vmatpush2.bf16.msra.mxu0 0
        %2487 = vmatprep.subr.bf16.mxu0 0
        %2488 = vmatpush2.bf16.msra.mxu0 0
        %2489 = vmatprep.subr.bf16.mxu0 0
        %2490 = vmatpush2.bf16.msra.mxu0 0
        %2491 = vmatprep.mubr.bf16.mxu0 0
        %2492 = vmatmul.mubr.bf16.gmra.mxu0 %v791
        %v2493 = vpop.f32.mrf.mxu0
        %v2494 = vadd.f32 0.0, %v2493
        %v2495 = vpop.f32.mrf.mxu0
        %v2496 = vpop.f32.mrf.mxu0
        %v2497 = vadd.f32 0.0, %v2496
        %v2498 = vpop.f32.mrf.mxu0
        %2499 = vmatprep.mubr.bf16.mxu0 0
        %2500 = vmatmul.mubr.bf16.gmra.mxu0 %v792
        %v2501 = vpop.f32.mrf.mxu0
        %v2502 = vadd.f32 0.0, %v2501
        %v2503 = vpop.f32.mrf.mxu0
        %v2504 = vpop.f32.mrf.mxu0
        %v2505 = vadd.f32 0.0, %v2504
        %v2506 = vpop.f32.mrf.mxu0
        %2507 = vmatprep.mubr.bf16.mxu0 0
        %2508 = vmatmul.mubr.bf16.gmra.mxu0 %v793
        %v2509 = vpop.f32.mrf.mxu0
        %v2510 = vadd.f32 0.0, %v2509
        %v2511 = vpop.f32.mrf.mxu0
        %v2512 = vpop.f32.mrf.mxu0
        %v2513 = vadd.f32 0.0, %v2512
        %v2514 = vpop.f32.mrf.mxu0
        %2515 = vmatprep.mubr.bf16.mxu0 0
        %2516 = vmatmul.mubr.bf16.gmra.mxu0 %v794
        %v2517 = vpop.f32.mrf.mxu0
        %v2518 = vadd.f32 0.0, %v2517
        %v2519 = vpop.f32.mrf.mxu0
        %v2520 = vpop.f32.mrf.mxu0
        %v2521 = vadd.f32 0.0, %v2520
        %v2522 = vpop.f32.mrf.mxu0
        %2523 = vmatprep.mubr.bf16.mxu0 0
        %2524 = vmatmul.mubr.bf16.gmra.mxu0 %v795
        %v2525 = vpop.f32.mrf.mxu0
        %v2526 = vadd.f32 0.0, %v2525
        %v2527 = vpop.f32.mrf.mxu0
        %v2528 = vpop.f32.mrf.mxu0
        %v2529 = vadd.f32 0.0, %v2528
        %v2530 = vpop.f32.mrf.mxu0
        %2531 = vmatprep.mubr.bf16.mxu0 0
        %2532 = vmatmul.mubr.bf16.gmra.mxu0 %v796
        %v2533 = vpop.f32.mrf.mxu0
        %v2534 = vadd.f32 0.0, %v2533
        %v2535 = vpop.f32.mrf.mxu0
        %v2536 = vpop.f32.mrf.mxu0
        %v2537 = vadd.f32 0.0, %v2536
        %v2538 = vpop.f32.mrf.mxu0
        %2539 = vmatprep.mubr.bf16.mxu0 0
        %2540 = vmatmul.mubr.bf16.gmra.mxu0 %v797
        %v2541 = vpop.f32.mrf.mxu0
        %v2542 = vadd.f32 0.0, %v2541
        %v2543 = vpop.f32.mrf.mxu0
        %v2544 = vpop.f32.mrf.mxu0
        %v2545 = vadd.f32 0.0, %v2544
        %v2546 = vpop.f32.mrf.mxu0
        %2547 = vmatprep.mubr.bf16.mxu0 0
        %2548 = vmatmul.mubr.bf16.gmra.mxu0 %v798
        %v2549 = vpop.f32.mrf.mxu0
        %v2550 = vadd.f32 0.0, %v2549
        %v2551 = vpop.f32.mrf.mxu0
        %v2552 = vpop.f32.mrf.mxu0
        %v2553 = vadd.f32 0.0, %v2552
        %v2554 = vpop.f32.mrf.mxu0
        %2555 = vmatprep.mubr.bf16.mxu0 0
        %2556 = vmatmul.mubr.bf16.gmra.mxu0 %v799
        %v2557 = vpop.f32.mrf.mxu0
        %v2558 = vadd.f32 0.0, %v2557
        %v2559 = vpop.f32.mrf.mxu0
        %v2560 = vpop.f32.mrf.mxu0
        %v2561 = vadd.f32 0.0, %v2560
        %v2562 = vpop.f32.mrf.mxu0
        %2563 = vmatprep.mubr.bf16.mxu0 0
        %2564 = vmatmul.mubr.bf16.gmra.mxu0 %v800
        %v2565 = vpop.f32.mrf.mxu0
        %v2566 = vadd.f32 0.0, %v2565
        %v2567 = vpop.f32.mrf.mxu0
        %v2568 = vpop.f32.mrf.mxu0
        %v2569 = vadd.f32 0.0, %v2568
        %v2570 = vpop.f32.mrf.mxu0
        %2571 = vmatprep.mubr.bf16.mxu0 0
        %2572 = vmatmul.mubr.bf16.gmra.mxu0 %v801
        %v2573 = vpop.f32.mrf.mxu0
        %v2574 = vadd.f32 0.0, %v2573
        %v2575 = vpop.f32.mrf.mxu0
        %v2576 = vpop.f32.mrf.mxu0
        %v2577 = vadd.f32 0.0, %v2576
        %v2578 = vpop.f32.mrf.mxu0
        %2579 = vmatprep.mubr.bf16.mxu0 0
        %2580 = vmatmul.mubr.bf16.gmra.mxu0 %v802
        %v2581 = vpop.f32.mrf.mxu0
        %v2582 = vadd.f32 0.0, %v2581
        %v2583 = vpop.f32.mrf.mxu0
        %v2584 = vpop.f32.mrf.mxu0
        %v2585 = vadd.f32 0.0, %v2584
        %v2586 = vpop.f32.mrf.mxu0
        %2587 = vmatprep.mubr.bf16.mxu0 0
        %2588 = vmatmul.mubr.bf16.gmra.mxu0 %v803
        %v2589 = vpop.f32.mrf.mxu0
        %v2590 = vadd.f32 0.0, %v2589
        %v2591 = vpop.f32.mrf.mxu0
        %v2592 = vpop.f32.mrf.mxu0
        %v2593 = vadd.f32 0.0, %v2592
        %v2594 = vpop.f32.mrf.mxu0
        %2595 = vmatprep.mubr.bf16.mxu0 0
        %2596 = vmatmul.mubr.bf16.gmra.mxu0 %v804
        %v2597 = vpop.f32.mrf.mxu0
        %v2598 = vadd.f32 0.0, %v2597
        %v2599 = vpop.f32.mrf.mxu0
        %v2600 = vpop.f32.mrf.mxu0
        %v2601 = vadd.f32 0.0, %v2600
        %v2602 = vpop.f32.mrf.mxu0
        %2603 = vmatprep.mubr.bf16.mxu0 0
        %2604 = vmatmul.mubr.bf16.gmra.mxu0 %v805
        %v2605 = vpop.f32.mrf.mxu0
        %v2606 = vadd.f32 0.0, %v2605
        %v2607 = vpop.f32.mrf.mxu0
        %v2608 = vpop.f32.mrf.mxu0
        %v2609 = vadd.f32 0.0, %v2608
        %v2610 = vpop.f32.mrf.mxu0
        %2611 = vmatprep.mubr.bf16.mxu0 0
        %2612 = vmatmul.mubr.bf16.gmra.mxu0 %v806
        %v2613 = vpop.f32.mrf.mxu0
        %v2614 = vadd.f32 0.0, %v2613
        %v2615 = vpop.f32.mrf.mxu0
        %v2616 = vpop.f32.mrf.mxu0
        %v2617 = vadd.f32 0.0, %v2616
        %v2618 = vpop.f32.mrf.mxu0
        %2619 = vdwg.mxu0
        %v2620 = vadd.f32 %v2362, %v2494
        %v2621 = vadd.f32 %v2363, %v2497
        %v2622 = vadd.f32 %v2364, %v2502
        %v2623 = vadd.f32 %v2365, %v2505
        %v2624 = vadd.f32 %v2366, %v2510
        %v2625 = vadd.f32 %v2367, %v2513
        %v2626 = vadd.f32 %v2368, %v2518
        %v2627 = vadd.f32 %v2369, %v2521
        %v2628 = vadd.f32 %v2370, %v2526
        %v2629 = vadd.f32 %v2371, %v2529
        %v2630 = vadd.f32 %v2372, %v2534
        %v2631 = vadd.f32 %v2373, %v2537
        %v2632 = vadd.f32 %v2374, %v2542
        %v2633 = vadd.f32 %v2375, %v2545
        %v2634 = vadd.f32 %v2376, %v2550
        %v2635 = vadd.f32 %v2377, %v2553
        %v2636 = vadd.f32 %v2378, %v2558
        %v2637 = vadd.f32 %v2379, %v2561
        %v2638 = vadd.f32 %v2380, %v2566
        %v2639 = vadd.f32 %v2381, %v2569
        %v2640 = vadd.f32 %v2382, %v2574
        %v2641 = vadd.f32 %v2383, %v2577
        %v2642 = vadd.f32 %v2384, %v2582
        %v2643 = vadd.f32 %v2385, %v2585
        %v2644 = vadd.f32 %v2386, %v2590
        %v2645 = vadd.f32 %v2387, %v2593
        %v2646 = vadd.f32 %v2388, %v2598
        %v2647 = vadd.f32 %v2389, %v2601
        %v2648 = vadd.f32 %v2390, %v2606
        %v2649 = vadd.f32 %v2391, %v2609
        %v2650 = vadd.f32 %v2392, %v2614
        %v2651 = vadd.f32 %v2393, %v2617
        %v2652 = vld [vmem:[%s2394 + $0x40] sm:$0xf]
        %v2653 = vld [vmem:[%s2394 + $0x44] sm:$0xf]
        %v2654 = vld [vmem:[%s2394 + $0x48] sm:$0xf]
        %v2655 = vld [vmem:[%s2394 + $0x4c] sm:$0xf]
        %v2656 = vld [vmem:[%s2394 + $0x50] sm:$0xf]
        %v2657 = vld [vmem:[%s2394 + $0x54] sm:$0xf]
        %v2658 = vld [vmem:[%s2394 + $0x58] sm:$0xf]
        %v2659 = vld [vmem:[%s2394 + $0x5c] sm:$0xf]
        %v2660 = vld [vmem:[%s2394 + $0x60] sm:$0xf]
        %v2661 = vld [vmem:[%s2394 + $0x64] sm:$0xf]
        %v2662 = vld [vmem:[%s2394 + $0x68] sm:$0xf]
        %v2663 = vld [vmem:[%s2394 + $0x6c] sm:$0xf]
        %v2664 = vld [vmem:[%s2394 + $0x70] sm:$0xf]
        %v2665 = vld [vmem:[%s2394 + $0x74] sm:$0xf]
        %v2666 = vld [vmem:[%s2394 + $0x78] sm:$0xf]
        %v2667 = vld [vmem:[%s2394 + $0x7c] sm:$0xf]
        %v2684 = vunpack.c.l.b16 %v2652
        %v2685 = vunpack.c.l.b16 %v2653
        %v2686 = vunpack.c.l.b16 %v2654
        %v2687 = vunpack.c.l.b16 %v2655
        %v2688 = vunpack.c.l.b16 %v2656
        %v2689 = vunpack.c.l.b16 %v2657
        %v2690 = vunpack.c.l.b16 %v2658
        %v2691 = vunpack.c.l.b16 %v2659
        %v2692 = vunpack.c.l.b16 %v2660
        %v2693 = vunpack.c.l.b16 %v2661
        %v2694 = vunpack.c.l.b16 %v2662
        %v2695 = vunpack.c.l.b16 %v2663
        %v2696 = vunpack.c.l.b16 %v2664
        %v2697 = vunpack.c.l.b16 %v2665
        %v2698 = vunpack.c.l.b16 %v2666
        %v2699 = vunpack.c.l.b16 %v2667
        %v2700 = vpack.c.b16 %v2685, %v2684
        %v2701 = vpack.c.b16 %v2687, %v2686
        %v2702 = vpack.c.b16 %v2689, %v2688
        %v2703 = vpack.c.b16 %v2691, %v2690
        %v2704 = vpack.c.b16 %v2693, %v2692
        %v2705 = vpack.c.b16 %v2695, %v2694
        %v2706 = vpack.c.b16 %v2697, %v2696
        %v2707 = vpack.c.b16 %v2699, %v2698
        %2716 = vmatprep.subr.bf16.mxu0 0
        %2717 = vmatpush1.bf16.msra.mxu0 %v2707
        %2718 = vmatprep.subr.bf16.mxu0 0
        %2719 = vmatpush1.bf16.msra.mxu0 %v2706
        %2720 = vmatprep.subr.bf16.mxu0 0
        %2721 = vmatpush1.bf16.msra.mxu0 %v2705
        %2722 = vmatprep.subr.bf16.mxu0 0
        %2723 = vmatpush1.bf16.msra.mxu0 %v2704
        %2724 = vmatprep.subr.bf16.mxu0 0
        %2725 = vmatpush1.bf16.msra.mxu0 %v2703
        %2726 = vmatprep.subr.bf16.mxu0 0
        %2727 = vmatpush1.bf16.msra.mxu0 %v2702
        %2728 = vmatprep.subr.bf16.mxu0 0
        %2729 = vmatpush1.bf16.msra.mxu0 %v2701
        %2730 = vmatprep.subr.bf16.mxu0 0
        %2731 = vmatpush1.bf16.msra.mxu0 %v2700
        %2732 = vmatprep.subr.bf16.mxu0 0
        %2733 = vmatpush2.bf16.msra.mxu0 0
        %2734 = vmatprep.subr.bf16.mxu0 0
        %2735 = vmatpush2.bf16.msra.mxu0 0
        %2736 = vmatprep.subr.bf16.mxu0 0
        %2737 = vmatpush2.bf16.msra.mxu0 0
        %2738 = vmatprep.subr.bf16.mxu0 0
        %2739 = vmatpush2.bf16.msra.mxu0 0
        %2740 = vmatprep.subr.bf16.mxu0 0
        %2741 = vmatpush2.bf16.msra.mxu0 0
        %2742 = vmatprep.subr.bf16.mxu0 0
        %2743 = vmatpush2.bf16.msra.mxu0 0
        %2744 = vmatprep.subr.bf16.mxu0 0
        %2745 = vmatpush2.bf16.msra.mxu0 0
        %2746 = vmatprep.subr.bf16.mxu0 0
        %2747 = vmatpush2.bf16.msra.mxu0 0
        %2748 = vmatprep.mubr.bf16.mxu0 0
        %2749 = vmatmul.mubr.bf16.gmra.mxu0 %v845
        %v2750 = vpop.f32.mrf.mxu0
        %v2751 = vadd.f32 0.0, %v2750
        %v2752 = vpop.f32.mrf.mxu0
        %v2753 = vpop.f32.mrf.mxu0
        %v2754 = vadd.f32 0.0, %v2753
        %v2755 = vpop.f32.mrf.mxu0
        %2756 = vmatprep.mubr.bf16.mxu0 0
        %2757 = vmatmul.mubr.bf16.gmra.mxu0 %v846
        %v2758 = vpop.f32.mrf.mxu0
        %v2759 = vadd.f32 0.0, %v2758
        %v2760 = vpop.f32.mrf.mxu0
        %v2761 = vpop.f32.mrf.mxu0
        %v2762 = vadd.f32 0.0, %v2761
        %v2763 = vpop.f32.mrf.mxu0
        %2764 = vmatprep.mubr.bf16.mxu0 0
        %2765 = vmatmul.mubr.bf16.gmra.mxu0 %v847
        %v2766 = vpop.f32.mrf.mxu0
        %v2767 = vadd.f32 0.0, %v2766
        %v2768 = vpop.f32.mrf.mxu0
        %v2769 = vpop.f32.mrf.mxu0
        %v2770 = vadd.f32 0.0, %v2769
        %v2771 = vpop.f32.mrf.mxu0
        %2772 = vmatprep.mubr.bf16.mxu0 0
        %2773 = vmatmul.mubr.bf16.gmra.mxu0 %v848
        %v2774 = vpop.f32.mrf.mxu0
        %v2775 = vadd.f32 0.0, %v2774
        %v2776 = vpop.f32.mrf.mxu0
        %v2777 = vpop.f32.mrf.mxu0
        %v2778 = vadd.f32 0.0, %v2777
        %v2779 = vpop.f32.mrf.mxu0
        %2780 = vmatprep.mubr.bf16.mxu0 0
        %2781 = vmatmul.mubr.bf16.gmra.mxu0 %v849
        %v2782 = vpop.f32.mrf.mxu0
        %v2783 = vadd.f32 0.0, %v2782
        %v2784 = vpop.f32.mrf.mxu0
        %v2785 = vpop.f32.mrf.mxu0
        %v2786 = vadd.f32 0.0, %v2785
        %v2787 = vpop.f32.mrf.mxu0
        %2788 = vmatprep.mubr.bf16.mxu0 0
        %2789 = vmatmul.mubr.bf16.gmra.mxu0 %v850
        %v2790 = vpop.f32.mrf.mxu0
        %v2791 = vadd.f32 0.0, %v2790
        %v2792 = vpop.f32.mrf.mxu0
        %v2793 = vpop.f32.mrf.mxu0
        %v2794 = vadd.f32 0.0, %v2793
        %v2795 = vpop.f32.mrf.mxu0
        %2796 = vmatprep.mubr.bf16.mxu0 0
        %2797 = vmatmul.mubr.bf16.gmra.mxu0 %v851
        %v2798 = vpop.f32.mrf.mxu0
        %v2799 = vadd.f32 0.0, %v2798
        %v2800 = vpop.f32.mrf.mxu0
        %v2801 = vpop.f32.mrf.mxu0
        %v2802 = vadd.f32 0.0, %v2801
        %v2803 = vpop.f32.mrf.mxu0
        %2804 = vmatprep.mubr.bf16.mxu0 0
        %2805 = vmatmul.mubr.bf16.gmra.mxu0 %v852
        %v2806 = vpop.f32.mrf.mxu0
        %v2807 = vadd.f32 0.0, %v2806
        %v2808 = vpop.f32.mrf.mxu0
        %v2809 = vpop.f32.mrf.mxu0
        %v2810 = vadd.f32 0.0, %v2809
        %v2811 = vpop.f32.mrf.mxu0
        %2812 = vmatprep.mubr.bf16.mxu0 0
        %2813 = vmatmul.mubr.bf16.gmra.mxu0 %v853
        %v2814 = vpop.f32.mrf.mxu0
        %v2815 = vadd.f32 0.0, %v2814
        %v2816 = vpop.f32.mrf.mxu0
        %v2817 = vpop.f32.mrf.mxu0
        %v2818 = vadd.f32 0.0, %v2817
        %v2819 = vpop.f32.mrf.mxu0
        %2820 = vmatprep.mubr.bf16.mxu0 0
        %2821 = vmatmul.mubr.bf16.gmra.mxu0 %v854
        %v2822 = vpop.f32.mrf.mxu0
        %v2823 = vadd.f32 0.0, %v2822
        %v2824 = vpop.f32.mrf.mxu0
        %v2825 = vpop.f32.mrf.mxu0
        %v2826 = vadd.f32 0.0, %v2825
        %v2827 = vpop.f32.mrf.mxu0
        %2828 = vmatprep.mubr.bf16.mxu0 0
        %2829 = vmatmul.mubr.bf16.gmra.mxu0 %v855
        %v2830 = vpop.f32.mrf.mxu0
        %v2831 = vadd.f32 0.0, %v2830
        %v2832 = vpop.f32.mrf.mxu0
        %v2833 = vpop.f32.mrf.mxu0
        %v2834 = vadd.f32 0.0, %v2833
        %v2835 = vpop.f32.mrf.mxu0
        %2836 = vmatprep.mubr.bf16.mxu0 0
        %2837 = vmatmul.mubr.bf16.gmra.mxu0 %v856
        %v2838 = vpop.f32.mrf.mxu0
        %v2839 = vadd.f32 0.0, %v2838
        %v2840 = vpop.f32.mrf.mxu0
        %v2841 = vpop.f32.mrf.mxu0
        %v2842 = vadd.f32 0.0, %v2841
        %v2843 = vpop.f32.mrf.mxu0
        %2844 = vmatprep.mubr.bf16.mxu0 0
        %2845 = vmatmul.mubr.bf16.gmra.mxu0 %v857
        %v2846 = vpop.f32.mrf.mxu0
        %v2847 = vadd.f32 0.0, %v2846
        %v2848 = vpop.f32.mrf.mxu0
        %v2849 = vpop.f32.mrf.mxu0
        %v2850 = vadd.f32 0.0, %v2849
        %v2851 = vpop.f32.mrf.mxu0
        %2852 = vmatprep.mubr.bf16.mxu0 0
        %2853 = vmatmul.mubr.bf16.gmra.mxu0 %v858
        %v2854 = vpop.f32.mrf.mxu0
        %v2855 = vadd.f32 0.0, %v2854
        %v2856 = vpop.f32.mrf.mxu0
        %v2857 = vpop.f32.mrf.mxu0
        %v2858 = vadd.f32 0.0, %v2857
        %v2859 = vpop.f32.mrf.mxu0
        %2860 = vmatprep.mubr.bf16.mxu0 0
        %2861 = vmatmul.mubr.bf16.gmra.mxu0 %v859
        %v2862 = vpop.f32.mrf.mxu0
        %v2863 = vadd.f32 0.0, %v2862
        %v2864 = vpop.f32.mrf.mxu0
        %v2865 = vpop.f32.mrf.mxu0
        %v2866 = vadd.f32 0.0, %v2865
        %v2867 = vpop.f32.mrf.mxu0
        %2868 = vmatprep.mubr.bf16.mxu0 0
        %2869 = vmatmul.mubr.bf16.gmra.mxu0 %v860
        %v2870 = vpop.f32.mrf.mxu0
        %v2871 = vadd.f32 0.0, %v2870
        %v2872 = vpop.f32.mrf.mxu0
        %v2873 = vpop.f32.mrf.mxu0
        %v2874 = vadd.f32 0.0, %v2873
        %v2875 = vpop.f32.mrf.mxu0
        %2876 = vdwg.mxu0
        %v2877 = vadd.f32 %v2620, %v2751
        %v2878 = vadd.f32 %v2621, %v2754
        %v2879 = vadd.f32 %v2622, %v2759
        %v2880 = vadd.f32 %v2623, %v2762
        %v2881 = vadd.f32 %v2624, %v2767
        %v2882 = vadd.f32 %v2625, %v2770
        %v2883 = vadd.f32 %v2626, %v2775
        %v2884 = vadd.f32 %v2627, %v2778
        %v2885 = vadd.f32 %v2628, %v2783
        %v2886 = vadd.f32 %v2629, %v2786
        %v2887 = vadd.f32 %v2630, %v2791
        %v2888 = vadd.f32 %v2631, %v2794
        %v2889 = vadd.f32 %v2632, %v2799
        %v2890 = vadd.f32 %v2633, %v2802
        %v2891 = vadd.f32 %v2634, %v2807
        %v2892 = vadd.f32 %v2635, %v2810
        %v2893 = vadd.f32 %v2636, %v2815
        %v2894 = vadd.f32 %v2637, %v2818
        %v2895 = vadd.f32 %v2638, %v2823
        %v2896 = vadd.f32 %v2639, %v2826
        %v2897 = vadd.f32 %v2640, %v2831
        %v2898 = vadd.f32 %v2641, %v2834
        %v2899 = vadd.f32 %v2642, %v2839
        %v2900 = vadd.f32 %v2643, %v2842
        %v2901 = vadd.f32 %v2644, %v2847
        %v2902 = vadd.f32 %v2645, %v2850
        %v2903 = vadd.f32 %v2646, %v2855
        %v2904 = vadd.f32 %v2647, %v2858
        %v2905 = vadd.f32 %v2648, %v2863
        %v2906 = vadd.f32 %v2649, %v2866
        %v2907 = vadd.f32 %v2650, %v2871
        %v2908 = vadd.f32 %v2651, %v2874
        %v2909 = vld [vmem:[%s2394 + $0x80] sm:$0xf]
        %v2910 = vld [vmem:[%s2394 + $0x84] sm:$0xf]
        %v2911 = vld [vmem:[%s2394 + $0x88] sm:$0xf]
        %v2912 = vld [vmem:[%s2394 + $0x8c] sm:$0xf]
        %v2913 = vld [vmem:[%s2394 + $0x90] sm:$0xf]
        %v2914 = vld [vmem:[%s2394 + $0x94] sm:$0xf]
        %v2915 = vld [vmem:[%s2394 + $0x98] sm:$0xf]
        %v2916 = vld [vmem:[%s2394 + $0x9c] sm:$0xf]
        %v2917 = vld [vmem:[%s2394 + $0xa0] sm:$0xf]
        %v2918 = vld [vmem:[%s2394 + $0xa4] sm:$0xf]
        %v2919 = vld [vmem:[%s2394 + $0xa8] sm:$0xf]
        %v2920 = vld [vmem:[%s2394 + $0xac] sm:$0xf]
        %v2921 = vld [vmem:[%s2394 + $0xb0] sm:$0xf]
        %v2922 = vld [vmem:[%s2394 + $0xb4] sm:$0xf]
        %v2923 = vld [vmem:[%s2394 + $0xb8] sm:$0xf]
        %v2924 = vld [vmem:[%s2394 + $0xbc] sm:$0xf]
        %v2941 = vunpack.c.l.b16 %v2909
        %v2942 = vunpack.c.l.b16 %v2910
        %v2943 = vunpack.c.l.b16 %v2911
        %v2944 = vunpack.c.l.b16 %v2912
        %v2945 = vunpack.c.l.b16 %v2913
        %v2946 = vunpack.c.l.b16 %v2914
        %v2947 = vunpack.c.l.b16 %v2915
        %v2948 = vunpack.c.l.b16 %v2916
        %v2949 = vunpack.c.l.b16 %v2917
        %v2950 = vunpack.c.l.b16 %v2918
        %v2951 = vunpack.c.l.b16 %v2919
        %v2952 = vunpack.c.l.b16 %v2920
        %v2953 = vunpack.c.l.b16 %v2921
        %v2954 = vunpack.c.l.b16 %v2922
        %v2955 = vunpack.c.l.b16 %v2923
        %v2956 = vunpack.c.l.b16 %v2924
        %v2957 = vpack.c.b16 %v2942, %v2941
        %v2958 = vpack.c.b16 %v2944, %v2943
        %v2959 = vpack.c.b16 %v2946, %v2945
        %v2960 = vpack.c.b16 %v2948, %v2947
        %v2961 = vpack.c.b16 %v2950, %v2949
        %v2962 = vpack.c.b16 %v2952, %v2951
        %v2963 = vpack.c.b16 %v2954, %v2953
        %v2964 = vpack.c.b16 %v2956, %v2955
        %2973 = vmatprep.subr.bf16.mxu0 0
        %2974 = vmatpush1.bf16.msra.mxu0 %v2964
        %2975 = vmatprep.subr.bf16.mxu0 0
        %2976 = vmatpush1.bf16.msra.mxu0 %v2963
        %2977 = vmatprep.subr.bf16.mxu0 0
        %2978 = vmatpush1.bf16.msra.mxu0 %v2962
        %2979 = vmatprep.subr.bf16.mxu0 0
        %2980 = vmatpush1.bf16.msra.mxu0 %v2961
        %2981 = vmatprep.subr.bf16.mxu0 0
        %2982 = vmatpush1.bf16.msra.mxu0 %v2960
        %2983 = vmatprep.subr.bf16.mxu0 0
        %2984 = vmatpush1.bf16.msra.mxu0 %v2959
        %2985 = vmatprep.subr.bf16.mxu0 0
        %2986 = vmatpush1.bf16.msra.mxu0 %v2958
        %2987 = vmatprep.subr.bf16.mxu0 0
        %2988 = vmatpush1.bf16.msra.mxu0 %v2957
        %2989 = vmatprep.subr.bf16.mxu0 0
        %2990 = vmatpush2.bf16.msra.mxu0 0
        %2991 = vmatprep.subr.bf16.mxu0 0
        %2992 = vmatpush2.bf16.msra.mxu0 0
        %2993 = vmatprep.subr.bf16.mxu0 0
        %2994 = vmatpush2.bf16.msra.mxu0 0
        %2995 = vmatprep.subr.bf16.mxu0 0
        %2996 = vmatpush2.bf16.msra.mxu0 0
        %2997 = vmatprep.subr.bf16.mxu0 0
        %2998 = vmatpush2.bf16.msra.mxu0 0
        %2999 = vmatprep.subr.bf16.mxu0 0
        %3000 = vmatpush2.bf16.msra.mxu0 0
        %3001 = vmatprep.subr.bf16.mxu0 0
        %3002 = vmatpush2.bf16.msra.mxu0 0
        %3003 = vmatprep.subr.bf16.mxu0 0
        %3004 = vmatpush2.bf16.msra.mxu0 0
        %3005 = vmatprep.mubr.bf16.mxu0 0
        %3006 = vmatmul.mubr.bf16.gmra.mxu0 %v899
        %v3007 = vpop.f32.mrf.mxu0
        %v3008 = vadd.f32 0.0, %v3007
        %v3009 = vpop.f32.mrf.mxu0
        %v3010 = vpop.f32.mrf.mxu0
        %v3011 = vadd.f32 0.0, %v3010
        %v3012 = vpop.f32.mrf.mxu0
        %3013 = vmatprep.mubr.bf16.mxu0 0
        %3014 = vmatmul.mubr.bf16.gmra.mxu0 %v900
        %v3015 = vpop.f32.mrf.mxu0
        %v3016 = vadd.f32 0.0, %v3015
        %v3017 = vpop.f32.mrf.mxu0
        %v3018 = vpop.f32.mrf.mxu0
        %v3019 = vadd.f32 0.0, %v3018
        %v3020 = vpop.f32.mrf.mxu0
        %3021 = vmatprep.mubr.bf16.mxu0 0
        %3022 = vmatmul.mubr.bf16.gmra.mxu0 %v901
        %v3023 = vpop.f32.mrf.mxu0
        %v3024 = vadd.f32 0.0, %v3023
        %v3025 = vpop.f32.mrf.mxu0
        %v3026 = vpop.f32.mrf.mxu0
        %v3027 = vadd.f32 0.0, %v3026
        %v3028 = vpop.f32.mrf.mxu0
        %3029 = vmatprep.mubr.bf16.mxu0 0
        %3030 = vmatmul.mubr.bf16.gmra.mxu0 %v902
        %v3031 = vpop.f32.mrf.mxu0
        %v3032 = vadd.f32 0.0, %v3031
        %v3033 = vpop.f32.mrf.mxu0
        %v3034 = vpop.f32.mrf.mxu0
        %v3035 = vadd.f32 0.0, %v3034
        %v3036 = vpop.f32.mrf.mxu0
        %3037 = vmatprep.mubr.bf16.mxu0 0
        %3038 = vmatmul.mubr.bf16.gmra.mxu0 %v903
        %v3039 = vpop.f32.mrf.mxu0
        %v3040 = vadd.f32 0.0, %v3039
        %v3041 = vpop.f32.mrf.mxu0
        %v3042 = vpop.f32.mrf.mxu0
        %v3043 = vadd.f32 0.0, %v3042
        %v3044 = vpop.f32.mrf.mxu0
        %3045 = vmatprep.mubr.bf16.mxu0 0
        %3046 = vmatmul.mubr.bf16.gmra.mxu0 %v904
        %v3047 = vpop.f32.mrf.mxu0
        %v3048 = vadd.f32 0.0, %v3047
        %v3049 = vpop.f32.mrf.mxu0
        %v3050 = vpop.f32.mrf.mxu0
        %v3051 = vadd.f32 0.0, %v3050
        %v3052 = vpop.f32.mrf.mxu0
        %3053 = vmatprep.mubr.bf16.mxu0 0
        %3054 = vmatmul.mubr.bf16.gmra.mxu0 %v905
        %v3055 = vpop.f32.mrf.mxu0
        %v3056 = vadd.f32 0.0, %v3055
        %v3057 = vpop.f32.mrf.mxu0
        %v3058 = vpop.f32.mrf.mxu0
        %v3059 = vadd.f32 0.0, %v3058
        %v3060 = vpop.f32.mrf.mxu0
        %3061 = vmatprep.mubr.bf16.mxu0 0
        %3062 = vmatmul.mubr.bf16.gmra.mxu0 %v906
        %v3063 = vpop.f32.mrf.mxu0
        %v3064 = vadd.f32 0.0, %v3063
        %v3065 = vpop.f32.mrf.mxu0
        %v3066 = vpop.f32.mrf.mxu0
        %v3067 = vadd.f32 0.0, %v3066
        %v3068 = vpop.f32.mrf.mxu0
        %3069 = vmatprep.mubr.bf16.mxu0 0
        %3070 = vmatmul.mubr.bf16.gmra.mxu0 %v907
        %v3071 = vpop.f32.mrf.mxu0
        %v3072 = vadd.f32 0.0, %v3071
        %v3073 = vpop.f32.mrf.mxu0
        %v3074 = vpop.f32.mrf.mxu0
        %v3075 = vadd.f32 0.0, %v3074
        %v3076 = vpop.f32.mrf.mxu0
        %3077 = vmatprep.mubr.bf16.mxu0 0
        %3078 = vmatmul.mubr.bf16.gmra.mxu0 %v908
        %v3079 = vpop.f32.mrf.mxu0
        %v3080 = vadd.f32 0.0, %v3079
        %v3081 = vpop.f32.mrf.mxu0
        %v3082 = vpop.f32.mrf.mxu0
        %v3083 = vadd.f32 0.0, %v3082
        %v3084 = vpop.f32.mrf.mxu0
        %3085 = vmatprep.mubr.bf16.mxu0 0
        %3086 = vmatmul.mubr.bf16.gmra.mxu0 %v909
        %v3087 = vpop.f32.mrf.mxu0
        %v3088 = vadd.f32 0.0, %v3087
        %v3089 = vpop.f32.mrf.mxu0
        %v3090 = vpop.f32.mrf.mxu0
        %v3091 = vadd.f32 0.0, %v3090
        %v3092 = vpop.f32.mrf.mxu0
        %3093 = vmatprep.mubr.bf16.mxu0 0
        %3094 = vmatmul.mubr.bf16.gmra.mxu0 %v910
        %v3095 = vpop.f32.mrf.mxu0
        %v3096 = vadd.f32 0.0, %v3095
        %v3097 = vpop.f32.mrf.mxu0
        %v3098 = vpop.f32.mrf.mxu0
        %v3099 = vadd.f32 0.0, %v3098
        %v3100 = vpop.f32.mrf.mxu0
        %3101 = vmatprep.mubr.bf16.mxu0 0
        %3102 = vmatmul.mubr.bf16.gmra.mxu0 %v911
        %v3103 = vpop.f32.mrf.mxu0
        %v3104 = vadd.f32 0.0, %v3103
        %v3105 = vpop.f32.mrf.mxu0
        %v3106 = vpop.f32.mrf.mxu0
        %v3107 = vadd.f32 0.0, %v3106
        %v3108 = vpop.f32.mrf.mxu0
        %3109 = vmatprep.mubr.bf16.mxu0 0
        %3110 = vmatmul.mubr.bf16.gmra.mxu0 %v912
        %v3111 = vpop.f32.mrf.mxu0
        %v3112 = vadd.f32 0.0, %v3111
        %v3113 = vpop.f32.mrf.mxu0
        %v3114 = vpop.f32.mrf.mxu0
        %v3115 = vadd.f32 0.0, %v3114
        %v3116 = vpop.f32.mrf.mxu0
        %3117 = vmatprep.mubr.bf16.mxu0 0
        %3118 = vmatmul.mubr.bf16.gmra.mxu0 %v913
        %v3119 = vpop.f32.mrf.mxu0
        %v3120 = vadd.f32 0.0, %v3119
        %v3121 = vpop.f32.mrf.mxu0
        %v3122 = vpop.f32.mrf.mxu0
        %v3123 = vadd.f32 0.0, %v3122
        %v3124 = vpop.f32.mrf.mxu0
        %3125 = vmatprep.mubr.bf16.mxu0 0
        %3126 = vmatmul.mubr.bf16.gmra.mxu0 %v914
        %v3127 = vpop.f32.mrf.mxu0
        %v3128 = vadd.f32 0.0, %v3127
        %v3129 = vpop.f32.mrf.mxu0
        %v3130 = vpop.f32.mrf.mxu0
        %v3131 = vadd.f32 0.0, %v3130
        %v3132 = vpop.f32.mrf.mxu0
        %3133 = vdwg.mxu0
        %v3134 = vadd.f32 %v2877, %v3008
        %v3135 = vadd.f32 %v2878, %v3011
        %v3136 = vadd.f32 %v2879, %v3016
        %v3137 = vadd.f32 %v2880, %v3019
        %v3138 = vadd.f32 %v2881, %v3024
        %v3139 = vadd.f32 %v2882, %v3027
        %v3140 = vadd.f32 %v2883, %v3032
        %v3141 = vadd.f32 %v2884, %v3035
        %v3142 = vadd.f32 %v2885, %v3040
        %v3143 = vadd.f32 %v2886, %v3043
        %v3144 = vadd.f32 %v2887, %v3048
        %v3145 = vadd.f32 %v2888, %v3051
        %v3146 = vadd.f32 %v2889, %v3056
        %v3147 = vadd.f32 %v2890, %v3059
        %v3148 = vadd.f32 %v2891, %v3064
        %v3149 = vadd.f32 %v2892, %v3067
        %v3150 = vadd.f32 %v2893, %v3072
        %v3151 = vadd.f32 %v2894, %v3075
        %v3152 = vadd.f32 %v2895, %v3080
        %v3153 = vadd.f32 %v2896, %v3083
        %v3154 = vadd.f32 %v2897, %v3088
        %v3155 = vadd.f32 %v2898, %v3091
        %v3156 = vadd.f32 %v2899, %v3096
        %v3157 = vadd.f32 %v2900, %v3099
        %v3158 = vadd.f32 %v2901, %v3104
        %v3159 = vadd.f32 %v2902, %v3107
        %v3160 = vadd.f32 %v2903, %v3112
        %v3161 = vadd.f32 %v2904, %v3115
        %v3162 = vadd.f32 %v2905, %v3120
        %v3163 = vadd.f32 %v2906, %v3123
        %v3164 = vadd.f32 %v2907, %v3128
        %v3165 = vadd.f32 %v2908, %v3131
        %v3166 = vlaneseq
        %v3167 = vand.u32 %v3166, 127
        %vm3168 = vcmp.lt.s32.totalorder %v3167, 0
        %v3169 = vsub.s32 0, %v3167
        %v3170 = vsel %vm3168, %v3169, %v3167
        %v3171 = vshrl.u32 %v3170, 1
        %v3172 = vand.u32 %v3170, 1
        %v3173 = vsub.s32 0, %v3172
        %v3174 = vsel %vm3168, %v3173, %v3172
        %vm3175 = vcmp.ne.s32.totalorder %v3174, 0
        %vm3176 = vcmp.lt.s32.totalorder %v3174, 0
        %vm3177 = vmand %vm3176, %vm3175
        %v3178 = vadd.s32 %v3174, 2
        %v3179 = vsel %vm3177, %v3178, %v3174
        %vm3180 = vcmp.eq.s32.totalorder %v3179, 0
        %v3181 = vsel %vm3180, 1, 0
        %vm3182 = vcmp.eq.s32.totalorder %v3181, 1
        %3215 = vrot.lane.b32.xlu0 %v3134, 127
        %v3216 = vpop.permute.xlu0 %3215
        %3217 = vrot.lane.b32.xlu0 %v3135, 127
        %v3218 = vpop.permute.xlu0 %3217
        %3219 = vrot.lane.b32.xlu0 %v3136, 127
        %v3220 = vpop.permute.xlu0 %3219
        %3221 = vrot.lane.b32.xlu0 %v3137, 127
        %v3222 = vpop.permute.xlu0 %3221
        %3223 = vrot.lane.b32.xlu0 %v3138, 127
        %v3224 = vpop.permute.xlu0 %3223
        %3225 = vrot.lane.b32.xlu0 %v3139, 127
        %v3226 = vpop.permute.xlu0 %3225
        %3227 = vrot.lane.b32.xlu0 %v3140, 127
        %v3228 = vpop.permute.xlu0 %3227
        %3229 = vrot.lane.b32.xlu0 %v3141, 127
        %v3230 = vpop.permute.xlu0 %3229
        %3231 = vrot.lane.b32.xlu0 %v3142, 127
        %v3232 = vpop.permute.xlu0 %3231
        %3233 = vrot.lane.b32.xlu0 %v3143, 127
        %v3234 = vpop.permute.xlu0 %3233
        %3235 = vrot.lane.b32.xlu0 %v3144, 127
        %v3236 = vpop.permute.xlu0 %3235
        %3237 = vrot.lane.b32.xlu0 %v3145, 127
        %v3238 = vpop.permute.xlu0 %3237
        %3239 = vrot.lane.b32.xlu0 %v3146, 127
        %v3240 = vpop.permute.xlu0 %3239
        %3241 = vrot.lane.b32.xlu0 %v3147, 127
        %v3242 = vpop.permute.xlu0 %3241
        %3243 = vrot.lane.b32.xlu0 %v3148, 127
        %v3244 = vpop.permute.xlu0 %3243
        %3245 = vrot.lane.b32.xlu0 %v3149, 127
        %v3246 = vpop.permute.xlu0 %3245
        %3247 = vrot.lane.b32.xlu0 %v3150, 127
        %v3248 = vpop.permute.xlu0 %3247
        %3249 = vrot.lane.b32.xlu0 %v3151, 127
        %v3250 = vpop.permute.xlu0 %3249
        %3251 = vrot.lane.b32.xlu0 %v3152, 127
        %v3252 = vpop.permute.xlu0 %3251
        %3253 = vrot.lane.b32.xlu0 %v3153, 127
        %v3254 = vpop.permute.xlu0 %3253
        %3255 = vrot.lane.b32.xlu0 %v3154, 127
        %v3256 = vpop.permute.xlu0 %3255
        %3257 = vrot.lane.b32.xlu0 %v3155, 127
        %v3258 = vpop.permute.xlu0 %3257
        %3259 = vrot.lane.b32.xlu0 %v3156, 127
        %v3260 = vpop.permute.xlu0 %3259
        %3261 = vrot.lane.b32.xlu0 %v3157, 127
        %v3262 = vpop.permute.xlu0 %3261
        %3263 = vrot.lane.b32.xlu0 %v3158, 127
        %v3264 = vpop.permute.xlu0 %3263
        %3265 = vrot.lane.b32.xlu0 %v3159, 127
        %v3266 = vpop.permute.xlu0 %3265
        %3267 = vrot.lane.b32.xlu0 %v3160, 127
        %v3268 = vpop.permute.xlu0 %3267
        %3269 = vrot.lane.b32.xlu0 %v3161, 127
        %v3270 = vpop.permute.xlu0 %3269
        %3271 = vrot.lane.b32.xlu0 %v3162, 127
        %v3272 = vpop.permute.xlu0 %3271
        %3273 = vrot.lane.b32.xlu0 %v3163, 127
        %v3274 = vpop.permute.xlu0 %3273
        %3275 = vrot.lane.b32.xlu0 %v3164, 127
        %v3276 = vpop.permute.xlu0 %3275
        %3277 = vrot.lane.b32.xlu0 %v3165, 127
        %v3278 = vpop.permute.xlu0 %3277
        %3311 = vrot.lane.b32.xlu0 %v3134, 1
        %v3312 = vpop.permute.xlu0 %3311
        %3313 = vrot.lane.b32.xlu0 %v3135, 1
        %v3314 = vpop.permute.xlu0 %3313
        %3315 = vrot.lane.b32.xlu0 %v3136, 1
        %v3316 = vpop.permute.xlu0 %3315
        %3317 = vrot.lane.b32.xlu0 %v3137, 1
        %v3318 = vpop.permute.xlu0 %3317
        %3319 = vrot.lane.b32.xlu0 %v3138, 1
        %v3320 = vpop.permute.xlu0 %3319
        %3321 = vrot.lane.b32.xlu0 %v3139, 1
        %v3322 = vpop.permute.xlu0 %3321
        %3323 = vrot.lane.b32.xlu0 %v3140, 1
        %v3324 = vpop.permute.xlu0 %3323
        %3325 = vrot.lane.b32.xlu0 %v3141, 1
        %v3326 = vpop.permute.xlu0 %3325
        %3327 = vrot.lane.b32.xlu0 %v3142, 1
        %v3328 = vpop.permute.xlu0 %3327
        %3329 = vrot.lane.b32.xlu0 %v3143, 1
        %v3330 = vpop.permute.xlu0 %3329
        %3331 = vrot.lane.b32.xlu0 %v3144, 1
        %v3332 = vpop.permute.xlu0 %3331
        %3333 = vrot.lane.b32.xlu0 %v3145, 1
        %v3334 = vpop.permute.xlu0 %3333
        %3335 = vrot.lane.b32.xlu0 %v3146, 1
        %v3336 = vpop.permute.xlu0 %3335
        %3337 = vrot.lane.b32.xlu0 %v3147, 1
        %v3338 = vpop.permute.xlu0 %3337
        %3339 = vrot.lane.b32.xlu0 %v3148, 1
        %v3340 = vpop.permute.xlu0 %3339
        %3341 = vrot.lane.b32.xlu0 %v3149, 1
        %v3342 = vpop.permute.xlu0 %3341
        %3343 = vrot.lane.b32.xlu0 %v3150, 1
        %v3344 = vpop.permute.xlu0 %3343
        %3345 = vrot.lane.b32.xlu0 %v3151, 1
        %v3346 = vpop.permute.xlu0 %3345
        %3347 = vrot.lane.b32.xlu0 %v3152, 1
        %v3348 = vpop.permute.xlu0 %3347
        %3349 = vrot.lane.b32.xlu0 %v3153, 1
        %v3350 = vpop.permute.xlu0 %3349
        %3351 = vrot.lane.b32.xlu0 %v3154, 1
        %v3352 = vpop.permute.xlu0 %3351
        %3353 = vrot.lane.b32.xlu0 %v3155, 1
        %v3354 = vpop.permute.xlu0 %3353
        %3355 = vrot.lane.b32.xlu0 %v3156, 1
        %v3356 = vpop.permute.xlu0 %3355
        %3357 = vrot.lane.b32.xlu0 %v3157, 1
        %v3358 = vpop.permute.xlu0 %3357
        %3359 = vrot.lane.b32.xlu0 %v3158, 1
        %v3360 = vpop.permute.xlu0 %3359
        %3361 = vrot.lane.b32.xlu0 %v3159, 1
        %v3362 = vpop.permute.xlu0 %3361
        %3363 = vrot.lane.b32.xlu0 %v3160, 1
        %v3364 = vpop.permute.xlu0 %3363
        %3365 = vrot.lane.b32.xlu0 %v3161, 1
        %v3366 = vpop.permute.xlu0 %3365
        %3367 = vrot.lane.b32.xlu0 %v3162, 1
        %v3368 = vpop.permute.xlu0 %3367
        %3369 = vrot.lane.b32.xlu0 %v3163, 1
        %v3370 = vpop.permute.xlu0 %3369
        %3371 = vrot.lane.b32.xlu0 %v3164, 1
        %v3372 = vpop.permute.xlu0 %3371
        %3373 = vrot.lane.b32.xlu0 %v3165, 1
        %v3374 = vpop.permute.xlu0 %3373
        %v3407 = vsel %vm3182, %v3216, %v3312
        %v3408 = vsel %vm3182, %v3218, %v3314
        %v3409 = vsel %vm3182, %v3220, %v3316
        %v3410 = vsel %vm3182, %v3222, %v3318
        %v3411 = vsel %vm3182, %v3224, %v3320
        %v3412 = vsel %vm3182, %v3226, %v3322
        %v3413 = vsel %vm3182, %v3228, %v3324
        %v3414 = vsel %vm3182, %v3230, %v3326
        %v3415 = vsel %vm3182, %v3232, %v3328
        %v3416 = vsel %vm3182, %v3234, %v3330
        %v3417 = vsel %vm3182, %v3236, %v3332
        %v3418 = vsel %vm3182, %v3238, %v3334
        %v3419 = vsel %vm3182, %v3240, %v3336
        %v3420 = vsel %vm3182, %v3242, %v3338
        %v3421 = vsel %vm3182, %v3244, %v3340
        %v3422 = vsel %vm3182, %v3246, %v3342
        %v3423 = vsel %vm3182, %v3248, %v3344
        %v3424 = vsel %vm3182, %v3250, %v3346
        %v3425 = vsel %vm3182, %v3252, %v3348
        %v3426 = vsel %vm3182, %v3254, %v3350
        %v3427 = vsel %vm3182, %v3256, %v3352
        %v3428 = vsel %vm3182, %v3258, %v3354
        %v3429 = vsel %vm3182, %v3260, %v3356
        %v3430 = vsel %vm3182, %v3262, %v3358
        %v3431 = vsel %vm3182, %v3264, %v3360
        %v3432 = vsel %vm3182, %v3266, %v3362
        %v3433 = vsel %vm3182, %v3268, %v3364
        %v3434 = vsel %vm3182, %v3270, %v3366
        %v3435 = vsel %vm3182, %v3272, %v3368
        %v3436 = vsel %vm3182, %v3274, %v3370
        %v3437 = vsel %vm3182, %v3276, %v3372
        %v3438 = vsel %vm3182, %v3278, %v3374
        %v3439 = vsub.f32 %v3134, %v3407
        %v3440 = vsub.f32 %v3135, %v3408
        %v3441 = vsub.f32 %v3136, %v3409
        %v3442 = vsub.f32 %v3137, %v3410
        %v3443 = vsub.f32 %v3138, %v3411
        %v3444 = vsub.f32 %v3139, %v3412
        %v3445 = vsub.f32 %v3140, %v3413
        %v3446 = vsub.f32 %v3141, %v3414
        %v3447 = vsub.f32 %v3142, %v3415
        %v3448 = vsub.f32 %v3143, %v3416
        %v3449 = vsub.f32 %v3144, %v3417
        %v3450 = vsub.f32 %v3145, %v3418
        %v3451 = vsub.f32 %v3146, %v3419
        %v3452 = vsub.f32 %v3147, %v3420
        %v3453 = vsub.f32 %v3148, %v3421
        %v3454 = vsub.f32 %v3149, %v3422
        %v3455 = vsub.f32 %v3150, %v3423
        %v3456 = vsub.f32 %v3151, %v3424
        %v3457 = vsub.f32 %v3152, %v3425
        %v3458 = vsub.f32 %v3153, %v3426
        %v3459 = vsub.f32 %v3154, %v3427
        %v3460 = vsub.f32 %v3155, %v3428
        %v3461 = vsub.f32 %v3156, %v3429
        %v3462 = vsub.f32 %v3157, %v3430
        %v3463 = vsub.f32 %v3158, %v3431
        %v3464 = vsub.f32 %v3159, %v3432
        %v3465 = vsub.f32 %v3160, %v3433
        %v3466 = vsub.f32 %v3161, %v3434
        %v3467 = vsub.f32 %v3162, %v3435
        %v3468 = vsub.f32 %v3163, %v3436
        %v3469 = vsub.f32 %v3164, %v3437
        %v3470 = vsub.f32 %v3165, %v3438
        %v3471 = vmul.f32 %v3439, 0.5
        %v3472 = vmul.f32 %v3440, 0.5
        %v3473 = vmul.f32 %v3441, 0.5
        %v3474 = vmul.f32 %v3442, 0.5
        %v3475 = vmul.f32 %v3443, 0.5
        %v3476 = vmul.f32 %v3444, 0.5
        %v3477 = vmul.f32 %v3445, 0.5
        %v3478 = vmul.f32 %v3446, 0.5
        %v3479 = vmul.f32 %v3447, 0.5
        %v3480 = vmul.f32 %v3448, 0.5
        %v3481 = vmul.f32 %v3449, 0.5
        %v3482 = vmul.f32 %v3450, 0.5
        %v3483 = vmul.f32 %v3451, 0.5
        %v3484 = vmul.f32 %v3452, 0.5
        %v3485 = vmul.f32 %v3453, 0.5
        %v3486 = vmul.f32 %v3454, 0.5
        %v3487 = vmul.f32 %v3455, 0.5
        %v3488 = vmul.f32 %v3456, 0.5
        %v3489 = vmul.f32 %v3457, 0.5
        %v3490 = vmul.f32 %v3458, 0.5
        %v3491 = vmul.f32 %v3459, 0.5
        %v3492 = vmul.f32 %v3460, 0.5
        %v3493 = vmul.f32 %v3461, 0.5
        %v3494 = vmul.f32 %v3462, 0.5
        %v3495 = vmul.f32 %v3463, 0.5
        %v3496 = vmul.f32 %v3464, 0.5
        %v3497 = vmul.f32 %v3465, 0.5
        %v3498 = vmul.f32 %v3466, 0.5
        %v3499 = vmul.f32 %v3467, 0.5
        %v3500 = vmul.f32 %v3468, 0.5
        %v3501 = vmul.f32 %v3469, 0.5
        %v3502 = vmul.f32 %v3470, 0.5
        %v3503 = vmul.f32 %v3439, %v3439
        %v3504 = vmul.f32 %v3440, %v3440
        %v3505 = vmul.f32 %v3441, %v3441
        %v3506 = vmul.f32 %v3442, %v3442
        %v3507 = vmul.f32 %v3443, %v3443
        %v3508 = vmul.f32 %v3444, %v3444
        %v3509 = vmul.f32 %v3445, %v3445
        %v3510 = vmul.f32 %v3446, %v3446
        %v3511 = vmul.f32 %v3447, %v3447
        %v3512 = vmul.f32 %v3448, %v3448
        %v3513 = vmul.f32 %v3449, %v3449
        %v3514 = vmul.f32 %v3450, %v3450
        %v3515 = vmul.f32 %v3451, %v3451
        %v3516 = vmul.f32 %v3452, %v3452
        %v3517 = vmul.f32 %v3453, %v3453
        %v3518 = vmul.f32 %v3454, %v3454
        %v3519 = vmul.f32 %v3455, %v3455
        %v3520 = vmul.f32 %v3456, %v3456
        %v3521 = vmul.f32 %v3457, %v3457
        %v3522 = vmul.f32 %v3458, %v3458
        %v3523 = vmul.f32 %v3459, %v3459
        %v3524 = vmul.f32 %v3460, %v3460
        %v3525 = vmul.f32 %v3461, %v3461
        %v3526 = vmul.f32 %v3462, %v3462
        %v3527 = vmul.f32 %v3463, %v3463
        %v3528 = vmul.f32 %v3464, %v3464
        %v3529 = vmul.f32 %v3465, %v3465
        %v3530 = vmul.f32 %v3466, %v3466
        %v3531 = vmul.f32 %v3467, %v3467
        %v3532 = vmul.f32 %v3468, %v3468
        %v3533 = vmul.f32 %v3469, %v3469
        %v3534 = vmul.f32 %v3470, %v3470
        %v3535 = vmul.f32 %v3503, 0.25
        %v3536 = vmul.f32 %v3504, 0.25
        %v3537 = vmul.f32 %v3505, 0.25
        %v3538 = vmul.f32 %v3506, 0.25
        %v3539 = vmul.f32 %v3507, 0.25
        %v3540 = vmul.f32 %v3508, 0.25
        %v3541 = vmul.f32 %v3509, 0.25
        %v3542 = vmul.f32 %v3510, 0.25
        %v3543 = vmul.f32 %v3511, 0.25
        %v3544 = vmul.f32 %v3512, 0.25
        %v3545 = vmul.f32 %v3513, 0.25
        %v3546 = vmul.f32 %v3514, 0.25
        %v3547 = vmul.f32 %v3515, 0.25
        %v3548 = vmul.f32 %v3516, 0.25
        %v3549 = vmul.f32 %v3517, 0.25
        %v3550 = vmul.f32 %v3518, 0.25
        %v3551 = vmul.f32 %v3519, 0.25
        %v3552 = vmul.f32 %v3520, 0.25
        %v3553 = vmul.f32 %v3521, 0.25
        %v3554 = vmul.f32 %v3522, 0.25
        %v3555 = vmul.f32 %v3523, 0.25
        %v3556 = vmul.f32 %v3524, 0.25
        %v3557 = vmul.f32 %v3525, 0.25
        %v3558 = vmul.f32 %v3526, 0.25
        %v3559 = vmul.f32 %v3527, 0.25
        %v3560 = vmul.f32 %v3528, 0.25
        %v3561 = vmul.f32 %v3529, 0.25
        %v3562 = vmul.f32 %v3530, 0.25
        %v3563 = vmul.f32 %v3531, 0.25
        %v3564 = vmul.f32 %v3532, 0.25
        %v3565 = vmul.f32 %v3533, 0.25
        %v3566 = vmul.f32 %v3534, 0.25
        %v3567 = vadd.f32 %v3535, 1e-05
        %v3568 = vadd.f32 %v3536, 1e-05
        %v3569 = vadd.f32 %v3537, 1e-05
        %v3570 = vadd.f32 %v3538, 1e-05
        %v3571 = vadd.f32 %v3539, 1e-05
        %v3572 = vadd.f32 %v3540, 1e-05
        %v3573 = vadd.f32 %v3541, 1e-05
        %v3574 = vadd.f32 %v3542, 1e-05
        %v3575 = vadd.f32 %v3543, 1e-05
        %v3576 = vadd.f32 %v3544, 1e-05
        %v3577 = vadd.f32 %v3545, 1e-05
        %v3578 = vadd.f32 %v3546, 1e-05
        %v3579 = vadd.f32 %v3547, 1e-05
        %v3580 = vadd.f32 %v3548, 1e-05
        %v3581 = vadd.f32 %v3549, 1e-05
        %v3582 = vadd.f32 %v3550, 1e-05
        %v3583 = vadd.f32 %v3551, 1e-05
        %v3584 = vadd.f32 %v3552, 1e-05
        %v3585 = vadd.f32 %v3553, 1e-05
        %v3586 = vadd.f32 %v3554, 1e-05
        %v3587 = vadd.f32 %v3555, 1e-05
        %v3588 = vadd.f32 %v3556, 1e-05
        %v3589 = vadd.f32 %v3557, 1e-05
        %v3590 = vadd.f32 %v3558, 1e-05
        %v3591 = vadd.f32 %v3559, 1e-05
        %v3592 = vadd.f32 %v3560, 1e-05
        %v3593 = vadd.f32 %v3561, 1e-05
        %v3594 = vadd.f32 %v3562, 1e-05
        %v3595 = vadd.f32 %v3563, 1e-05
        %v3596 = vadd.f32 %v3564, 1e-05
        %v3597 = vadd.f32 %v3565, 1e-05
        %v3598 = vadd.f32 %v3566, 1e-05
        %v3599 = vrsqrt.pop %v3567
        %v3600 = vrsqrt.pop %v3568
        %v3601 = vrsqrt.pop %v3569
        %v3602 = vrsqrt.pop %v3570
        %v3603 = vrsqrt.pop %v3571
        %v3604 = vrsqrt.pop %v3572
        %v3605 = vrsqrt.pop %v3573
        %v3606 = vrsqrt.pop %v3574
        %v3607 = vrsqrt.pop %v3575
        %v3608 = vrsqrt.pop %v3576
        %v3609 = vrsqrt.pop %v3577
        %v3610 = vrsqrt.pop %v3578
        %v3611 = vrsqrt.pop %v3579
        %v3612 = vrsqrt.pop %v3580
        %v3613 = vrsqrt.pop %v3581
        %v3614 = vrsqrt.pop %v3582
        %v3615 = vrsqrt.pop %v3583
        %v3616 = vrsqrt.pop %v3584
        %v3617 = vrsqrt.pop %v3585
        %v3618 = vrsqrt.pop %v3586
        %v3619 = vrsqrt.pop %v3587
        %v3620 = vrsqrt.pop %v3588
        %v3621 = vrsqrt.pop %v3589
        %v3622 = vrsqrt.pop %v3590
        %v3623 = vrsqrt.pop %v3591
        %v3624 = vrsqrt.pop %v3592
        %v3625 = vrsqrt.pop %v3593
        %v3626 = vrsqrt.pop %v3594
        %v3627 = vrsqrt.pop %v3595
        %v3628 = vrsqrt.pop %v3596
        %v3629 = vrsqrt.pop %v3597
        %v3630 = vrsqrt.pop %v3598
        %v3631 = vmul.f32 %v3471, %v3599
        %v3632 = vmul.f32 %v3472, %v3600
        %v3633 = vmul.f32 %v3473, %v3601
        %v3634 = vmul.f32 %v3474, %v3602
        %v3635 = vmul.f32 %v3475, %v3603
        %v3636 = vmul.f32 %v3476, %v3604
        %v3637 = vmul.f32 %v3477, %v3605
        %v3638 = vmul.f32 %v3478, %v3606
        %v3639 = vmul.f32 %v3479, %v3607
        %v3640 = vmul.f32 %v3480, %v3608
        %v3641 = vmul.f32 %v3481, %v3609
        %v3642 = vmul.f32 %v3482, %v3610
        %v3643 = vmul.f32 %v3483, %v3611
        %v3644 = vmul.f32 %v3484, %v3612
        %v3645 = vmul.f32 %v3485, %v3613
        %v3646 = vmul.f32 %v3486, %v3614
        %v3647 = vmul.f32 %v3487, %v3615
        %v3648 = vmul.f32 %v3488, %v3616
        %v3649 = vmul.f32 %v3489, %v3617
        %v3650 = vmul.f32 %v3490, %v3618
        %v3651 = vmul.f32 %v3491, %v3619
        %v3652 = vmul.f32 %v3492, %v3620
        %v3653 = vmul.f32 %v3493, %v3621
        %v3654 = vmul.f32 %v3494, %v3622
        %v3655 = vmul.f32 %v3495, %v3623
        %v3656 = vmul.f32 %v3496, %v3624
        %v3657 = vmul.f32 %v3497, %v3625
        %v3658 = vmul.f32 %v3498, %v3626
        %v3659 = vmul.f32 %v3499, %v3627
        %v3660 = vmul.f32 %v3500, %v3628
        %v3661 = vmul.f32 %v3501, %v3629
        %v3662 = vmul.f32 %v3502, %v3630
        %v3663 = vld [vmem:[%s319] sm:$0x1]
        %v3665 = vlaneseq
        %v3666 = vshrl.u32 %v3665, 7
        %v3667 = vsub.s32 0, %v3666
        %v3668 = vrot.slane %v3663, %v3667
        %v3670 = vmul.f32 %v3631, %v3668
        %v3671 = vmul.f32 %v3632, %v3668
        %v3672 = vmul.f32 %v3633, %v3668
        %v3673 = vmul.f32 %v3634, %v3668
        %v3674 = vmul.f32 %v3635, %v3668
        %v3675 = vmul.f32 %v3636, %v3668
        %v3676 = vmul.f32 %v3637, %v3668
        %v3677 = vmul.f32 %v3638, %v3668
        %v3678 = vmul.f32 %v3639, %v3668
        %v3679 = vmul.f32 %v3640, %v3668
        %v3680 = vmul.f32 %v3641, %v3668
        %v3681 = vmul.f32 %v3642, %v3668
        %v3682 = vmul.f32 %v3643, %v3668
        %v3683 = vmul.f32 %v3644, %v3668
        %v3684 = vmul.f32 %v3645, %v3668
        %v3685 = vmul.f32 %v3646, %v3668
        %v3686 = vmul.f32 %v3647, %v3668
        %v3687 = vmul.f32 %v3648, %v3668
        %v3688 = vmul.f32 %v3649, %v3668
        %v3689 = vmul.f32 %v3650, %v3668
        %v3690 = vmul.f32 %v3651, %v3668
        %v3691 = vmul.f32 %v3652, %v3668
        %v3692 = vmul.f32 %v3653, %v3668
        %v3693 = vmul.f32 %v3654, %v3668
        %v3694 = vmul.f32 %v3655, %v3668
        %v3695 = vmul.f32 %v3656, %v3668
        %v3696 = vmul.f32 %v3657, %v3668
        %v3697 = vmul.f32 %v3658, %v3668
        %v3698 = vmul.f32 %v3659, %v3668
        %v3699 = vmul.f32 %v3660, %v3668
        %v3700 = vmul.f32 %v3661, %v3668
        %v3701 = vmul.f32 %v3662, %v3668
        %v3702 = vld [vmem:[%s322] sm:$0x1]
        %v3704 = vlaneseq
        %v3705 = vshrl.u32 %v3704, 7
        %v3706 = vsub.s32 0, %v3705
        %v3707 = vrot.slane %v3702, %v3706
        %v3709 = vadd.f32 %v3670, %v3707
        %v3710 = vadd.f32 %v3671, %v3707
        %v3711 = vadd.f32 %v3672, %v3707
        %v3712 = vadd.f32 %v3673, %v3707
        %v3713 = vadd.f32 %v3674, %v3707
        %v3714 = vadd.f32 %v3675, %v3707
        %v3715 = vadd.f32 %v3676, %v3707
        %v3716 = vadd.f32 %v3677, %v3707
        %v3717 = vadd.f32 %v3678, %v3707
        %v3718 = vadd.f32 %v3679, %v3707
        %v3719 = vadd.f32 %v3680, %v3707
        %v3720 = vadd.f32 %v3681, %v3707
        %v3721 = vadd.f32 %v3682, %v3707
        %v3722 = vadd.f32 %v3683, %v3707
        %v3723 = vadd.f32 %v3684, %v3707
        %v3724 = vadd.f32 %v3685, %v3707
        %v3725 = vadd.f32 %v3686, %v3707
        %v3726 = vadd.f32 %v3687, %v3707
        %v3727 = vadd.f32 %v3688, %v3707
        %v3728 = vadd.f32 %v3689, %v3707
        %v3729 = vadd.f32 %v3690, %v3707
        %v3730 = vadd.f32 %v3691, %v3707
        %v3731 = vadd.f32 %v3692, %v3707
        %v3732 = vadd.f32 %v3693, %v3707
        %v3733 = vadd.f32 %v3694, %v3707
        %v3734 = vadd.f32 %v3695, %v3707
        %v3735 = vadd.f32 %v3696, %v3707
        %v3736 = vadd.f32 %v3697, %v3707
        %v3737 = vadd.f32 %v3698, %v3707
        %v3738 = vadd.f32 %v3699, %v3707
        %v3739 = vadd.f32 %v3700, %v3707
        %v3740 = vadd.f32 %v3701, %v3707
        %v3741 = vsel %vm721, %v3709, %v3134
        %v3742 = vsel %vm722, %v3710, %v3135
        %v3743 = vsel %vm723, %v3711, %v3136
        %v3744 = vsel %vm724, %v3712, %v3137
        %v3745 = vsel %vm725, %v3713, %v3138
        %v3746 = vsel %vm726, %v3714, %v3139
        %v3747 = vsel %vm727, %v3715, %v3140
        %v3748 = vsel %vm728, %v3716, %v3141
        %v3749 = vsel %vm729, %v3717, %v3142
        %v3750 = vsel %vm730, %v3718, %v3143
        %v3751 = vsel %vm731, %v3719, %v3144
        %v3752 = vsel %vm732, %v3720, %v3145
        %v3753 = vsel %vm733, %v3721, %v3146
        %v3754 = vsel %vm734, %v3722, %v3147
        %v3755 = vsel %vm735, %v3723, %v3148
        %v3756 = vsel %vm736, %v3724, %v3149
        %v3757 = vsel %vm737, %v3725, %v3150
        %v3758 = vsel %vm738, %v3726, %v3151
        %v3759 = vsel %vm739, %v3727, %v3152
        %v3760 = vsel %vm740, %v3728, %v3153
        %v3761 = vsel %vm741, %v3729, %v3154
        %v3762 = vsel %vm742, %v3730, %v3155
        %v3763 = vsel %vm743, %v3731, %v3156
        %v3764 = vsel %vm744, %v3732, %v3157
        %v3765 = vsel %vm745, %v3733, %v3158
        %v3766 = vsel %vm746, %v3734, %v3159
        %v3767 = vsel %vm747, %v3735, %v3160
        %v3768 = vsel %vm748, %v3736, %v3161
        %v3769 = vsel %vm749, %v3737, %v3162
        %v3770 = vsel %vm750, %v3738, %v3163
        %v3771 = vsel %vm751, %v3739, %v3164
        %v3772 = vsel %vm752, %v3740, %v3165
        %v3773 = vmax.f32 %v3741, 0.0
        %v3774 = vmax.f32 %v3742, 0.0
        %v3775 = vmax.f32 %v3743, 0.0
        %v3776 = vmax.f32 %v3744, 0.0
        %v3777 = vmax.f32 %v3745, 0.0
        %v3778 = vmax.f32 %v3746, 0.0
        %v3779 = vmax.f32 %v3747, 0.0
        %v3780 = vmax.f32 %v3748, 0.0
        %v3781 = vmax.f32 %v3749, 0.0
        %v3782 = vmax.f32 %v3750, 0.0
        %v3783 = vmax.f32 %v3751, 0.0
        %v3784 = vmax.f32 %v3752, 0.0
        %v3785 = vmax.f32 %v3753, 0.0
        %v3786 = vmax.f32 %v3754, 0.0
        %v3787 = vmax.f32 %v3755, 0.0
        %v3788 = vmax.f32 %v3756, 0.0
        %v3789 = vmax.f32 %v3757, 0.0
        %v3790 = vmax.f32 %v3758, 0.0
        %v3791 = vmax.f32 %v3759, 0.0
        %v3792 = vmax.f32 %v3760, 0.0
        %v3793 = vmax.f32 %v3761, 0.0
        %v3794 = vmax.f32 %v3762, 0.0
        %v3795 = vmax.f32 %v3763, 0.0
        %v3796 = vmax.f32 %v3764, 0.0
        %v3797 = vmax.f32 %v3765, 0.0
        %v3798 = vmax.f32 %v3766, 0.0
        %v3799 = vmax.f32 %v3767, 0.0
        %v3800 = vmax.f32 %v3768, 0.0
        %v3801 = vmax.f32 %v3769, 0.0
        %v3802 = vmax.f32 %v3770, 0.0
        %v3803 = vmax.f32 %v3771, 0.0
        %v3804 = vmax.f32 %v3772, 0.0
        %p3805 = scmp.eq.s32.totalorder %s459, 1
        // Predicated region
        $region53: #{tpu_custom_call.1} parent=39 // pred_check
          %p3806 = pneg %p3805
        $region54: #{tpu_custom_call.1} parent=39 // pred_check_branch
          %3808 = sbr.rel (%p3806) target = $region56
        $region55: #{tpu_custom_call.1} parent=39 // pred_region
          %v3809 = vld [vmem:[#allocation3] sm:$0xff]
          %v3810 = vld [vmem:[#allocation3 + $0x8] sm:$0xff]
          %v3811 = vld [vmem:[#allocation3 + $0x10] sm:$0xff]
          %v3812 = vld [vmem:[#allocation3 + $0x18] sm:$0xff]
          %v3813 = vld [vmem:[#allocation3 + $0x20] sm:$0xff]
          %v3814 = vld [vmem:[#allocation3 + $0x28] sm:$0xff]
          %v3815 = vld [vmem:[#allocation3 + $0x30] sm:$0xff]
          %v3816 = vld [vmem:[#allocation3 + $0x38] sm:$0xff]
          %v3817 = vld [vmem:[#allocation3 + $0x40] sm:$0xff]
          %v3818 = vld [vmem:[#allocation3 + $0x48] sm:$0xff]
          %v3819 = vld [vmem:[#allocation3 + $0x50] sm:$0xff]
          %v3820 = vld [vmem:[#allocation3 + $0x58] sm:$0xff]
          %v3821 = vld [vmem:[#allocation3 + $0x60] sm:$0xff]
          %v3822 = vld [vmem:[#allocation3 + $0x68] sm:$0xff]
          %v3823 = vld [vmem:[#allocation3 + $0x70] sm:$0xff]
          %v3824 = vld [vmem:[#allocation3 + $0x78] sm:$0xff]
          %v3825 = vld [vmem:[#allocation3 + $0x80] sm:$0xff]
          %v3826 = vld [vmem:[#allocation3 + $0x88] sm:$0xff]
          %v3827 = vld [vmem:[#allocation3 + $0x90] sm:$0xff]
          %v3828 = vld [vmem:[#allocation3 + $0x98] sm:$0xff]
          %v3829 = vld [vmem:[#allocation3 + $0xa0] sm:$0xff]
          %v3830 = vld [vmem:[#allocation3 + $0xa8] sm:$0xff]
          %v3831 = vld [vmem:[#allocation3 + $0xb0] sm:$0xff]
          %v3832 = vld [vmem:[#allocation3 + $0xb8] sm:$0xff]
          %v3833 = vld [vmem:[#allocation3 + $0xc0] sm:$0xff]
          %v3834 = vld [vmem:[#allocation3 + $0xc8] sm:$0xff]
          %v3835 = vld [vmem:[#allocation3 + $0xd0] sm:$0xff]
          %v3836 = vld [vmem:[#allocation3 + $0xd8] sm:$0xff]
          %v3837 = vld [vmem:[#allocation3 + $0xe0] sm:$0xff]
          %v3838 = vld [vmem:[#allocation3 + $0xe8] sm:$0xff]
          %v3839 = vld [vmem:[#allocation3 + $0xf0] sm:$0xff]
          %v3840 = vld [vmem:[#allocation3 + $0xf8] sm:$0xff]
          %v3841 = vadd.f32 %v3773, %v3809
          %v3842 = vadd.f32 %v3774, %v3810
          %v3843 = vadd.f32 %v3775, %v3811
          %v3844 = vadd.f32 %v3776, %v3812
          %v3845 = vadd.f32 %v3777, %v3813
          %v3846 = vadd.f32 %v3778, %v3814
          %v3847 = vadd.f32 %v3779, %v3815
          %v3848 = vadd.f32 %v3780, %v3816
          %v3849 = vadd.f32 %v3781, %v3817
          %v3850 = vadd.f32 %v3782, %v3818
          %v3851 = vadd.f32 %v3783, %v3819
          %v3852 = vadd.f32 %v3784, %v3820
          %v3853 = vadd.f32 %v3785, %v3821
          %v3854 = vadd.f32 %v3786, %v3822
          %v3855 = vadd.f32 %v3787, %v3823
          %v3856 = vadd.f32 %v3788, %v3824
          %v3857 = vadd.f32 %v3789, %v3825
          %v3858 = vadd.f32 %v3790, %v3826
          %v3859 = vadd.f32 %v3791, %v3827
          %v3860 = vadd.f32 %v3792, %v3828
          %v3861 = vadd.f32 %v3793, %v3829
          %v3862 = vadd.f32 %v3794, %v3830
          %v3863 = vadd.f32 %v3795, %v3831
          %v3864 = vadd.f32 %v3796, %v3832
          %v3865 = vadd.f32 %v3797, %v3833
          %v3866 = vadd.f32 %v3798, %v3834
          %v3867 = vadd.f32 %v3799, %v3835
          %v3868 = vadd.f32 %v3800, %v3836
          %v3869 = vadd.f32 %v3801, %v3837
          %v3870 = vadd.f32 %v3802, %v3838
          %v3871 = vadd.f32 %v3803, %v3839
          %v3872 = vadd.f32 %v3804, %v3840
          %s3873 = scalar_lea.vmem [#allocation2], 24
          %3874 = vst [vmem:[%s3873 + $0x1] sm:$0xff] %v3841
          %3875 = vst [vmem:[%s3873 + $0x9] sm:$0xff] %v3842
          %3876 = vst [vmem:[%s3873 + $0x19] sm:$0xff] %v3843
          %3877 = vst [vmem:[%s3873 + $0x21] sm:$0xff] %v3844
          %3878 = vst [vmem:[%s3873 + $0x31] sm:$0xff] %v3845
          %3879 = vst [vmem:[%s3873 + $0x39] sm:$0xff] %v3846
          %3880 = vst [vmem:[%s3873 + $0x49] sm:$0xff] %v3847
          %3881 = vst [vmem:[%s3873 + $0x51] sm:$0xff] %v3848
          %3882 = vst [vmem:[%s3873 + $0x61] sm:$0xff] %v3849
          %3883 = vst [vmem:[%s3873 + $0x69] sm:$0xff] %v3850
          %3884 = vst [vmem:[%s3873 + $0x79] sm:$0xff] %v3851
          %3885 = vst [vmem:[%s3873 + $0x81] sm:$0xff] %v3852
          %3886 = vst [vmem:[%s3873 + $0x91] sm:$0xff] %v3853
          %3887 = vst [vmem:[%s3873 + $0x99] sm:$0xff] %v3854
          %3888 = vst [vmem:[%s3873 + $0xa9] sm:$0xff] %v3855
          %3889 = vst [vmem:[%s3873 + $0xb1] sm:$0xff] %v3856
          %3890 = vst [vmem:[%s3873 + $0xc1] sm:$0xff] %v3857
          %3891 = vst [vmem:[%s3873 + $0xc9] sm:$0xff] %v3858
          %3892 = vst [vmem:[%s3873 + $0xd9] sm:$0xff] %v3859
          %3893 = vst [vmem:[%s3873 + $0xe1] sm:$0xff] %v3860
          %3894 = vst [vmem:[%s3873 + $0xf1] sm:$0xff] %v3861
          %3895 = vst [vmem:[%s3873 + $0xf9] sm:$0xff] %v3862
          %3896 = vst [vmem:[%s3873 + $0x109] sm:$0xff] %v3863
          %3897 = vst [vmem:[%s3873 + $0x111] sm:$0xff] %v3864
          %3898 = vst [vmem:[%s3873 + $0x121] sm:$0xff] %v3865
          %3899 = vst [vmem:[%s3873 + $0x129] sm:$0xff] %v3866
          %3900 = vst [vmem:[%s3873 + $0x139] sm:$0xff] %v3867
          %3901 = vst [vmem:[%s3873 + $0x141] sm:$0xff] %v3868
          %3902 = vst [vmem:[%s3873 + $0x151] sm:$0xff] %v3869
          %3903 = vst [vmem:[%s3873 + $0x159] sm:$0xff] %v3870
          %3904 = vst [vmem:[%s3873 + $0x169] sm:$0xff] %v3871
          %3905 = vst [vmem:[%s3873 + $0x171] sm:$0xff] %v3872
        $region56: #{tpu_custom_call.1} parent=39 // pred_fallthru
          _
        %p3906 = scmp.ne.s32.totalorder %s459, 1
        // Predicated region
        $region57: #{tpu_custom_call.1} parent=39 // pred_check
          %p3907 = pneg %p3906
        $region58: #{tpu_custom_call.1} parent=39 // pred_check_branch
          %3909 = sbr.rel (%p3907) target = $region60
        $region59: #{tpu_custom_call.1} parent=39 // pred_region
          %s3910 = scalar_lea.vmem [#allocation2], 24
          %3911 = vst [vmem:[%s3910 + $0x1] sm:$0xff] %v3773
          %3912 = vst [vmem:[%s3910 + $0x9] sm:$0xff] %v3774
          %3913 = vst [vmem:[%s3910 + $0x19] sm:$0xff] %v3775
          %3914 = vst [vmem:[%s3910 + $0x21] sm:$0xff] %v3776
          %3915 = vst [vmem:[%s3910 + $0x31] sm:$0xff] %v3777
          %3916 = vst [vmem:[%s3910 + $0x39] sm:$0xff] %v3778
          %3917 = vst [vmem:[%s3910 + $0x49] sm:$0xff] %v3779
          %3918 = vst [vmem:[%s3910 + $0x51] sm:$0xff] %v3780
          %3919 = vst [vmem:[%s3910 + $0x61] sm:$0xff] %v3781
          %3920 = vst [vmem:[%s3910 + $0x69] sm:$0xff] %v3782
          %3921 = vst [vmem:[%s3910 + $0x79] sm:$0xff] %v3783
          %3922 = vst [vmem:[%s3910 + $0x81] sm:$0xff] %v3784
          %3923 = vst [vmem:[%s3910 + $0x91] sm:$0xff] %v3785
          %3924 = vst [vmem:[%s3910 + $0x99] sm:$0xff] %v3786
          %3925 = vst [vmem:[%s3910 + $0xa9] sm:$0xff] %v3787
          %3926 = vst [vmem:[%s3910 + $0xb1] sm:$0xff] %v3788
          %3927 = vst [vmem:[%s3910 + $0xc1] sm:$0xff] %v3789
          %3928 = vst [vmem:[%s3910 + $0xc9] sm:$0xff] %v3790
          %3929 = vst [vmem:[%s3910 + $0xd9] sm:$0xff] %v3791
          %3930 = vst [vmem:[%s3910 + $0xe1] sm:$0xff] %v3792
          %3931 = vst [vmem:[%s3910 + $0xf1] sm:$0xff] %v3793
          %3932 = vst [vmem:[%s3910 + $0xf9] sm:$0xff] %v3794
          %3933 = vst [vmem:[%s3910 + $0x109] sm:$0xff] %v3795
          %3934 = vst [vmem:[%s3910 + $0x111] sm:$0xff] %v3796
          %3935 = vst [vmem:[%s3910 + $0x121] sm:$0xff] %v3797
          %3936 = vst [vmem:[%s3910 + $0x129] sm:$0xff] %v3798
          %3937 = vst [vmem:[%s3910 + $0x139] sm:$0xff] %v3799
          %3938 = vst [vmem:[%s3910 + $0x141] sm:$0xff] %v3800
          %3939 = vst [vmem:[%s3910 + $0x151] sm:$0xff] %v3801
          %3940 = vst [vmem:[%s3910 + $0x159] sm:$0xff] %v3802
          %3941 = vst [vmem:[%s3910 + $0x169] sm:$0xff] %v3803
          %3942 = vst [vmem:[%s3910 + $0x171] sm:$0xff] %v3804
        $region60: #{tpu_custom_call.1} parent=39 // pred_fallthru
          _
        %p3943 = scmp.eq.s32.totalorder %s27, 2
        // Predicated region
        $region61: #{tpu_custom_call.1} parent=39 // pred_check
          %p3944 = pneg %p3943
        $region62: #{tpu_custom_call.1} parent=39 // pred_check_branch
          %3946 = sbr.rel (%p3944) target = $region64
        $region63: #{tpu_custom_call.1} parent=39 // pred_region
          %s3947 = scalar_lea.vmem [#allocation2], 24
          %v3948 = vld [vmem:[%s3947 + $0x1] sm:$0xff]
          %v3949 = vld [vmem:[%s3947 + $0x9] sm:$0xff]
          %v3950 = vld [vmem:[%s3947 + $0x19] sm:$0xff]
          %v3951 = vld [vmem:[%s3947 + $0x21] sm:$0xff]
          %v3952 = vld [vmem:[%s3947 + $0x31] sm:$0xff]
          %v3953 = vld [vmem:[%s3947 + $0x39] sm:$0xff]
          %v3954 = vld [vmem:[%s3947 + $0x49] sm:$0xff]
          %v3955 = vld [vmem:[%s3947 + $0x51] sm:$0xff]
          %v3956 = vld [vmem:[%s3947 + $0x61] sm:$0xff]
          %v3957 = vld [vmem:[%s3947 + $0x69] sm:$0xff]
          %v3958 = vld [vmem:[%s3947 + $0x79] sm:$0xff]
          %v3959 = vld [vmem:[%s3947 + $0x81] sm:$0xff]
          %v3960 = vld [vmem:[%s3947 + $0x91] sm:$0xff]
          %v3961 = vld [vmem:[%s3947 + $0x99] sm:$0xff]
          %v3962 = vld [vmem:[%s3947 + $0xa9] sm:$0xff]
          %v3963 = vld [vmem:[%s3947 + $0xb1] sm:$0xff]
          %v3964 = vld [vmem:[%s3947 + $0xc1] sm:$0xff]
          %v3965 = vld [vmem:[%s3947 + $0xc9] sm:$0xff]
          %v3966 = vld [vmem:[%s3947 + $0xd9] sm:$0xff]
          %v3967 = vld [vmem:[%s3947 + $0xe1] sm:$0xff]
          %v3968 = vld [vmem:[%s3947 + $0xf1] sm:$0xff]
          %v3969 = vld [vmem:[%s3947 + $0xf9] sm:$0xff]
          %v3970 = vld [vmem:[%s3947 + $0x109] sm:$0xff]
          %v3971 = vld [vmem:[%s3947 + $0x111] sm:$0xff]
          %v3972 = vld [vmem:[%s3947 + $0x121] sm:$0xff]
          %v3973 = vld [vmem:[%s3947 + $0x129] sm:$0xff]
          %v3974 = vld [vmem:[%s3947 + $0x139] sm:$0xff]
          %v3975 = vld [vmem:[%s3947 + $0x141] sm:$0xff]
          %v3976 = vld [vmem:[%s3947 + $0x151] sm:$0xff]
          %v3977 = vld [vmem:[%s3947 + $0x159] sm:$0xff]
          %v3978 = vld [vmem:[%s3947 + $0x169] sm:$0xff]
          %v3979 = vld [vmem:[%s3947 + $0x171] sm:$0xff]
          %3980 = vst [vmem:[%s306] sm:$0xff] %v3948
          %3981 = vst [vmem:[%s306 + $0x8] sm:$0xff] %v3949
          %3982 = vst [vmem:[%s306 + $0x10] sm:$0xff] %v3950
          %3983 = vst [vmem:[%s306 + $0x18] sm:$0xff] %v3951
          %3984 = vst [vmem:[%s306 + $0x20] sm:$0xff] %v3952
          %3985 = vst [vmem:[%s306 + $0x28] sm:$0xff] %v3953
          %3986 = vst [vmem:[%s306 + $0x30] sm:$0xff] %v3954
          %3987 = vst [vmem:[%s306 + $0x38] sm:$0xff] %v3955
          %3988 = vst [vmem:[%s306 + $0x40] sm:$0xff] %v3956
          %3989 = vst [vmem:[%s306 + $0x48] sm:$0xff] %v3957
          %3990 = vst [vmem:[%s306 + $0x50] sm:$0xff] %v3958
          %3991 = vst [vmem:[%s306 + $0x58] sm:$0xff] %v3959
          %3992 = vst [vmem:[%s306 + $0x60] sm:$0xff] %v3960
          %3993 = vst [vmem:[%s306 + $0x68] sm:$0xff] %v3961
          %3994 = vst [vmem:[%s306 + $0x70] sm:$0xff] %v3962
          %3995 = vst [vmem:[%s306 + $0x78] sm:$0xff] %v3963
          %3996 = vst [vmem:[%s306 + $0x80] sm:$0xff] %v3964
          %3997 = vst [vmem:[%s306 + $0x88] sm:$0xff] %v3965
          %3998 = vst [vmem:[%s306 + $0x90] sm:$0xff] %v3966
          %3999 = vst [vmem:[%s306 + $0x98] sm:$0xff] %v3967
          %4000 = vst [vmem:[%s306 + $0xa0] sm:$0xff] %v3968
          %4001 = vst [vmem:[%s306 + $0xa8] sm:$0xff] %v3969
          %4002 = vst [vmem:[%s306 + $0xb0] sm:$0xff] %v3970
          %4003 = vst [vmem:[%s306 + $0xb8] sm:$0xff] %v3971
          %4004 = vst [vmem:[%s306 + $0xc0] sm:$0xff] %v3972
          %4005 = vst [vmem:[%s306 + $0xc8] sm:$0xff] %v3973
          %4006 = vst [vmem:[%s306 + $0xd0] sm:$0xff] %v3974
          %4007 = vst [vmem:[%s306 + $0xd8] sm:$0xff] %v3975
          %4008 = vst [vmem:[%s306 + $0xe0] sm:$0xff] %v3976
          %4009 = vst [vmem:[%s306 + $0xe8] sm:$0xff] %v3977
          %4010 = vst [vmem:[%s306 + $0xf0] sm:$0xff] %v3978
          %4011 = vst [vmem:[%s306 + $0xf8] sm:$0xff] %v3979
        $region64: #{tpu_custom_call.1} parent=39 // pred_fallthru
          _
        %s4012 = sand.u32 %s172, 1
        %s4013 = scalar_lea.sflag [#allocation6], %s4012
        %s4014 = sand.u32 %s172, 1
        %s4015 = smul.addr %s4014, 256
        %s4016 = scalar_lea.vmem [#allocation7], %s4015
        // Predicated region
        $region65: #{tpu_custom_call.1} parent=39 // pred_check
          %p4017 = pneg %p182
        $region66: #{tpu_custom_call.1} parent=39 // pred_check_branch
          %4019 = sbr.rel (%p4017) target = $region68
        $region67: #{tpu_custom_call.1} parent=39 // pred_region
          %s4021 = ssub.s32 4096, 4096
          %4022 = vsyncadd %s4013, %s4021
          %s4023 = smul.addr %s26, 32
          %s4024 = smul.addr %s4023, 128
          %s4025 = scalar_lea.hbm %s5, %s4024
          %s4026 = sshll.u32 %s4016, 4
          %s4027 = int_to_ptr.vmem [resolvable:$true] %s4026
          %4032 = dma.vmem_to_hbm [thread:$0]  %s4027, 4096, %s4025, %s4013, 128, 128, 8
        $region68: #{tpu_custom_call.1} parent=39 // pred_fallthru
          _
      $region40: #{tpu_custom_call.1} parent=5 // pred_fallthru
        _
      %p4033 = scmp.le.s32.totalorder 2, %s17
      // Predicated region
      $region69: #{tpu_custom_call.1} parent=5 // pred_check
        %p4034 = pneg %p4033
      $region70: #{tpu_custom_call.1} parent=5 // pred_check_branch
        %4036 = sbr.rel (%p4034) target = $region72
      $region71: #{tpu_custom_call.1} parent=5 // pred_region
        %s4037 = ssub.s32 %s17, 2
        // Predicated region
        $region73: #{tpu_custom_call.1} parent=71 // pred_check
          %p4038 = pneg %p188
        $region74: #{tpu_custom_call.1} parent=71 // pred_check_branch
          %4040 = sbr.rel (%p4038) target = $region76
        $region75: #{tpu_custom_call.1} parent=71 // pred_region
          %s4041 = sand.u32 %s173, 1
          %s4042 = scalar_lea.sflag [#allocation6], %s4041
          %s4043 = sand.u32 %s173, 1
          %s4044 = smul.addr %s4043, 256
          %s4045 = scalar_lea.vmem [#allocation7], %s4044
          %4046 = dma.done %s4042, 4096
        $region76: #{tpu_custom_call.1} parent=71 // pred_fallthru
          _
      $region72: #{tpu_custom_call.1} parent=5 // pred_fallthru
        _
    $region6: #{tpu_custom_call.1} parent=1 // loop_footer
      %s21 = sadd.s32 1, %s17
    $region7: #{tpu_custom_call.1} parent=1 // loop_footer_branch
      %16 = sbr.rel target = $region3
    $region8: #{tpu_custom_call.1} parent=1 // loop_exit
      _
    %4047 = vsyncpa [#allocation5], 1
    %s4048 = scalar_lea.sflag [#allocation5], 1
    %4049 = vsyncpa %s4048, 1
    %4050 = vsyncpa [#allocation6], 1
    %s4051 = scalar_lea.sflag [#allocation6], 1
    %4052 = vsyncpa %s4051, 1

</llo_original>
